<compile_context>
chip_gen: v6e
topology: v6e:2x2x1
jax: 0.10.0
libtpu: 0.0.40
codegen_flags: <defaults>
</compile_context>

<pallas_src>
import functools

import jax
import jax.numpy as jnp
from jax.experimental import pallas as pl
from jax.experimental.pallas import tpu as pltpu

EPS = 1e-5
MATMUL_DTYPE = jnp.bfloat16   # MXU input dtype (f32 accumulate); jnp.float32 for exact mode
TILE_ROWS = 512               # target output pixels per grid step (review: 512-1024)


# ------------------------------ Pallas kernels ------------------------------- #

def _conv_block(xw_ref, w_ref):
    """All five conv branches for one tile as 3 MXU matmuls (one per kernel row kh).

    xw_ref: [NB, H+2, W, 3C]  W-unrolled, H-padded activations (bf16)
    w_ref:  [9C, 5C]          block-structured weights, cols = [ori|new|ver|hor|grp] (bf16)
    returns [NB*H*W, 5C] f32 conv outputs (ori | new | ver | hor | group).
    """
    NB, Hp2, W, C3 = xw_ref.shape
    H = Hp2 - 2
    TM = NB * H * W
    acc = None
    for kh in range(3):  # static unroll; each slice selects whole sublane slabs
        lhs = xw_ref[:, kh:kh + H, :, :].reshape(TM, C3)
        d = jnp.dot(lhs, w_ref[kh * C3:(kh + 1) * C3, :],
                    preferred_element_type=jnp.float32)
        acc = d if acc is None else acc + d
    return acc


def conv_stats_kernel(xw_ref, w_ref, stats_ref):
    """Pass 1: conv tile + per-tile BN partial sums (full 5C-lane-wide reductions)."""
    acc = _conv_block(xw_ref, w_ref)                        # [TM, 5C] f32
    s1 = jnp.sum(acc, axis=0, keepdims=True)                # [1, 5C]
    s2 = jnp.sum(acc * acc, axis=0, keepdims=True)          # [1, 5C]
    pad = jnp.zeros((6, acc.shape[1]), jnp.float32)         # pad to the (8, 5C) block
    stats_ref[...] = jnp.concatenate([s1, s2, pad], axis=0)


def conv_norm_kernel(xw_ref, w_ref, scale_ref, shift_ref, o_ref):
    """Pass 2: recompute the conv tile, apply BN scale/shift, sum the five branches."""
    acc = _conv_block(xw_ref, w_ref)                        # [TM, 5C] f32
    z = acc * scale_ref[...]                                # [TM, 5C] * [1, 5C]
    C = o_ref.shape[1]
    out = shift_ref[...]                                    # [1, C] (shifts already summed)
    for b in range(5):
        out = out + z[:, b * C:(b + 1) * C]
    o_ref[...] = out.astype(o_ref.dtype)


# ------------------------------ pallas_call glue ------------------------------ #

def _batch_tile(n, hw, target_rows):
    nb = max(1, min(n, target_rows // max(hw, 1)))
    while n % nb:                                           # nb must divide N
        nb -= 1
    return nb


def assconv_fused(xw, w_big, gamma, beta, *, n, h, w, c, tile_rows=TILE_ROWS):
    nb = _batch_tile(n, h * w, tile_rows)
    g = n // nb                                             # grid size (batch tiles)
    tm = nb * h * w                                         # output rows per tile
    m = n * h * w
    nc = 5 * c
    assert tm % 8 == 0

    cparams = pltpu.CompilerParams(
        dimension_semantics=("parallel",),                  # independent tiles -> megacore
        vmem_limit_bytes=32 * 1024 * 1024)

    xw_spec = pl.BlockSpec((nb, h + 2, w, 3 * c), lambda i: (i, 0, 0, 0))
    w_spec = pl.BlockSpec((9 * c, nc), lambda i: (0, 0))

    # ---- pass 1: conv + per-tile partial sums / sums of squares ----------------- #
    stats = pl.pallas_call(
        conv_stats_kernel,
        out_shape=jax.ShapeDtypeStruct((8 * g, nc), jnp.float32),
        grid_spec=pltpu.PrefetchScalarGridSpec(
            num_scalar_prefetch=0, grid=(g,),
            in_specs=[xw_spec, w_spec],
            out_specs=pl.BlockSpec((8, nc), lambda i: (i, 0))),
        compiler_params=cparams,
    )(xw, w_big)

    # ---- tiny JAX glue: fold tile partials into per-channel BN scale / shift ---- #
    s = stats.reshape(g, 8, nc)
    mean = jnp.sum(s[:, 0, :], axis=0) / m
    # TODO(synk): one-pass var can cancel for large DC offsets; switch to the shifted
    # (two-pass) form if this becomes a production layer.
    var = jnp.maximum(jnp.sum(s[:, 1, :], axis=0) / m - mean * mean, 0.0)
    scale = gamma.reshape(nc) * jax.lax.rsqrt(var + EPS)
    shift = beta.reshape(nc) - mean * scale
    shift_tot = jnp.sum(shift.reshape(5, c), axis=0)        # the five branches are summed

    # ---- pass 2: recompute conv tiles and normalize (no [M,5C] HBM intermediate) -- #
    out = pl.pallas_call(
        conv_norm_kernel,
        out_shape=jax.ShapeDtypeStruct((m, c), jnp.float32),
        grid_spec=pltpu.PrefetchScalarGridSpec(
            num_scalar_prefetch=0, grid=(g,),
            in_specs=[xw_spec, w_spec,
                      pl.BlockSpec((1, nc), lambda i: (0, 0)),
                      pl.BlockSpec((1, c), lambda i: (0, 0))],
            out_specs=pl.BlockSpec((tm, c), lambda i: (i, 0))),
        compiler_params=cparams,
    )(xw, w_big, scale.reshape(1, nc), shift_tot.reshape(1, c))
    return out


# ------------------------------ wrapper / prep ------------------------------- #

def assconv_forward(x_nchw, p, *, tile_rows=TILE_ROWS):
    N, C, H, W = x_nchw.shape
    cout = p["gamma"].shape[1]
    assert C == cout == 64, "groups=64 conv implemented as depthwise (Cin==Cout==64)"

    # NHWC + zero padding for the 'same' 3x3 / 3x1 / 1x3 convolutions.
    x = jnp.transpose(x_nchw, (0, 2, 3, 1))
    xp = jnp.pad(x, ((0, 0), (1, 1), (1, 1), (0, 0)))       # [N, H+2, W+2, C]

    # W-unrolled activations: xw[n, h', w, kw*C + c] = xp[n, h', w+kw, c].
    # (3x the padded input instead of a 15x im2col; kh taps are built in-kernel.)
    xw = jnp.concatenate(
        [xp[:, :, 0:W, :], xp[:, :, 1:W + 1, :], xp[:, :, 2:W + 2, :]],
        axis=-1).astype(MATMUL_DTYPE)                       # [N, H+2, W, 3C]

    # Block-structured RHS [9C, 5C]: rows = (kh, kw, cin) tap-major,
    # cols = [ori | new | ver | hor | group]; ver/hor live on the centre column/row taps,
    # the depthwise group conv is block-diagonal per tap.
    w_ori = p["w_ori"].reshape(9 * C, cout)
    w_new = p["w_new"].reshape(9 * C, cout)
    w_ver = jnp.zeros((9, C, cout), jnp.float32).at[jnp.array([1, 4, 7])].set(
        p["w_ver"][:, 0]).reshape(9 * C, cout)              # taps (0,1),(1,1),(2,1)
    w_hor = jnp.zeros((9, C, cout), jnp.float32).at[jnp.array([3, 4, 5])].set(
        p["w_hor"][0]).reshape(9 * C, cout)                 # taps (1,0),(1,1),(1,2)
    eye = jnp.eye(C, dtype=jnp.float32)
    w_grp = (p["w_grp"].reshape(9, 1, C) * eye[None, :, :]).reshape(9 * C, cout)
    w_big = jnp.concatenate([w_ori, w_new, w_ver, w_hor, w_grp],
                            axis=1).astype(MATMUL_DTYPE)    # [9C, 5C]

    out = assconv_fused(xw, w_big, p["gamma"], p["beta"],
                        n=N, h=H, w=W, c=cout, tile_rows=tile_rows)   # [M, C] f32
    out = out.reshape(N, H, W, cout)
    return jnp.transpose(out, (0, 3, 1, 2))                 # -> NCHW


# ------------------------------ params / reference ---------------------------- #

def init_params(key, cin, cout):
    ks = jax.random.split(key, 7)
    s3 = 1.0 / jnp.sqrt(9.0 * cin)
    s1 = 1.0 / jnp.sqrt(3.0 * cin)
    return dict(
        w_ori=jax.random.normal(ks[0], (3, 3, cin, cout), jnp.float32) * s3,
        w_new=jax.random.normal(ks[1], (3, 3, cin, cout), jnp.float32) * s3,
        w_ver=jax.random.normal(ks[2], (3, 1, cin, cout), jnp.float32) * s1,
        w_hor=jax.random.normal(ks[3], (1, 3, cin, cout), jnp.float32) * s1,
        w_grp=jax.random.normal(ks[4], (3, 3, cout), jnp.float32) / 3.0,
        gamma=jax.random.uniform(ks[5], (5, cout), jnp.float32, 0.5, 1.5),
        beta=jax.random.normal(ks[6], (5, cout), jnp.float32) * 0.1,
    )


def reference_forward(x_nchw, p):
    def conv(x, w_oihw, pad, groups=1):
        return jax.lax.conv_general_dilated(
            x, w_oihw, (1, 1), pad,
            dimension_numbers=("NCHW", "OIHW", "NCHW"),
            feature_group_count=groups,
            precision=jax.lax.Precision.HIGHEST)

    def bn(y, g, b):
        mean = jnp.mean(y, axis=(0, 2, 3), keepdims=True)
        var = jnp.mean(jnp.square(y - mean), axis=(0, 2, 3), keepdims=True)
        return ((y - mean) / jnp.sqrt(var + EPS)
                * g[None, :, None, None] + b[None, :, None, None])

    w_ori = jnp.transpose(p["w_ori"], (3, 2, 0, 1))
    w_new = jnp.transpose(p["w_new"], (3, 2, 0, 1))
    w_ver = jnp.transpose(p["w_ver"], (3, 2, 0, 1))
    w_hor = jnp.transpose(p["w_hor"], (3, 2, 0, 1))
    w_grp = jnp.transpose(p["w_grp"], (2, 0, 1))[:, None, :, :]
    g, b = p["gamma"], p["beta"]
    cin = x_nchw.shape[1]

    y = bn(conv(x_nchw, w_ori, ((1, 1), (1, 1))), g[0], b[0])
    y = y + bn(conv(x_nchw, w_new, ((1, 1), (1, 1))), g[1], b[1])
    y = y + bn(conv(x_nchw, w_ver, ((1, 1), (0, 0))), g[2], b[2])
    y = y + bn(conv(x_nchw, w_hor, ((0, 0), (1, 1))), g[3], b[3])
    y = y + bn(conv(x_nchw, w_grp, ((1, 1), (1, 1)), groups=cin), g[4], b[4])
    return y


# ----------------------------------- main ------------------------------------- #

if __name__ == "__main__":
    key = jax.random.PRNGKey(0)
    kx, kp = jax.random.split(key)
    # groups=64 in the module forces the channel count to be a multiple of 64.
    N, Cin, H, W = 8, 64, 8, 8
    Cout = 64

    x = jax.random.normal(kx, (N, Cin, H, W), jnp.float32)
    params = init_params(kp, Cin, Cout)

    # tile_rows=256 at this tiny demo size -> 2 batch tiles, exercising the cross-tile
    # two-pass BatchNorm path; the production default stays TILE_ROWS=512.
    run = jax.jit(functools.partial(assconv_forward, tile_rows=256))
    out = jax.block_until_ready(run(x, params))
    assert out.shape == (N, Cout, H, W)

    # Tight check: push the SAME bf16-rounded operands through a true-f32 XLA reference.
    # This isolates kernel logic from the (intentional) bf16 MXU-input quantization.
    xq = x.astype(MATMUL_DTYPE).astype(jnp.float32)
    pq = dict(params)
    for name in ("w_ori", "w_new", "w_ver", "w_hor", "w_grp"):
        pq[name] = params[name].astype(MATMUL_DTYPE).astype(jnp.float32)
    ref_q = reference_forward(xq, pq)
    err_logic = float(jnp.max(jnp.abs(out - ref_q)))
    assert err_logic < 2e-3, f"kernel-logic max abs err too large: {err_logic}"

    # Loose check against the full-f32 reference; dominated by bf16 input/weight
    # quantization on the MXU path (max over N*H*W*C elements).
    ref = reference_forward(x, params)
    err_full = float(jnp.max(jnp.abs(out - ref)))
    assert err_full < 1e-1, f"bf16-vs-f32 max abs err too large: {err_full}"

    print("KERNEL_OK")
</pallas_src>

<mosaic_0001>
module attributes {stable_mosaic.version = 11 : i64} {
  func.func @conv_stats_kernel(%arg0: i32, %arg1: memref<4x10x8x192xbf16, #tpu.memory_space<vmem>>, %arg2: memref<576x320xbf16, #tpu.memory_space<vmem>>, %arg3: memref<8x320xf32, #tpu.memory_space<vmem>>) attributes {dimension_semantics = [#tpu.dimension_semantics<parallel>], iteration_bounds = array<i64: 2>, scalar_prefetch = 0 : i64, scratch_operands = 0 : i64, tpu.core_type = #tpu.core_type<tc>, window_params = [{transform_indices = @transform_0, window_bounds = array<i64: 4, 10, 8, 192>}, {pipeline_mode = #tpu.pipeline_mode<synchronous>, transform_indices = @transform_1, window_bounds = array<i64: 576, 320>}, {transform_indices = @transform_2, window_bounds = array<i64: 8, 320>}]} {
    %c0 = arith.constant 0 : index
    %c0_0 = arith.constant 0 : index
    %c0_1 = arith.constant 0 : index
    %c0_2 = arith.constant 0 : index
    %0 = vector.load %arg1[%c0, %c0_0, %c0_1, %c0_2] : memref<4x10x8x192xbf16, #tpu.memory_space<vmem>>, vector<4x8x8x192xbf16>
    %1 = vector.shape_cast %0 : vector<4x8x8x192xbf16> to vector<256x192xbf16>
    %c0_3 = arith.constant 0 : index
    %c0_4 = arith.constant 0 : index
    %2 = vector.load %arg2[%c0_3, %c0_4] : memref<576x320xbf16, #tpu.memory_space<vmem>>, vector<192x320xbf16>
    %cst = arith.constant dense<0.000000e+00> : vector<256x320xf32>
    %3 = tpu.matmul %1, %2, %cst {dimension_numbers = #tpu.dot_dimension_numbers<[1], [0], [0], [1], [0, 0, 1, 1], [], []>} : vector<256x192xbf16>, vector<192x320xbf16>, vector<256x320xf32> -> vector<256x320xf32>
    %c0_5 = arith.constant 0 : index
    %c1 = arith.constant 1 : index
    %c0_6 = arith.constant 0 : index
    %c0_7 = arith.constant 0 : index
    %4 = vector.load %arg1[%c0_5, %c1, %c0_6, %c0_7] : memref<4x10x8x192xbf16, #tpu.memory_space<vmem>>, vector<4x8x8x192xbf16>
    %5 = vector.shape_cast %4 : vector<4x8x8x192xbf16> to vector<256x192xbf16>
    %c192 = arith.constant 192 : index
    %c0_8 = arith.constant 0 : index
    %6 = vector.load %arg2[%c192, %c0_8] : memref<576x320xbf16, #tpu.memory_space<vmem>>, vector<192x320xbf16>
    %cst_9 = arith.constant dense<0.000000e+00> : vector<256x320xf32>
    %7 = tpu.matmul %5, %6, %cst_9 {dimension_numbers = #tpu.dot_dimension_numbers<[1], [0], [0], [1], [0, 0, 1, 1], [], []>} : vector<256x192xbf16>, vector<192x320xbf16>, vector<256x320xf32> -> vector<256x320xf32>
    %8 = arith.addf %3, %7 : vector<256x320xf32>
    %c0_10 = arith.constant 0 : index
    %c2 = arith.constant 2 : index
    %c0_11 = arith.constant 0 : index
    %c0_12 = arith.constant 0 : index
    %9 = vector.load %arg1[%c0_10, %c2, %c0_11, %c0_12] : memref<4x10x8x192xbf16, #tpu.memory_space<vmem>>, vector<4x8x8x192xbf16>
    %10 = vector.shape_cast %9 : vector<4x8x8x192xbf16> to vector<256x192xbf16>
    %c384 = arith.constant 384 : index
    %c0_13 = arith.constant 0 : index
    %11 = vector.load %arg2[%c384, %c0_13] : memref<576x320xbf16, #tpu.memory_space<vmem>>, vector<192x320xbf16>
    %cst_14 = arith.constant dense<0.000000e+00> : vector<256x320xf32>
    %12 = tpu.matmul %10, %11, %cst_14 {dimension_numbers = #tpu.dot_dimension_numbers<[1], [0], [0], [1], [0, 0, 1, 1], [], []>} : vector<256x192xbf16>, vector<192x320xbf16>, vector<256x320xf32> -> vector<256x320xf32>
    %13 = arith.addf %8, %12 : vector<256x320xf32>
    %cst_15 = arith.constant dense<0.000000e+00> : vector<320xf32>
    %14 = vector.multi_reduction <add>, %13, %cst_15 [0] : vector<256x320xf32> to vector<320xf32>
    %15 = vector.shape_cast %14 : vector<320xf32> to vector<1x320xf32>
    %16 = arith.mulf %13, %13 : vector<256x320xf32>
    %cst_16 = arith.constant dense<0.000000e+00> : vector<320xf32>
    %17 = vector.multi_reduction <add>, %16, %cst_16 [0] : vector<256x320xf32> to vector<320xf32>
    %18 = vector.shape_cast %17 : vector<320xf32> to vector<1x320xf32>
    %cst_17 = arith.constant 0.000000e+00 : f32
    %19 = vector.broadcast %cst_17 : f32 to vector<6x320xf32>
    %20 = tpu.concatenate %15, %18, %19 in 0 : vector<1x320xf32>, vector<1x320xf32>, vector<6x320xf32> -> vector<8x320xf32>
    %c0_18 = arith.constant 0 : index
    %c0_19 = arith.constant 0 : index
    %21 = vector.load %arg3[%c0_18, %c0_19] : memref<8x320xf32, #tpu.memory_space<vmem>>, vector<8x320xf32>
    tpu.vector_store %arg3[%c0_18, %c0_19], %20 {strides = array<i32>} : memref<8x320xf32, #tpu.memory_space<vmem>>, vector<8x320xf32>,
    return
  }
  func.func @transform_0(%arg0: i32) -> (i32, i32, i32, i32) {
    %c0_i32 = arith.constant 0 : i32
    %c0_i32_0 = arith.constant 0 : i32
    %c0_i32_1 = arith.constant 0 : i32
    %c0_i32_2 = arith.constant 0 : i32
    return %arg0, %c0_i32, %c0_i32_0, %c0_i32_1 : i32, i32, i32, i32
  }
  func.func @transform_1(%arg0: i32) -> (i32, i32) {
    %c0_i32 = arith.constant 0 : i32
    %c0_i32_0 = arith.constant 0 : i32
    %c0_i32_1 = arith.constant 0 : i32
    return %c0_i32, %c0_i32_0 : i32, i32
  }
  func.func @transform_2(%arg0: i32) -> (i32, i32) {
    %c0_i32 = arith.constant 0 : i32
    %c0_i32_0 = arith.constant 0 : i32
    return %arg0, %c0_i32 : i32, i32
  }
}

module attributes {stable_mosaic.version = 11 : i64} {
  func.func @conv_norm_kernel(%arg0: i32, %arg1: memref<4x10x8x192xbf16, #tpu.memory_space<vmem>>, %arg2: memref<576x320xbf16, #tpu.memory_space<vmem>>, %arg3: memref<1x320xf32, #tpu.memory_space<vmem>>, %arg4: memref<1x64xf32, #tpu.memory_space<vmem>>, %arg5: memref<256x64xf32, #tpu.memory_space<vmem>>) attributes {dimension_semantics = [#tpu.dimension_semantics<parallel>], iteration_bounds = array<i64: 2>, scalar_prefetch = 0 : i64, scratch_operands = 0 : i64, tpu.core_type = #tpu.core_type<tc>, window_params = [{transform_indices = @transform_0, window_bounds = array<i64: 4, 10, 8, 192>}, {pipeline_mode = #tpu.pipeline_mode<synchronous>, transform_indices = @transform_1, window_bounds = array<i64: 576, 320>}, {pipeline_mode = #tpu.pipeline_mode<synchronous>, transform_indices = @transform_2, window_bounds = array<i64: 1, 320>}, {pipeline_mode = #tpu.pipeline_mode<synchronous>, transform_indices = @transform_3, window_bounds = array<i64: 1, 64>}, {transform_indices = @transform_4, window_bounds = array<i64: 256, 64>}]} {
    %c0 = arith.constant 0 : index
    %c0_0 = arith.constant 0 : index
    %c0_1 = arith.constant 0 : index
    %c0_2 = arith.constant 0 : index
    %0 = vector.load %arg1[%c0, %c0_0, %c0_1, %c0_2] : memref<4x10x8x192xbf16, #tpu.memory_space<vmem>>, vector<4x8x8x192xbf16>
    %1 = vector.shape_cast %0 : vector<4x8x8x192xbf16> to vector<256x192xbf16>
    %c0_3 = arith.constant 0 : index
    %c0_4 = arith.constant 0 : index
    %2 = vector.load %arg2[%c0_3, %c0_4] : memref<576x320xbf16, #tpu.memory_space<vmem>>, vector<192x320xbf16>
    %cst = arith.constant dense<0.000000e+00> : vector<256x320xf32>
    %3 = tpu.matmul %1, %2, %cst {dimension_numbers = #tpu.dot_dimension_numbers<[1], [0], [0], [1], [0, 0, 1, 1], [], []>} : vector<256x192xbf16>, vector<192x320xbf16>, vector<256x320xf32> -> vector<256x320xf32>
    %c0_5 = arith.constant 0 : index
    %c1 = arith.constant 1 : index
    %c0_6 = arith.constant 0 : index
    %c0_7 = arith.constant 0 : index
    %4 = vector.load %arg1[%c0_5, %c1, %c0_6, %c0_7] : memref<4x10x8x192xbf16, #tpu.memory_space<vmem>>, vector<4x8x8x192xbf16>
    %5 = vector.shape_cast %4 : vector<4x8x8x192xbf16> to vector<256x192xbf16>
    %c192 = arith.constant 192 : index
    %c0_8 = arith.constant 0 : index
    %6 = vector.load %arg2[%c192, %c0_8] : memref<576x320xbf16, #tpu.memory_space<vmem>>, vector<192x320xbf16>
    %cst_9 = arith.constant dense<0.000000e+00> : vector<256x320xf32>
    %7 = tpu.matmul %5, %6, %cst_9 {dimension_numbers = #tpu.dot_dimension_numbers<[1], [0], [0], [1], [0, 0, 1, 1], [], []>} : vector<256x192xbf16>, vector<192x320xbf16>, vector<256x320xf32> -> vector<256x320xf32>
    %8 = arith.addf %3, %7 : vector<256x320xf32>
    %c0_10 = arith.constant 0 : index
    %c2 = arith.constant 2 : index
    %c0_11 = arith.constant 0 : index
    %c0_12 = arith.constant 0 : index
    %9 = vector.load %arg1[%c0_10, %c2, %c0_11, %c0_12] : memref<4x10x8x192xbf16, #tpu.memory_space<vmem>>, vector<4x8x8x192xbf16>
    %10 = vector.shape_cast %9 : vector<4x8x8x192xbf16> to vector<256x192xbf16>
    %c384 = arith.constant 384 : index
    %c0_13 = arith.constant 0 : index
    %11 = vector.load %arg2[%c384, %c0_13] : memref<576x320xbf16, #tpu.memory_space<vmem>>, vector<192x320xbf16>
    %cst_14 = arith.constant dense<0.000000e+00> : vector<256x320xf32>
    %12 = tpu.matmul %10, %11, %cst_14 {dimension_numbers = #tpu.dot_dimension_numbers<[1], [0], [0], [1], [0, 0, 1, 1], [], []>} : vector<256x192xbf16>, vector<192x320xbf16>, vector<256x320xf32> -> vector<256x320xf32>
    %13 = arith.addf %8, %12 : vector<256x320xf32>
    %c0_15 = arith.constant 0 : index
    %c0_16 = arith.constant 0 : index
    %14 = vector.load %arg3[%c0_15, %c0_16] : memref<1x320xf32, #tpu.memory_space<vmem>>, vector<1x320xf32>
    %15 = vector.broadcast %14 : vector<1x320xf32> to vector<256x320xf32>
    %16 = arith.mulf %13, %15 : vector<256x320xf32>
    %c0_17 = arith.constant 0 : index
    %c0_18 = arith.constant 0 : index
    %17 = vector.load %arg4[%c0_17, %c0_18] : memref<1x64xf32, #tpu.memory_space<vmem>>, vector<1x64xf32>
    %18 = vector.extract_strided_slice %16 {offsets = [0, 0], sizes = [256, 64], strides = [1, 1]} : vector<256x320xf32> to vector<256x64xf32>
    %19 = vector.broadcast %17 : vector<1x64xf32> to vector<256x64xf32>
    %20 = arith.addf %19, %18 : vector<256x64xf32>
    %21 = vector.extract_strided_slice %16 {offsets = [0, 64], sizes = [256, 64], strides = [1, 1]} : vector<256x320xf32> to vector<256x64xf32>
    %22 = arith.addf %20, %21 : vector<256x64xf32>
    %23 = vector.extract_strided_slice %16 {offsets = [0, 128], sizes = [256, 64], strides = [1, 1]} : vector<256x320xf32> to vector<256x64xf32>
    %24 = arith.addf %22, %23 : vector<256x64xf32>
    %25 = vector.extract_strided_slice %16 {offsets = [0, 192], sizes = [256, 64], strides = [1, 1]} : vector<256x320xf32> to vector<256x64xf32>
    %26 = arith.addf %24, %25 : vector<256x64xf32>
    %27 = vector.extract_strided_slice %16 {offsets = [0, 256], sizes = [256, 64], strides = [1, 1]} : vector<256x320xf32> to vector<256x64xf32>
    %28 = arith.addf %26, %27 : vector<256x64xf32>
    %c0_19 = arith.constant 0 : index
    %c0_20 = arith.constant 0 : index
    %29 = vector.load %arg5[%c0_19, %c0_20] : memref<256x64xf32, #tpu.memory_space<vmem>>, vector<256x64xf32>
    tpu.vector_store %arg5[%c0_19, %c0_20], %28 {strides = array<i32>} : memref<256x64xf32, #tpu.memory_space<vmem>>, vector<256x64xf32>,
    return
  }
  func.func @transform_0(%arg0: i32) -> (i32, i32, i32, i32) {
    %c0_i32 = arith.constant 0 : i32
    %c0_i32_0 = arith.constant 0 : i32
    %c0_i32_1 = arith.constant 0 : i32
    %c0_i32_2 = arith.constant 0 : i32
    return %arg0, %c0_i32, %c0_i32_0, %c0_i32_1 : i32, i32, i32, i32
  }
  func.func @transform_1(%arg0: i32) -> (i32, i32) {
    %c0_i32 = arith.constant 0 : i32
    %c0_i32_0 = arith.constant 0 : i32
    %c0_i32_1 = arith.constant 0 : i32
    return %c0_i32, %c0_i32_0 : i32, i32
  }
  func.func @transform_2(%arg0: i32) -> (i32, i32) {
    %c0_i32 = arith.constant 0 : i32
    %c0_i32_0 = arith.constant 0 : i32
    %c0_i32_1 = arith.constant 0 : i32
    return %c0_i32, %c0_i32_0 : i32, i32
  }
  func.func @transform_3(%arg0: i32) -> (i32, i32) {
    %c0_i32 = arith.constant 0 : i32
    %c0_i32_0 = arith.constant 0 : i32
    %c0_i32_1 = arith.constant 0 : i32
    return %c0_i32, %c0_i32_0 : i32, i32
  }
  func.func @transform_4(%arg0: i32) -> (i32, i32) {
    %c0_i32 = arith.constant 0 : i32
    %c0_i32_0 = arith.constant 0 : i32
    return %arg0, %c0_i32 : i32, i32
  }
}

</mosaic_0001>

<llo_original>
// kernel: mul.11
$region0: #{mul.11}
  %s0 = inlined_call_operand.vmem [shape: f32[3,3,64], index: 0, kind: input, shape index: {}]
  %s1 = inlined_call_operand.vmem [shape: f32[9,64], index: 1, kind: output, shape index: {}]
  $region1: #{mul.11} parent=0
    #allocation0 [shape = 'u8[12288]{0}', space=vmem, size = 0x3000, scoped, tag = 'scoped mem for input reshape']
    %s3 = sshll.u32 1, 4
    %s4 = ssub.s32 %s3, 1
    %s5 = smul.addr 4, 2
    %s6 = scalar_lea.vmem %s0, %s5
    %v7 = vld [vmem:[%s6] sm:%s4]
    %s8 = scalar_lea.vmem [#allocation0], 16
    %9 = vst [vmem:[%s8] sm:%s4] %v7
    %s10 = scalar_lea.vmem %s0, 4
    %v11 = vld [vmem:[%s10] sm:%s4]
    %s12 = scalar_lea.vmem [#allocation0], 8
    %13 = vst [vmem:[%s12] sm:%s4] %v11
    %v14 = vld [vmem:[%s0] sm:%s4]
    %15 = vst [vmem:[#allocation0] sm:%s4] %v14
    %v16 = vld [vmem:[#allocation0] sm:$0x7]
    %vm17 = vcmask 523264
    %18 = vst.msk [vmem:[%s1] sm:$0x7] %vm17, %v16
    %s19 = scalar_lea.vmem [#allocation0], 8
    %v20 = vld [vmem:[%s19] sm:$0x7]
    %vm21 = vcmask 523264
    %s22 = scalar_lea.vmem %s1, 3
    %23 = vst.msk [vmem:[%s22] sm:$0x7] %vm21, %v20
    %s24 = scalar_lea.vmem [#allocation0], 16
    %v25 = vld [vmem:[%s24] sm:$0x7]
    %vm26 = vcmask 523264
    %s27 = scalar_lea.vmem %s1, 6
    %28 = vst.msk [vmem:[%s27] sm:$0x7] %vm26, %v25

// kernel: assconv_forward.2
$region0: #{assconv_forward.2}
  #allocation0 [shape = 'u32[]', space=smem, size = 0x4, offset = 0x4, fixed_abs, tag = 'smem constant byte address 0x4 - core index']
  #allocation1 [shape = 'u32[144,128]{1,0:T(1,128)}', space=vmem, size = 0x12000, scoped, tag = 'internal scratch']
  %s0 = inlined_call_operand.vmem [shape: bf16[8,10,8,192], index: 0, kind: input, shape index: {}]
  %s1 = inlined_call_operand.vmem [shape: bf16[576,320], index: 1, kind: input, shape index: {}]
  %s2 = inlined_call_operand.vmem [shape: f32[16,320], index: 2, kind: output, shape index: {}]
  %s3 = sld [smem:[#allocation0]]
  $region41: #{assconv_forward.2} parent=0
    _
  %s5 = ssub.s32 1, %s3
  %s6 = scalar_select 0, %s5, %s3
  loop: start=0, step=1, limit=4
  $region2: #{assconv_forward.2} parent=0 // loop_pre_header
    _
  $region3: #{assconv_forward.2} parent=0 // loop_header
    %s8 = sphi 0, %s12
    %p9 = scmp.ge.s32.totalorder %s8, 4
    %s18 = sphi 0, %s20
    %s21 = sphi 0, %s18
    %s22 = sphi 0, %s21
    %s38 = sphi 0, %s22
    %s42 = sphi 0, %s42
    %s44 = sphi 0, %s42
    %s45 = sphi 0, %s44
    %s59 = sphi 0, %s45
    %s65 = sphi 0, %s67
    %s68 = sphi 0, %s65
    %s69 = sphi 0, %s68
    %s85 = sphi 0, %s69
  $region4: #{assconv_forward.2} parent=0 // loop_header_branch
    %11 = sbr.rel (%p9) target = $region8
  $region5: #{assconv_forward.2} parent=0 // loop_body
    %s13 = ssub.s32 %s8, 1
    %s14 = ssub.s32 %s8, 2
    %s15 = sadd.s32 %s8, 1
    %s16 = ssub.s32 %s8, %s15
    %p17 = scmp.eq.s32.totalorder %s16, 0
    %s19 = sadd.s32 %s18, 1
    %s20 = scalar_select %p17, %s18, %s19
    %p23 = pneg %p17
    %p24 = scmp.eq.s32.totalorder %s8, 1
    %p25 = por %p23, %p24
    %p26 = scmp.ne.s32.totalorder %s18, %s21
    %p27 = scmp.eq.s32.totalorder %s8, 0
    %p28 = por %p26, %p27
    %p29 = scmp.ne.s32.totalorder %s18, %s21
    %p30 = scmp.eq.s32.totalorder %s13, 1
    %p31 = por %p29, %p30
    %p32 = scmp.ne.s32.totalorder %s21, %s22
    %p33 = scmp.eq.s32.totalorder %s13, 0
    %p34 = por %p32, %p33
    %p35 = scmp.ne.s32.totalorder %s21, %s22
    %p36 = scmp.eq.s32.totalorder %s14, 1
    %p37 = por %p35, %p36
    %p39 = scmp.ne.s32.totalorder %s22, %s38
    %p40 = scmp.eq.s32.totalorder %s14, 0
    %p41 = por %p39, %p40
    %s43 = sadd.s32 %s42, 1
    %p46 = scmp.eq.s32.totalorder %s8, 1
    %p47 = scmp.ne.s32.totalorder %s42, %s44
    %p48 = scmp.eq.s32.totalorder %s8, 0
    %p49 = por %p47, %p48
    %p50 = scmp.ne.s32.totalorder %s42, %s44
    %p51 = scmp.eq.s32.totalorder %s13, 1
    %p52 = por %p50, %p51
    %p53 = scmp.ne.s32.totalorder %s44, %s45
    %p54 = scmp.eq.s32.totalorder %s13, 0
    %p55 = por %p53, %p54
    %p56 = scmp.ne.s32.totalorder %s44, %s45
    %p57 = scmp.eq.s32.totalorder %s14, 1
    %p58 = por %p56, %p57
    %p60 = scmp.ne.s32.totalorder %s45, %s59
    %p61 = scmp.eq.s32.totalorder %s14, 0
    %p62 = por %p60, %p61
    %s63 = ssub.s32 %s8, %s15
    %p64 = scmp.eq.s32.totalorder %s63, 0
    %s66 = sadd.s32 %s65, 1
    %s67 = scalar_select %p64, %s65, %s66
    %p70 = pneg %p64
    %p71 = scmp.eq.s32.totalorder %s8, 1
    %p72 = por %p70, %p71
    %p73 = scmp.ne.s32.totalorder %s65, %s68
    %p74 = scmp.eq.s32.totalorder %s8, 0
    %p75 = por %p73, %p74
    %p76 = scmp.ne.s32.totalorder %s65, %s68
    %p77 = scmp.eq.s32.totalorder %s13, 1
    %p78 = por %p76, %p77
    %p79 = scmp.ne.s32.totalorder %s68, %s69
    %p80 = scmp.eq.s32.totalorder %s13, 0
    %p81 = por %p79, %p80
    %p82 = scmp.ne.s32.totalorder %s68, %s69
    %p83 = scmp.eq.s32.totalorder %s14, 1
    %p84 = por %p82, %p83
    %p86 = scmp.ne.s32.totalorder %s69, %s85
    %p87 = scmp.eq.s32.totalorder %s14, 0
    %p88 = por %p86, %p87
    %p89 = scmp.le.s32.totalorder 1, %s8
    %p90 = scmp.lt.s32.totalorder %s8, 3
    %p91 = pnand %p89, %p90
    %p92 = pneg %p91
    // Predicated region
    $region9: #{assconv_forward.2} parent=5 // pred_check
      _
    $region10: #{assconv_forward.2} parent=5 // pred_check_branch
      %94 = sbr.rel (%p91) target = $region12
    $region11: #{assconv_forward.2} parent=5 // pred_region
      %s95 = ssub.s32 %s8, 1
      // Predicated region
      $region13: #{assconv_forward.2} parent=11 // pred_check
        %p96 = pneg %p55
      $region14: #{assconv_forward.2} parent=11 // pred_check_branch
        %98 = sbr.rel (%p96) target = $region16
      $region15: #{assconv_forward.2} parent=11 // pred_region
        _
      $region16: #{assconv_forward.2} parent=11 // pred_fallthru
        _
    $region12: #{assconv_forward.2} parent=5 // pred_fallthru
      _
    %p99 = scmp.lt.s32.totalorder %s8, 2
    // Predicated region
    $region17: #{assconv_forward.2} parent=5 // pred_check
      %p100 = pneg %p99
    $region18: #{assconv_forward.2} parent=5 // pred_check_branch
      %102 = sbr.rel (%p100) target = $region20
    $region19: #{assconv_forward.2} parent=5 // pred_region
      // Predicated region
      $region21: #{assconv_forward.2} parent=19 // pred_check
        %p103 = pneg %p28
      $region22: #{assconv_forward.2} parent=19 // pred_check_branch
        %105 = sbr.rel (%p103) target = $region24
      $region23: #{assconv_forward.2} parent=19 // pred_region
        %s106 = smul.u32 4, %s8
        %p107 = scmp.lt.s32.totalorder %s106, 7
        %s108 = scalar_select %p107, %s106, 7
        %s109 = smul.addr %s108, 20
        %s110 = smul.addr %s109, 4
        %s111 = scalar_lea.vmem %s0, %s110
        %s112 = smul.u32 4, %s8
      $region24: #{assconv_forward.2} parent=19 // pred_fallthru
        _
    $region20: #{assconv_forward.2} parent=5 // pred_fallthru
      _
    %p113 = scmp.le.s32.totalorder 1, %s8
    %p114 = scmp.lt.s32.totalorder %s8, 3
    %p115 = pnand %p113, %p114
    %p116 = pneg %p115
    // Predicated region
    $region25: #{assconv_forward.2} parent=5 // pred_check
      _
    $region26: #{assconv_forward.2} parent=5 // pred_check_branch
      %118 = sbr.rel (%p115) target = $region28
    $region27: #{assconv_forward.2} parent=5 // pred_region
      %s119 = ssub.s32 %s8, 1
      %s120 = smul.u32 4, %s13
      %p121 = scmp.lt.s32.totalorder %s120, 7
      %s122 = scalar_select %p121, %s120, 7
      %s123 = smul.addr %s122, 20
      %s124 = smul.addr %s123, 4
      %s125 = scalar_lea.vmem %s0, %s124
      %p126 = pneg %p34
      %p127 = pneg %p31
      %p128 = pneg %p55
      %p129 = pneg %p52
      %p130 = pneg %p81
      %p131 = pneg %p78
      %p132 = scmp.lt.s32.totalorder %s13, 1
      %s133 = scalar_select %p132, %s13, 1
      %s134 = smul.addr %s133, 3
      %s135 = smul.addr %s134, 8
      %s136 = scalar_lea.vmem %s2, %s135
      %s137 = smul.u32 4, %s13
      %p138 = scmp.lt.s32.totalorder %s137, 7
      %s139 = scalar_select %p138, %s137, 7
      %s140 = smul.addr %s139, 20
      %s141 = smul.addr %s140, 4
      %s142 = scalar_lea.vmem %s0, %s141
      %s143 = smul.u32 4, %s13
      %p144 = scmp.lt.s32.totalorder %s13, 1
      %s145 = scalar_select %p144, %s13, 1
      %s146 = smul.addr %s145, 3
      %s147 = smul.addr %s146, 8
      %s148 = scalar_lea.vmem %s2, %s147
      %v150 = vld [vmem:[%s142] sm:$0xff]
      %v151 = vld [vmem:[%s142 + $0x8] sm:$0xff]
      %v152 = vld [vmem:[%s142 + $0x10] sm:$0xff]
      %v153 = vld [vmem:[%s142 + $0x18] sm:$0xff]
      %v154 = vld [vmem:[%s142 + $0x20] sm:$0xff]
      %v155 = vld [vmem:[%s142 + $0x28] sm:$0xff]
      %v156 = vld [vmem:[%s142 + $0x30] sm:$0xff]
      %v157 = vld [vmem:[%s142 + $0x38] sm:$0xff]
      %v158 = vld [vmem:[%s142 + $0x50] sm:$0xff]
      %v159 = vld [vmem:[%s142 + $0x58] sm:$0xff]
      %v160 = vld [vmem:[%s142 + $0x60] sm:$0xff]
      %v161 = vld [vmem:[%s142 + $0x68] sm:$0xff]
      %v162 = vld [vmem:[%s142 + $0x70] sm:$0xff]
      %v163 = vld [vmem:[%s142 + $0x78] sm:$0xff]
      %v164 = vld [vmem:[%s142 + $0x80] sm:$0xff]
      %v165 = vld [vmem:[%s142 + $0x88] sm:$0xff]
      %v166 = vld [vmem:[%s142 + $0xa0] sm:$0xff]
      %v167 = vld [vmem:[%s142 + $0xa8] sm:$0xff]
      %v168 = vld [vmem:[%s142 + $0xb0] sm:$0xff]
      %v169 = vld [vmem:[%s142 + $0xb8] sm:$0xff]
      %v170 = vld [vmem:[%s142 + $0xc0] sm:$0xff]
      %v171 = vld [vmem:[%s142 + $0xc8] sm:$0xff]
      %v172 = vld [vmem:[%s142 + $0xd0] sm:$0xff]
      %v173 = vld [vmem:[%s142 + $0xd8] sm:$0xff]
      %v174 = vld [vmem:[%s142 + $0xf0] sm:$0xff]
      %v175 = vld [vmem:[%s142 + $0xf8] sm:$0xff]
      %v176 = vld [vmem:[%s142 + $0x100] sm:$0xff]
      %v177 = vld [vmem:[%s142 + $0x108] sm:$0xff]
      %v178 = vld [vmem:[%s142 + $0x110] sm:$0xff]
      %v179 = vld [vmem:[%s142 + $0x118] sm:$0xff]
      %v180 = vld [vmem:[%s142 + $0x120] sm:$0xff]
      %v181 = vld [vmem:[%s142 + $0x128] sm:$0xff]
      %v182 = vld [vmem:[%s1] sm:$0xff]
      %v183 = vld [vmem:[%s1 + $0x8] sm:$0xf]
      %v184 = vld [vmem:[%s1 + $0xc] sm:$0xff]
      %v185 = vld [vmem:[%s1 + $0x14] sm:$0xf]
      %v186 = vld [vmem:[%s1 + $0x18] sm:$0xff]
      %v187 = vld [vmem:[%s1 + $0x20] sm:$0xf]
      %v188 = vld [vmem:[%s1 + $0x24] sm:$0xff]
      %v189 = vld [vmem:[%s1 + $0x2c] sm:$0xf]
      %v190 = vld [vmem:[%s1 + $0x30] sm:$0xff]
      %v191 = vld [vmem:[%s1 + $0x38] sm:$0xf]
      %v192 = vld [vmem:[%s1 + $0x3c] sm:$0xff]
      %v193 = vld [vmem:[%s1 + $0x44] sm:$0xf]
      %v194 = vld [vmem:[%s1 + $0x48] sm:$0xff]
      %v195 = vld [vmem:[%s1 + $0x50] sm:$0xf]
      %v196 = vld [vmem:[%s1 + $0x54] sm:$0xff]
      %v197 = vld [vmem:[%s1 + $0x5c] sm:$0xf]
      %v198 = vld [vmem:[%s1 + $0x60] sm:$0xff]
      %v199 = vld [vmem:[%s1 + $0x68] sm:$0xf]
      %v200 = vld [vmem:[%s1 + $0x6c] sm:$0xff]
      %v201 = vld [vmem:[%s1 + $0x74] sm:$0xf]
      %v202 = vld [vmem:[%s1 + $0x78] sm:$0xff]
      %v203 = vld [vmem:[%s1 + $0x80] sm:$0xf]
      %v204 = vld [vmem:[%s1 + $0x84] sm:$0xff]
      %v205 = vld [vmem:[%s1 + $0x8c] sm:$0xf]
      %v206 = vld [vmem:[%s1 + $0x90] sm:$0xff]
      %v207 = vld [vmem:[%s1 + $0x98] sm:$0xf]
      %v208 = vld [vmem:[%s1 + $0x9c] sm:$0xff]
      %v209 = vld [vmem:[%s1 + $0xa4] sm:$0xf]
      %v210 = vld [vmem:[%s1 + $0xa8] sm:$0xff]
      %v211 = vld [vmem:[%s1 + $0xb0] sm:$0xf]
      %v212 = vld [vmem:[%s1 + $0xb4] sm:$0xff]
      %v213 = vld [vmem:[%s1 + $0xbc] sm:$0xf]
      %v214 = vld [vmem:[%s1 + $0xc0] sm:$0xff]
      %v215 = vld [vmem:[%s1 + $0xc8] sm:$0xf]
      %v216 = vld [vmem:[%s1 + $0xcc] sm:$0xff]
      %v217 = vld [vmem:[%s1 + $0xd4] sm:$0xf]
      %v218 = vld [vmem:[%s1 + $0xd8] sm:$0xff]
      %v219 = vld [vmem:[%s1 + $0xe0] sm:$0xf]
      %v220 = vld [vmem:[%s1 + $0xe4] sm:$0xff]
      %v221 = vld [vmem:[%s1 + $0xec] sm:$0xf]
      %v222 = vld [vmem:[%s1 + $0xf0] sm:$0xff]
      %v223 = vld [vmem:[%s1 + $0xf8] sm:$0xf]
      %v224 = vld [vmem:[%s1 + $0xfc] sm:$0xff]
      %v225 = vld [vmem:[%s1 + $0x104] sm:$0xf]
      %v226 = vld [vmem:[%s1 + $0x108] sm:$0xff]
      %v227 = vld [vmem:[%s1 + $0x110] sm:$0xf]
      %v228 = vld [vmem:[%s1 + $0x114] sm:$0xff]
      %v229 = vld [vmem:[%s1 + $0x11c] sm:$0xf]
      %s230 = scalar_lea.vmem %s142, 8
      %v231 = vld [vmem:[%s230] sm:$0xff]
      %v232 = vld [vmem:[%s230 + $0x8] sm:$0xff]
      %v233 = vld [vmem:[%s230 + $0x10] sm:$0xff]
      %v234 = vld [vmem:[%s230 + $0x18] sm:$0xff]
      %v235 = vld [vmem:[%s230 + $0x20] sm:$0xff]
      %v236 = vld [vmem:[%s230 + $0x28] sm:$0xff]
      %v237 = vld [vmem:[%s230 + $0x30] sm:$0xff]
      %v238 = vld [vmem:[%s230 + $0x38] sm:$0xff]
      %v239 = vld [vmem:[%s230 + $0x50] sm:$0xff]
      %v240 = vld [vmem:[%s230 + $0x58] sm:$0xff]
      %v241 = vld [vmem:[%s230 + $0x60] sm:$0xff]
      %v242 = vld [vmem:[%s230 + $0x68] sm:$0xff]
      %v243 = vld [vmem:[%s230 + $0x70] sm:$0xff]
      %v244 = vld [vmem:[%s230 + $0x78] sm:$0xff]
      %v245 = vld [vmem:[%s230 + $0x80] sm:$0xff]
      %v246 = vld [vmem:[%s230 + $0x88] sm:$0xff]
      %v247 = vld [vmem:[%s230 + $0xa0] sm:$0xff]
      %v248 = vld [vmem:[%s230 + $0xa8] sm:$0xff]
      %v249 = vld [vmem:[%s230 + $0xb0] sm:$0xff]
      %v250 = vld [vmem:[%s230 + $0xb8] sm:$0xff]
      %v251 = vld [vmem:[%s230 + $0xc0] sm:$0xff]
      %v252 = vld [vmem:[%s230 + $0xc8] sm:$0xff]
      %v253 = vld [vmem:[%s230 + $0xd0] sm:$0xff]
      %v254 = vld [vmem:[%s230 + $0xd8] sm:$0xff]
      %v255 = vld [vmem:[%s230 + $0xf0] sm:$0xff]
      %v256 = vld [vmem:[%s230 + $0xf8] sm:$0xff]
      %v257 = vld [vmem:[%s230 + $0x100] sm:$0xff]
      %v258 = vld [vmem:[%s230 + $0x108] sm:$0xff]
      %v259 = vld [vmem:[%s230 + $0x110] sm:$0xff]
      %v260 = vld [vmem:[%s230 + $0x118] sm:$0xff]
      %v261 = vld [vmem:[%s230 + $0x120] sm:$0xff]
      %v262 = vld [vmem:[%s230 + $0x128] sm:$0xff]
      %v263 = vld [vmem:[%s1 + $0x120] sm:$0xff]
      %v264 = vld [vmem:[%s1 + $0x128] sm:$0xf]
      %v265 = vld [vmem:[%s1 + $0x12c] sm:$0xff]
      %v266 = vld [vmem:[%s1 + $0x134] sm:$0xf]
      %v267 = vld [vmem:[%s1 + $0x138] sm:$0xff]
      %v268 = vld [vmem:[%s1 + $0x140] sm:$0xf]
      %v269 = vld [vmem:[%s1 + $0x144] sm:$0xff]
      %v270 = vld [vmem:[%s1 + $0x14c] sm:$0xf]
      %v271 = vld [vmem:[%s1 + $0x150] sm:$0xff]
      %v272 = vld [vmem:[%s1 + $0x158] sm:$0xf]
      %v273 = vld [vmem:[%s1 + $0x15c] sm:$0xff]
      %v274 = vld [vmem:[%s1 + $0x164] sm:$0xf]
      %v275 = vld [vmem:[%s1 + $0x168] sm:$0xff]
      %v276 = vld [vmem:[%s1 + $0x170] sm:$0xf]
      %v277 = vld [vmem:[%s1 + $0x174] sm:$0xff]
      %v278 = vld [vmem:[%s1 + $0x17c] sm:$0xf]
      %v279 = vld [vmem:[%s1 + $0x180] sm:$0xff]
      %v280 = vld [vmem:[%s1 + $0x188] sm:$0xf]
      %v281 = vld [vmem:[%s1 + $0x18c] sm:$0xff]
      %v282 = vld [vmem:[%s1 + $0x194] sm:$0xf]
      %v283 = vld [vmem:[%s1 + $0x198] sm:$0xff]
      %v284 = vld [vmem:[%s1 + $0x1a0] sm:$0xf]
      %v285 = vld [vmem:[%s1 + $0x1a4] sm:$0xff]
      %v286 = vld [vmem:[%s1 + $0x1ac] sm:$0xf]
      %v287 = vld [vmem:[%s1 + $0x1b0] sm:$0xff]
      %v288 = vld [vmem:[%s1 + $0x1b8] sm:$0xf]
      %v289 = vld [vmem:[%s1 + $0x1bc] sm:$0xff]
      %v290 = vld [vmem:[%s1 + $0x1c4] sm:$0xf]
      %v291 = vld [vmem:[%s1 + $0x1c8] sm:$0xff]
      %v292 = vld [vmem:[%s1 + $0x1d0] sm:$0xf]
      %v293 = vld [vmem:[%s1 + $0x1d4] sm:$0xff]
      %v294 = vld [vmem:[%s1 + $0x1dc] sm:$0xf]
      %v295 = vld [vmem:[%s1 + $0x1e0] sm:$0xff]
      %v296 = vld [vmem:[%s1 + $0x1e8] sm:$0xf]
      %v297 = vld [vmem:[%s1 + $0x1ec] sm:$0xff]
      %v298 = vld [vmem:[%s1 + $0x1f4] sm:$0xf]
      %v299 = vld [vmem:[%s1 + $0x1f8] sm:$0xff]
      %v300 = vld [vmem:[%s1 + $0x200] sm:$0xf]
      %v301 = vld [vmem:[%s1 + $0x204] sm:$0xff]
      %v302 = vld [vmem:[%s1 + $0x20c] sm:$0xf]
      %v303 = vld [vmem:[%s1 + $0x210] sm:$0xff]
      %v304 = vld [vmem:[%s1 + $0x218] sm:$0xf]
      %v305 = vld [vmem:[%s1 + $0x21c] sm:$0xff]
      %v306 = vld [vmem:[%s1 + $0x224] sm:$0xf]
      %v307 = vld [vmem:[%s1 + $0x228] sm:$0xff]
      %v308 = vld [vmem:[%s1 + $0x230] sm:$0xf]
      %v309 = vld [vmem:[%s1 + $0x234] sm:$0xff]
      %v310 = vld [vmem:[%s1 + $0x23c] sm:$0xf]
      %v343 = vunpack.c.l.b16 %v231
      %v344 = vunpack.c.h.b16 %v231
      %v345 = vunpack.c.l.b16 %v232
      %v346 = vunpack.c.h.b16 %v232
      %v347 = vunpack.c.l.b16 %v233
      %v348 = vunpack.c.h.b16 %v233
      %v349 = vunpack.c.l.b16 %v234
      %v350 = vunpack.c.h.b16 %v234
      %v351 = vunpack.c.l.b16 %v235
      %v352 = vunpack.c.h.b16 %v235
      %v353 = vunpack.c.l.b16 %v236
      %v354 = vunpack.c.h.b16 %v236
      %v355 = vunpack.c.l.b16 %v237
      %v356 = vunpack.c.h.b16 %v237
      %v357 = vunpack.c.l.b16 %v238
      %v358 = vunpack.c.h.b16 %v238
      %v359 = vunpack.c.l.b16 %v239
      %v360 = vunpack.c.h.b16 %v239
      %v361 = vunpack.c.l.b16 %v240
      %v362 = vunpack.c.h.b16 %v240
      %v363 = vunpack.c.l.b16 %v241
      %v364 = vunpack.c.h.b16 %v241
      %v365 = vunpack.c.l.b16 %v242
      %v366 = vunpack.c.h.b16 %v242
      %v367 = vunpack.c.l.b16 %v243
      %v368 = vunpack.c.h.b16 %v243
      %v369 = vunpack.c.l.b16 %v244
      %v370 = vunpack.c.h.b16 %v244
      %v371 = vunpack.c.l.b16 %v245
      %v372 = vunpack.c.h.b16 %v245
      %v373 = vunpack.c.l.b16 %v246
      %v374 = vunpack.c.h.b16 %v246
      %v375 = vunpack.c.l.b16 %v247
      %v376 = vunpack.c.h.b16 %v247
      %v377 = vunpack.c.l.b16 %v248
      %v378 = vunpack.c.h.b16 %v248
      %v379 = vunpack.c.l.b16 %v249
      %v380 = vunpack.c.h.b16 %v249
      %v381 = vunpack.c.l.b16 %v250
      %v382 = vunpack.c.h.b16 %v250
      %v383 = vunpack.c.l.b16 %v251
      %v384 = vunpack.c.h.b16 %v251
      %v385 = vunpack.c.l.b16 %v252
      %v386 = vunpack.c.h.b16 %v252
      %v387 = vunpack.c.l.b16 %v253
      %v388 = vunpack.c.h.b16 %v253
      %v389 = vunpack.c.l.b16 %v254
      %v390 = vunpack.c.h.b16 %v254
      %v391 = vunpack.c.l.b16 %v255
      %v392 = vunpack.c.h.b16 %v255
      %v393 = vunpack.c.l.b16 %v256
      %v394 = vunpack.c.h.b16 %v256
      %v395 = vunpack.c.l.b16 %v257
      %v396 = vunpack.c.h.b16 %v257
      %v397 = vunpack.c.l.b16 %v258
      %v398 = vunpack.c.h.b16 %v258
      %v399 = vunpack.c.l.b16 %v259
      %v400 = vunpack.c.h.b16 %v259
      %v401 = vunpack.c.l.b16 %v260
      %v402 = vunpack.c.h.b16 %v260
      %v403 = vunpack.c.l.b16 %v261
      %v404 = vunpack.c.h.b16 %v261
      %v405 = vunpack.c.l.b16 %v262
      %v406 = vunpack.c.h.b16 %v262
      %v407 = vpack.c.b16 %v345, %v343
      %v408 = vpack.c.b16 %v346, %v344
      %v409 = vpack.c.b16 %v349, %v347
      %v410 = vpack.c.b16 %v350, %v348
      %v411 = vpack.c.b16 %v353, %v351
      %v412 = vpack.c.b16 %v354, %v352
      %v413 = vpack.c.b16 %v357, %v355
      %v414 = vpack.c.b16 %v358, %v356
      %v415 = vpack.c.b16 %v361, %v359
      %v416 = vpack.c.b16 %v362, %v360
      %v417 = vpack.c.b16 %v365, %v363
      %v418 = vpack.c.b16 %v366, %v364
      %v419 = vpack.c.b16 %v369, %v367
      %v420 = vpack.c.b16 %v370, %v368
      %v421 = vpack.c.b16 %v373, %v371
      %v422 = vpack.c.b16 %v374, %v372
      %v423 = vpack.c.b16 %v377, %v375
      %v424 = vpack.c.b16 %v378, %v376
      %v425 = vpack.c.b16 %v381, %v379
      %v426 = vpack.c.b16 %v382, %v380
      %v427 = vpack.c.b16 %v385, %v383
      %v428 = vpack.c.b16 %v386, %v384
      %v429 = vpack.c.b16 %v389, %v387
      %v430 = vpack.c.b16 %v390, %v388
      %v431 = vpack.c.b16 %v393, %v391
      %v432 = vpack.c.b16 %v394, %v392
      %v433 = vpack.c.b16 %v397, %v395
      %v434 = vpack.c.b16 %v398, %v396
      %v435 = vpack.c.b16 %v401, %v399
      %v436 = vpack.c.b16 %v402, %v400
      %v437 = vpack.c.b16 %v405, %v403
      %v438 = vpack.c.b16 %v406, %v404
      %v503 = vunpack.c.l.b16 %v263
      %v504 = vunpack.c.h.b16 %v263
      %v505 = vunpack.c.l.b16 %v264
      %v506 = vunpack.c.l.b16 %v265
      %v507 = vunpack.c.h.b16 %v265
      %v508 = vunpack.c.l.b16 %v266
      %v509 = vunpack.c.l.b16 %v267
      %v510 = vunpack.c.h.b16 %v267
      %v511 = vunpack.c.l.b16 %v268
      %v512 = vunpack.c.l.b16 %v269
      %v513 = vunpack.c.h.b16 %v269
      %v514 = vunpack.c.l.b16 %v270
      %v515 = vunpack.c.l.b16 %v271
      %v516 = vunpack.c.h.b16 %v271
      %v517 = vunpack.c.l.b16 %v272
      %v518 = vunpack.c.l.b16 %v273
      %v519 = vunpack.c.h.b16 %v273
      %v520 = vunpack.c.l.b16 %v274
      %v521 = vunpack.c.l.b16 %v275
      %v522 = vunpack.c.h.b16 %v275
      %v523 = vunpack.c.l.b16 %v276
      %v524 = vunpack.c.l.b16 %v277
      %v525 = vunpack.c.h.b16 %v277
      %v526 = vunpack.c.l.b16 %v278
      %v527 = vunpack.c.l.b16 %v279
      %v528 = vunpack.c.h.b16 %v279
      %v529 = vunpack.c.l.b16 %v280
      %v530 = vunpack.c.l.b16 %v281
      %v531 = vunpack.c.h.b16 %v281
      %v532 = vunpack.c.l.b16 %v282
      %v533 = vunpack.c.l.b16 %v283
      %v534 = vunpack.c.h.b16 %v283
      %v535 = vunpack.c.l.b16 %v284
      %v536 = vunpack.c.l.b16 %v285
      %v537 = vunpack.c.h.b16 %v285
      %v538 = vunpack.c.l.b16 %v286
      %v539 = vunpack.c.l.b16 %v287
      %v540 = vunpack.c.h.b16 %v287
      %v541 = vunpack.c.l.b16 %v288
      %v542 = vunpack.c.l.b16 %v289
      %v543 = vunpack.c.h.b16 %v289
      %v544 = vunpack.c.l.b16 %v290
      %v545 = vunpack.c.l.b16 %v291
      %v546 = vunpack.c.h.b16 %v291
      %v547 = vunpack.c.l.b16 %v292
      %v548 = vunpack.c.l.b16 %v293
      %v549 = vunpack.c.h.b16 %v293
      %v550 = vunpack.c.l.b16 %v294
      %v551 = vunpack.c.l.b16 %v295
      %v552 = vunpack.c.h.b16 %v295
      %v553 = vunpack.c.l.b16 %v296
      %v554 = vunpack.c.l.b16 %v297
      %v555 = vunpack.c.h.b16 %v297
      %v556 = vunpack.c.l.b16 %v298
      %v557 = vunpack.c.l.b16 %v299
      %v558 = vunpack.c.h.b16 %v299
      %v559 = vunpack.c.l.b16 %v300
      %v560 = vunpack.c.l.b16 %v301
      %v561 = vunpack.c.h.b16 %v301
      %v562 = vunpack.c.l.b16 %v302
      %v563 = vunpack.c.l.b16 %v303
      %v564 = vunpack.c.h.b16 %v303
      %v565 = vunpack.c.l.b16 %v304
      %v566 = vunpack.c.l.b16 %v305
      %v567 = vunpack.c.h.b16 %v305
      %v568 = vunpack.c.l.b16 %v306
      %v569 = vunpack.c.l.b16 %v307
      %v570 = vunpack.c.h.b16 %v307
      %v571 = vunpack.c.l.b16 %v308
      %v572 = vunpack.c.l.b16 %v309
      %v573 = vunpack.c.h.b16 %v309
      %v574 = vunpack.c.l.b16 %v310
      %v575 = vpack.c.b16 %v506, %v503
      %v576 = vpack.c.b16 %v507, %v504
      %v577 = vpack.c.b16 %v508, %v505
      %v578 = vpack.c.b16 %v512, %v509
      %v579 = vpack.c.b16 %v513, %v510
      %v580 = vpack.c.b16 %v514, %v511
      %v581 = vpack.c.b16 %v518, %v515
      %v582 = vpack.c.b16 %v519, %v516
      %v583 = vpack.c.b16 %v520, %v517
      %v584 = vpack.c.b16 %v524, %v521
      %v585 = vpack.c.b16 %v525, %v522
      %v586 = vpack.c.b16 %v526, %v523
      %v587 = vpack.c.b16 %v530, %v527
      %v588 = vpack.c.b16 %v531, %v528
      %v589 = vpack.c.b16 %v532, %v529
      %v590 = vpack.c.b16 %v536, %v533
      %v591 = vpack.c.b16 %v537, %v534
      %v592 = vpack.c.b16 %v538, %v535
      %v593 = vpack.c.b16 %v542, %v539
      %v594 = vpack.c.b16 %v543, %v540
      %v595 = vpack.c.b16 %v544, %v541
      %v596 = vpack.c.b16 %v548, %v545
      %v597 = vpack.c.b16 %v549, %v546
      %v598 = vpack.c.b16 %v550, %v547
      %v599 = vpack.c.b16 %v554, %v551
      %v600 = vpack.c.b16 %v555, %v552
      %v601 = vpack.c.b16 %v556, %v553
      %v602 = vpack.c.b16 %v560, %v557
      %v603 = vpack.c.b16 %v561, %v558
      %v604 = vpack.c.b16 %v562, %v559
      %v605 = vpack.c.b16 %v566, %v563
      %v606 = vpack.c.b16 %v567, %v564
      %v607 = vpack.c.b16 %v568, %v565
      %v608 = vpack.c.b16 %v572, %v569
      %v609 = vpack.c.b16 %v573, %v570
      %v610 = vpack.c.b16 %v574, %v571
      %vm647 = vcmask 523264
      %v649 = vsel %vm647, %v408, 0
      %v652 = vsel %vm647, %v410, 0
      %v655 = vsel %vm647, %v412, 0
      %v658 = vsel %vm647, %v414, 0
      %v661 = vsel %vm647, %v416, 0
      %v664 = vsel %vm647, %v418, 0
      %v667 = vsel %vm647, %v420, 0
      %v670 = vsel %vm647, %v422, 0
      %v673 = vsel %vm647, %v424, 0
      %v676 = vsel %vm647, %v426, 0
      %v679 = vsel %vm647, %v428, 0
      %v682 = vsel %vm647, %v430, 0
      %v685 = vsel %vm647, %v432, 0
      %v688 = vsel %vm647, %v434, 0
      %v691 = vsel %vm647, %v436, 0
      %v694 = vsel %vm647, %v438, 0
      %696 = vmatprep.subr.bf16.mxu0 %v597
      %697 = vmatpush1.bf16.msra.mxu0 %v596
      %698 = vmatprep.subr.bf16.mxu0 %v594
      %699 = vmatpush1.bf16.msra.mxu0 %v593
      %700 = vmatprep.subr.bf16.mxu0 %v591
      %701 = vmatpush1.bf16.msra.mxu0 %v590
      %702 = vmatprep.subr.bf16.mxu0 %v588
      %703 = vmatpush1.bf16.msra.mxu0 %v587
      %704 = vmatprep.subr.bf16.mxu0 %v585
      %705 = vmatpush1.bf16.msra.mxu0 %v584
      %706 = vmatprep.subr.bf16.mxu0 %v582
      %707 = vmatpush1.bf16.msra.mxu0 %v581
      %708 = vmatprep.subr.bf16.mxu0 %v579
      %709 = vmatpush1.bf16.msra.mxu0 %v578
      %710 = vmatprep.subr.bf16.mxu0 %v576
      %711 = vmatpush1.bf16.msra.mxu0 %v575
      %712 = vmatprep.subr.bf16.mxu0 0
      %713 = vmatpush2.bf16.msra.mxu0 0
      %714 = vmatprep.subr.bf16.mxu0 0
      %715 = vmatpush2.bf16.msra.mxu0 0
      %716 = vmatprep.subr.bf16.mxu0 0
      %717 = vmatpush2.bf16.msra.mxu0 0
      %718 = vmatprep.subr.bf16.mxu0 0
      %719 = vmatpush2.bf16.msra.mxu0 0
      %720 = vmatprep.subr.bf16.mxu0 %v609
      %721 = vmatpush2.bf16.msra.mxu0 %v608
      %722 = vmatprep.subr.bf16.mxu0 %v606
      %723 = vmatpush2.bf16.msra.mxu0 %v605
      %724 = vmatprep.subr.bf16.mxu0 %v603
      %725 = vmatpush2.bf16.msra.mxu0 %v602
      %726 = vmatprep.subr.bf16.mxu0 %v600
      %727 = vmatpush2.bf16.msra.mxu0 %v599
      %728 = vmatprep.mubr.bf16.mxu0 %v649
      %729 = vmatmul.mubr.bf16.gmra.mxu0 %v407
      %v730 = vpop.f32.mrf.mxu0
      %v731 = vadd.f32 0.0, %v730
      %v732 = vpop.f32.mrf.mxu0
      %v733 = vadd.f32 0.0, %v732
      %v734 = vpop.f32.mrf.mxu0
      %v735 = vadd.f32 0.0, %v734
      %v736 = vpop.f32.mrf.mxu0
      %v737 = vadd.f32 0.0, %v736
      %738 = vmatprep.mubr.bf16.mxu0 %v652
      %739 = vmatmul.mubr.bf16.gmra.mxu0 %v409
      %v740 = vpop.f32.mrf.mxu0
      %v741 = vadd.f32 0.0, %v740
      %v742 = vpop.f32.mrf.mxu0
      %v743 = vadd.f32 0.0, %v742
      %v744 = vpop.f32.mrf.mxu0
      %v745 = vadd.f32 0.0, %v744
      %v746 = vpop.f32.mrf.mxu0
      %v747 = vadd.f32 0.0, %v746
      %748 = vmatprep.mubr.bf16.mxu0 %v655
      %749 = vmatmul.mubr.bf16.gmra.mxu0 %v411
      %v750 = vpop.f32.mrf.mxu0
      %v751 = vadd.f32 0.0, %v750
      %v752 = vpop.f32.mrf.mxu0
      %v753 = vadd.f32 0.0, %v752
      %v754 = vpop.f32.mrf.mxu0
      %v755 = vadd.f32 0.0, %v754
      %v756 = vpop.f32.mrf.mxu0
      %v757 = vadd.f32 0.0, %v756
      %758 = vmatprep.mubr.bf16.mxu0 %v658
      %759 = vmatmul.mubr.bf16.gmra.mxu0 %v413
      %v760 = vpop.f32.mrf.mxu0
      %v761 = vadd.f32 0.0, %v760
      %v762 = vpop.f32.mrf.mxu0
      %v763 = vadd.f32 0.0, %v762
      %v764 = vpop.f32.mrf.mxu0
      %v765 = vadd.f32 0.0, %v764
      %v766 = vpop.f32.mrf.mxu0
      %v767 = vadd.f32 0.0, %v766
      %768 = vmatprep.mubr.bf16.mxu0 %v661
      %769 = vmatmul.mubr.bf16.gmra.mxu0 %v415
      %v770 = vpop.f32.mrf.mxu0
      %v771 = vadd.f32 0.0, %v770
      %v772 = vpop.f32.mrf.mxu0
      %v773 = vadd.f32 0.0, %v772
      %v774 = vpop.f32.mrf.mxu0
      %v775 = vadd.f32 0.0, %v774
      %v776 = vpop.f32.mrf.mxu0
      %v777 = vadd.f32 0.0, %v776
      %778 = vmatprep.mubr.bf16.mxu0 %v664
      %779 = vmatmul.mubr.bf16.gmra.mxu0 %v417
      %v780 = vpop.f32.mrf.mxu0
      %v781 = vadd.f32 0.0, %v780
      %v782 = vpop.f32.mrf.mxu0
      %v783 = vadd.f32 0.0, %v782
      %v784 = vpop.f32.mrf.mxu0
      %v785 = vadd.f32 0.0, %v784
      %v786 = vpop.f32.mrf.mxu0
      %v787 = vadd.f32 0.0, %v786
      %788 = vmatprep.mubr.bf16.mxu0 %v667
      %789 = vmatmul.mubr.bf16.gmra.mxu0 %v419
      %v790 = vpop.f32.mrf.mxu0
      %v791 = vadd.f32 0.0, %v790
      %v792 = vpop.f32.mrf.mxu0
      %v793 = vadd.f32 0.0, %v792
      %v794 = vpop.f32.mrf.mxu0
      %v795 = vadd.f32 0.0, %v794
      %v796 = vpop.f32.mrf.mxu0
      %v797 = vadd.f32 0.0, %v796
      %798 = vmatprep.mubr.bf16.mxu0 %v670
      %799 = vmatmul.mubr.bf16.gmra.mxu0 %v421
      %v800 = vpop.f32.mrf.mxu0
      %v801 = vadd.f32 0.0, %v800
      %v802 = vpop.f32.mrf.mxu0
      %v803 = vadd.f32 0.0, %v802
      %v804 = vpop.f32.mrf.mxu0
      %v805 = vadd.f32 0.0, %v804
      %v806 = vpop.f32.mrf.mxu0
      %v807 = vadd.f32 0.0, %v806
      %808 = vmatprep.mubr.bf16.mxu0 %v673
      %809 = vmatmul.mubr.bf16.gmra.mxu0 %v423
      %v810 = vpop.f32.mrf.mxu0
      %v811 = vadd.f32 0.0, %v810
      %v812 = vpop.f32.mrf.mxu0
      %v813 = vadd.f32 0.0, %v812
      %v814 = vpop.f32.mrf.mxu0
      %v815 = vadd.f32 0.0, %v814
      %v816 = vpop.f32.mrf.mxu0
      %v817 = vadd.f32 0.0, %v816
      %818 = vmatprep.mubr.bf16.mxu0 %v676
      %819 = vmatmul.mubr.bf16.gmra.mxu0 %v425
      %v820 = vpop.f32.mrf.mxu0
      %v821 = vadd.f32 0.0, %v820
      %v822 = vpop.f32.mrf.mxu0
      %v823 = vadd.f32 0.0, %v822
      %v824 = vpop.f32.mrf.mxu0
      %v825 = vadd.f32 0.0, %v824
      %v826 = vpop.f32.mrf.mxu0
      %v827 = vadd.f32 0.0, %v826
      %828 = vmatprep.mubr.bf16.mxu0 %v679
      %829 = vmatmul.mubr.bf16.gmra.mxu0 %v427
      %v830 = vpop.f32.mrf.mxu0
      %v831 = vadd.f32 0.0, %v830
      %v832 = vpop.f32.mrf.mxu0
      %v833 = vadd.f32 0.0, %v832
      %v834 = vpop.f32.mrf.mxu0
      %v835 = vadd.f32 0.0, %v834
      %v836 = vpop.f32.mrf.mxu0
      %v837 = vadd.f32 0.0, %v836
      %838 = vmatprep.mubr.bf16.mxu0 %v682
      %839 = vmatmul.mubr.bf16.gmra.mxu0 %v429
      %v840 = vpop.f32.mrf.mxu0
      %v841 = vadd.f32 0.0, %v840
      %v842 = vpop.f32.mrf.mxu0
      %v843 = vadd.f32 0.0, %v842
      %v844 = vpop.f32.mrf.mxu0
      %v845 = vadd.f32 0.0, %v844
      %v846 = vpop.f32.mrf.mxu0
      %v847 = vadd.f32 0.0, %v846
      %848 = vmatprep.mubr.bf16.mxu0 %v685
      %849 = vmatmul.mubr.bf16.gmra.mxu0 %v431
      %v850 = vpop.f32.mrf.mxu0
      %v851 = vadd.f32 0.0, %v850
      %v852 = vpop.f32.mrf.mxu0
      %v853 = vadd.f32 0.0, %v852
      %v854 = vpop.f32.mrf.mxu0
      %v855 = vadd.f32 0.0, %v854
      %v856 = vpop.f32.mrf.mxu0
      %v857 = vadd.f32 0.0, %v856
      %858 = vmatprep.mubr.bf16.mxu0 %v688
      %859 = vmatmul.mubr.bf16.gmra.mxu0 %v433
      %v860 = vpop.f32.mrf.mxu0
      %v861 = vadd.f32 0.0, %v860
      %v862 = vpop.f32.mrf.mxu0
      %v863 = vadd.f32 0.0, %v862
      %v864 = vpop.f32.mrf.mxu0
      %v865 = vadd.f32 0.0, %v864
      %v866 = vpop.f32.mrf.mxu0
      %v867 = vadd.f32 0.0, %v866
      %868 = vmatprep.mubr.bf16.mxu0 %v691
      %869 = vmatmul.mubr.bf16.gmra.mxu0 %v435
      %v870 = vpop.f32.mrf.mxu0
      %v871 = vadd.f32 0.0, %v870
      %v872 = vpop.f32.mrf.mxu0
      %v873 = vadd.f32 0.0, %v872
      %v874 = vpop.f32.mrf.mxu0
      %v875 = vadd.f32 0.0, %v874
      %v876 = vpop.f32.mrf.mxu0
      %v877 = vadd.f32 0.0, %v876
      %878 = vmatprep.mubr.bf16.mxu0 %v694
      %879 = vmatmul.mubr.bf16.gmra.mxu0 %v437
      %v880 = vpop.f32.mrf.mxu0
      %v881 = vadd.f32 0.0, %v880
      %v882 = vpop.f32.mrf.mxu0
      %v883 = vadd.f32 0.0, %v882
      %v884 = vpop.f32.mrf.mxu0
      %v885 = vadd.f32 0.0, %v884
      %v886 = vpop.f32.mrf.mxu0
      %v887 = vadd.f32 0.0, %v886
      %888 = vdwg.mxu0
      %889 = vmatprep.subr.bf16.mxu0 0
      %890 = vmatpush1.bf16.msra.mxu0 %v598
      %891 = vmatprep.subr.bf16.mxu0 0
      %892 = vmatpush1.bf16.msra.mxu0 %v595
      %893 = vmatprep.subr.bf16.mxu0 0
      %894 = vmatpush1.bf16.msra.mxu0 %v592
      %895 = vmatprep.subr.bf16.mxu0 0
      %896 = vmatpush1.bf16.msra.mxu0 %v589
      %897 = vmatprep.subr.bf16.mxu0 0
      %898 = vmatpush1.bf16.msra.mxu0 %v586
      %899 = vmatprep.subr.bf16.mxu0 0
      %900 = vmatpush1.bf16.msra.mxu0 %v583
      %901 = vmatprep.subr.bf16.mxu0 0
      %902 = vmatpush1.bf16.msra.mxu0 %v580
      %903 = vmatprep.subr.bf16.mxu0 0
      %904 = vmatpush1.bf16.msra.mxu0 %v577
      %905 = vmatprep.subr.bf16.mxu0 0
      %906 = vmatpush2.bf16.msra.mxu0 0
      %907 = vmatprep.subr.bf16.mxu0 0
      %908 = vmatpush2.bf16.msra.mxu0 0
      %909 = vmatprep.subr.bf16.mxu0 0
      %910 = vmatpush2.bf16.msra.mxu0 0
      %911 = vmatprep.subr.bf16.mxu0 0
      %912 = vmatpush2.bf16.msra.mxu0 0
      %913 = vmatprep.subr.bf16.mxu0 0
      %914 = vmatpush2.bf16.msra.mxu0 %v610
      %915 = vmatprep.subr.bf16.mxu0 0
      %916 = vmatpush2.bf16.msra.mxu0 %v607
      %917 = vmatprep.subr.bf16.mxu0 0
      %918 = vmatpush2.bf16.msra.mxu0 %v604
      %919 = vmatprep.subr.bf16.mxu0 0
      %920 = vmatpush2.bf16.msra.mxu0 %v601
      %921 = vmatprep.mubr.bf16.mxu0 %v649
      %922 = vmatmul.mubr.bf16.gmra.mxu0 %v407
      %v923 = vpop.f32.mrf.mxu0
      %v924 = vadd.f32 0.0, %v923
      %v925 = vpop.f32.mrf.mxu0
      %v926 = vpop.f32.mrf.mxu0
      %v927 = vadd.f32 0.0, %v926
      %v928 = vpop.f32.mrf.mxu0
      %929 = vmatprep.mubr.bf16.mxu0 %v652
      %930 = vmatmul.mubr.bf16.gmra.mxu0 %v409
      %v931 = vpop.f32.mrf.mxu0
      %v932 = vadd.f32 0.0, %v931
      %v933 = vpop.f32.mrf.mxu0
      %v934 = vpop.f32.mrf.mxu0
      %v935 = vadd.f32 0.0, %v934
      %v936 = vpop.f32.mrf.mxu0
      %937 = vmatprep.mubr.bf16.mxu0 %v655
      %938 = vmatmul.mubr.bf16.gmra.mxu0 %v411
      %v939 = vpop.f32.mrf.mxu0
      %v940 = vadd.f32 0.0, %v939
      %v941 = vpop.f32.mrf.mxu0
      %v942 = vpop.f32.mrf.mxu0
      %v943 = vadd.f32 0.0, %v942
      %v944 = vpop.f32.mrf.mxu0
      %945 = vmatprep.mubr.bf16.mxu0 %v658
      %946 = vmatmul.mubr.bf16.gmra.mxu0 %v413
      %v947 = vpop.f32.mrf.mxu0
      %v948 = vadd.f32 0.0, %v947
      %v949 = vpop.f32.mrf.mxu0
      %v950 = vpop.f32.mrf.mxu0
      %v951 = vadd.f32 0.0, %v950
      %v952 = vpop.f32.mrf.mxu0
      %953 = vmatprep.mubr.bf16.mxu0 %v661
      %954 = vmatmul.mubr.bf16.gmra.mxu0 %v415
      %v955 = vpop.f32.mrf.mxu0
      %v956 = vadd.f32 0.0, %v955
      %v957 = vpop.f32.mrf.mxu0
      %v958 = vpop.f32.mrf.mxu0
      %v959 = vadd.f32 0.0, %v958
      %v960 = vpop.f32.mrf.mxu0
      %961 = vmatprep.mubr.bf16.mxu0 %v664
      %962 = vmatmul.mubr.bf16.gmra.mxu0 %v417
      %v963 = vpop.f32.mrf.mxu0
      %v964 = vadd.f32 0.0, %v963
      %v965 = vpop.f32.mrf.mxu0
      %v966 = vpop.f32.mrf.mxu0
      %v967 = vadd.f32 0.0, %v966
      %v968 = vpop.f32.mrf.mxu0
      %969 = vmatprep.mubr.bf16.mxu0 %v667
      %970 = vmatmul.mubr.bf16.gmra.mxu0 %v419
      %v971 = vpop.f32.mrf.mxu0
      %v972 = vadd.f32 0.0, %v971
      %v973 = vpop.f32.mrf.mxu0
      %v974 = vpop.f32.mrf.mxu0
      %v975 = vadd.f32 0.0, %v974
      %v976 = vpop.f32.mrf.mxu0
      %977 = vmatprep.mubr.bf16.mxu0 %v670
      %978 = vmatmul.mubr.bf16.gmra.mxu0 %v421
      %v979 = vpop.f32.mrf.mxu0
      %v980 = vadd.f32 0.0, %v979
      %v981 = vpop.f32.mrf.mxu0
      %v982 = vpop.f32.mrf.mxu0
      %v983 = vadd.f32 0.0, %v982
      %v984 = vpop.f32.mrf.mxu0
      %985 = vmatprep.mubr.bf16.mxu0 %v673
      %986 = vmatmul.mubr.bf16.gmra.mxu0 %v423
      %v987 = vpop.f32.mrf.mxu0
      %v988 = vadd.f32 0.0, %v987
      %v989 = vpop.f32.mrf.mxu0
      %v990 = vpop.f32.mrf.mxu0
      %v991 = vadd.f32 0.0, %v990
      %v992 = vpop.f32.mrf.mxu0
      %993 = vmatprep.mubr.bf16.mxu0 %v676
      %994 = vmatmul.mubr.bf16.gmra.mxu0 %v425
      %v995 = vpop.f32.mrf.mxu0
      %v996 = vadd.f32 0.0, %v995
      %v997 = vpop.f32.mrf.mxu0
      %v998 = vpop.f32.mrf.mxu0
      %v999 = vadd.f32 0.0, %v998
      %v1000 = vpop.f32.mrf.mxu0
      %1001 = vmatprep.mubr.bf16.mxu0 %v679
      %1002 = vmatmul.mubr.bf16.gmra.mxu0 %v427
      %v1003 = vpop.f32.mrf.mxu0
      %v1004 = vadd.f32 0.0, %v1003
      %v1005 = vpop.f32.mrf.mxu0
      %v1006 = vpop.f32.mrf.mxu0
      %v1007 = vadd.f32 0.0, %v1006
      %v1008 = vpop.f32.mrf.mxu0
      %1009 = vmatprep.mubr.bf16.mxu0 %v682
      %1010 = vmatmul.mubr.bf16.gmra.mxu0 %v429
      %v1011 = vpop.f32.mrf.mxu0
      %v1012 = vadd.f32 0.0, %v1011
      %v1013 = vpop.f32.mrf.mxu0
      %v1014 = vpop.f32.mrf.mxu0
      %v1015 = vadd.f32 0.0, %v1014
      %v1016 = vpop.f32.mrf.mxu0
      %1017 = vmatprep.mubr.bf16.mxu0 %v685
      %1018 = vmatmul.mubr.bf16.gmra.mxu0 %v431
      %v1019 = vpop.f32.mrf.mxu0
      %v1020 = vadd.f32 0.0, %v1019
      %v1021 = vpop.f32.mrf.mxu0
      %v1022 = vpop.f32.mrf.mxu0
      %v1023 = vadd.f32 0.0, %v1022
      %v1024 = vpop.f32.mrf.mxu0
      %1025 = vmatprep.mubr.bf16.mxu0 %v688
      %1026 = vmatmul.mubr.bf16.gmra.mxu0 %v433
      %v1027 = vpop.f32.mrf.mxu0
      %v1028 = vadd.f32 0.0, %v1027
      %v1029 = vpop.f32.mrf.mxu0
      %v1030 = vpop.f32.mrf.mxu0
      %v1031 = vadd.f32 0.0, %v1030
      %v1032 = vpop.f32.mrf.mxu0
      %1033 = vmatprep.mubr.bf16.mxu0 %v691
      %1034 = vmatmul.mubr.bf16.gmra.mxu0 %v435
      %v1035 = vpop.f32.mrf.mxu0
      %v1036 = vadd.f32 0.0, %v1035
      %v1037 = vpop.f32.mrf.mxu0
      %v1038 = vpop.f32.mrf.mxu0
      %v1039 = vadd.f32 0.0, %v1038
      %v1040 = vpop.f32.mrf.mxu0
      %1041 = vmatprep.mubr.bf16.mxu0 %v694
      %1042 = vmatmul.mubr.bf16.gmra.mxu0 %v437
      %v1043 = vpop.f32.mrf.mxu0
      %v1044 = vadd.f32 0.0, %v1043
      %v1045 = vpop.f32.mrf.mxu0
      %v1046 = vpop.f32.mrf.mxu0
      %v1047 = vadd.f32 0.0, %v1046
      %v1048 = vpop.f32.mrf.mxu0
      %1049 = vdwg.mxu0
      %v1082 = vunpack.c.l.b16 %v150
      %v1083 = vunpack.c.h.b16 %v150
      %v1084 = vunpack.c.l.b16 %v151
      %v1085 = vunpack.c.h.b16 %v151
      %v1086 = vunpack.c.l.b16 %v152
      %v1087 = vunpack.c.h.b16 %v152
      %v1088 = vunpack.c.l.b16 %v153
      %v1089 = vunpack.c.h.b16 %v153
      %v1090 = vunpack.c.l.b16 %v154
      %v1091 = vunpack.c.h.b16 %v154
      %v1092 = vunpack.c.l.b16 %v155
      %v1093 = vunpack.c.h.b16 %v155
      %v1094 = vunpack.c.l.b16 %v156
      %v1095 = vunpack.c.h.b16 %v156
      %v1096 = vunpack.c.l.b16 %v157
      %v1097 = vunpack.c.h.b16 %v157
      %v1098 = vunpack.c.l.b16 %v158
      %v1099 = vunpack.c.h.b16 %v158
      %v1100 = vunpack.c.l.b16 %v159
      %v1101 = vunpack.c.h.b16 %v159
      %v1102 = vunpack.c.l.b16 %v160
      %v1103 = vunpack.c.h.b16 %v160
      %v1104 = vunpack.c.l.b16 %v161
      %v1105 = vunpack.c.h.b16 %v161
      %v1106 = vunpack.c.l.b16 %v162
      %v1107 = vunpack.c.h.b16 %v162
      %v1108 = vunpack.c.l.b16 %v163
      %v1109 = vunpack.c.h.b16 %v163
      %v1110 = vunpack.c.l.b16 %v164
      %v1111 = vunpack.c.h.b16 %v164
      %v1112 = vunpack.c.l.b16 %v165
      %v1113 = vunpack.c.h.b16 %v165
      %v1114 = vunpack.c.l.b16 %v166
      %v1115 = vunpack.c.h.b16 %v166
      %v1116 = vunpack.c.l.b16 %v167
      %v1117 = vunpack.c.h.b16 %v167
      %v1118 = vunpack.c.l.b16 %v168
      %v1119 = vunpack.c.h.b16 %v168
      %v1120 = vunpack.c.l.b16 %v169
      %v1121 = vunpack.c.h.b16 %v169
      %v1122 = vunpack.c.l.b16 %v170
      %v1123 = vunpack.c.h.b16 %v170
      %v1124 = vunpack.c.l.b16 %v171
      %v1125 = vunpack.c.h.b16 %v171
      %v1126 = vunpack.c.l.b16 %v172
      %v1127 = vunpack.c.h.b16 %v172
      %v1128 = vunpack.c.l.b16 %v173
      %v1129 = vunpack.c.h.b16 %v173
      %v1130 = vunpack.c.l.b16 %v174
      %v1131 = vunpack.c.h.b16 %v174
      %v1132 = vunpack.c.l.b16 %v175
      %v1133 = vunpack.c.h.b16 %v175
      %v1134 = vunpack.c.l.b16 %v176
      %v1135 = vunpack.c.h.b16 %v176
      %v1136 = vunpack.c.l.b16 %v177
      %v1137 = vunpack.c.h.b16 %v177
      %v1138 = vunpack.c.l.b16 %v178
      %v1139 = vunpack.c.h.b16 %v178
      %v1140 = vunpack.c.l.b16 %v179
      %v1141 = vunpack.c.h.b16 %v179
      %v1142 = vunpack.c.l.b16 %v180
      %v1143 = vunpack.c.h.b16 %v180
      %v1144 = vunpack.c.l.b16 %v181
      %v1145 = vunpack.c.h.b16 %v181
      %v1146 = vpack.c.b16 %v1084, %v1082
      %v1147 = vpack.c.b16 %v1085, %v1083
      %v1148 = vpack.c.b16 %v1088, %v1086
      %v1149 = vpack.c.b16 %v1089, %v1087
      %v1150 = vpack.c.b16 %v1092, %v1090
      %v1151 = vpack.c.b16 %v1093, %v1091
      %v1152 = vpack.c.b16 %v1096, %v1094
      %v1153 = vpack.c.b16 %v1097, %v1095
      %v1154 = vpack.c.b16 %v1100, %v1098
      %v1155 = vpack.c.b16 %v1101, %v1099
      %v1156 = vpack.c.b16 %v1104, %v1102
      %v1157 = vpack.c.b16 %v1105, %v1103
      %v1158 = vpack.c.b16 %v1108, %v1106
      %v1159 = vpack.c.b16 %v1109, %v1107
      %v1160 = vpack.c.b16 %v1112, %v1110
      %v1161 = vpack.c.b16 %v1113, %v1111
      %v1162 = vpack.c.b16 %v1116, %v1114
      %v1163 = vpack.c.b16 %v1117, %v1115
      %v1164 = vpack.c.b16 %v1120, %v1118
      %v1165 = vpack.c.b16 %v1121, %v1119
      %v1166 = vpack.c.b16 %v1124, %v1122
      %v1167 = vpack.c.b16 %v1125, %v1123
      %v1168 = vpack.c.b16 %v1128, %v1126
      %v1169 = vpack.c.b16 %v1129, %v1127
      %v1170 = vpack.c.b16 %v1132, %v1130
      %v1171 = vpack.c.b16 %v1133, %v1131
      %v1172 = vpack.c.b16 %v1136, %v1134
      %v1173 = vpack.c.b16 %v1137, %v1135
      %v1174 = vpack.c.b16 %v1140, %v1138
      %v1175 = vpack.c.b16 %v1141, %v1139
      %v1176 = vpack.c.b16 %v1144, %v1142
      %v1177 = vpack.c.b16 %v1145, %v1143
      %v1242 = vunpack.c.l.b16 %v182
      %v1243 = vunpack.c.h.b16 %v182
      %v1244 = vunpack.c.l.b16 %v183
      %v1245 = vunpack.c.l.b16 %v184
      %v1246 = vunpack.c.h.b16 %v184
      %v1247 = vunpack.c.l.b16 %v185
      %v1248 = vunpack.c.l.b16 %v186
      %v1249 = vunpack.c.h.b16 %v186
      %v1250 = vunpack.c.l.b16 %v187
      %v1251 = vunpack.c.l.b16 %v188
      %v1252 = vunpack.c.h.b16 %v188
      %v1253 = vunpack.c.l.b16 %v189
      %v1254 = vunpack.c.l.b16 %v190
      %v1255 = vunpack.c.h.b16 %v190
      %v1256 = vunpack.c.l.b16 %v191
      %v1257 = vunpack.c.l.b16 %v192
      %v1258 = vunpack.c.h.b16 %v192
      %v1259 = vunpack.c.l.b16 %v193
      %v1260 = vunpack.c.l.b16 %v194
      %v1261 = vunpack.c.h.b16 %v194
      %v1262 = vunpack.c.l.b16 %v195
      %v1263 = vunpack.c.l.b16 %v196
      %v1264 = vunpack.c.h.b16 %v196
      %v1265 = vunpack.c.l.b16 %v197
      %v1266 = vunpack.c.l.b16 %v198
      %v1267 = vunpack.c.h.b16 %v198
      %v1268 = vunpack.c.l.b16 %v199
      %v1269 = vunpack.c.l.b16 %v200
      %v1270 = vunpack.c.h.b16 %v200
      %v1271 = vunpack.c.l.b16 %v201
      %v1272 = vunpack.c.l.b16 %v202
      %v1273 = vunpack.c.h.b16 %v202
      %v1274 = vunpack.c.l.b16 %v203
      %v1275 = vunpack.c.l.b16 %v204
      %v1276 = vunpack.c.h.b16 %v204
      %v1277 = vunpack.c.l.b16 %v205
      %v1278 = vunpack.c.l.b16 %v206
      %v1279 = vunpack.c.h.b16 %v206
      %v1280 = vunpack.c.l.b16 %v207
      %v1281 = vunpack.c.l.b16 %v208
      %v1282 = vunpack.c.h.b16 %v208
      %v1283 = vunpack.c.l.b16 %v209
      %v1284 = vunpack.c.l.b16 %v210
      %v1285 = vunpack.c.h.b16 %v210
      %v1286 = vunpack.c.l.b16 %v211
      %v1287 = vunpack.c.l.b16 %v212
      %v1288 = vunpack.c.h.b16 %v212
      %v1289 = vunpack.c.l.b16 %v213
      %v1290 = vunpack.c.l.b16 %v214
      %v1291 = vunpack.c.h.b16 %v214
      %v1292 = vunpack.c.l.b16 %v215
      %v1293 = vunpack.c.l.b16 %v216
      %v1294 = vunpack.c.h.b16 %v216
      %v1295 = vunpack.c.l.b16 %v217
      %v1296 = vunpack.c.l.b16 %v218
      %v1297 = vunpack.c.h.b16 %v218
      %v1298 = vunpack.c.l.b16 %v219
      %v1299 = vunpack.c.l.b16 %v220
      %v1300 = vunpack.c.h.b16 %v220
      %v1301 = vunpack.c.l.b16 %v221
      %v1302 = vunpack.c.l.b16 %v222
      %v1303 = vunpack.c.h.b16 %v222
      %v1304 = vunpack.c.l.b16 %v223
      %v1305 = vunpack.c.l.b16 %v224
      %v1306 = vunpack.c.h.b16 %v224
      %v1307 = vunpack.c.l.b16 %v225
      %v1308 = vunpack.c.l.b16 %v226
      %v1309 = vunpack.c.h.b16 %v226
      %v1310 = vunpack.c.l.b16 %v227
      %v1311 = vunpack.c.l.b16 %v228
      %v1312 = vunpack.c.h.b16 %v228
      %v1313 = vunpack.c.l.b16 %v229
      %v1314 = vpack.c.b16 %v1245, %v1242
      %v1315 = vpack.c.b16 %v1246, %v1243
      %v1316 = vpack.c.b16 %v1247, %v1244
      %v1317 = vpack.c.b16 %v1251, %v1248
      %v1318 = vpack.c.b16 %v1252, %v1249
      %v1319 = vpack.c.b16 %v1253, %v1250
      %v1320 = vpack.c.b16 %v1257, %v1254
      %v1321 = vpack.c.b16 %v1258, %v1255
      %v1322 = vpack.c.b16 %v1259, %v1256
      %v1323 = vpack.c.b16 %v1263, %v1260
      %v1324 = vpack.c.b16 %v1264, %v1261
      %v1325 = vpack.c.b16 %v1265, %v1262
      %v1326 = vpack.c.b16 %v1269, %v1266
      %v1327 = vpack.c.b16 %v1270, %v1267
      %v1328 = vpack.c.b16 %v1271, %v1268
      %v1329 = vpack.c.b16 %v1275, %v1272
      %v1330 = vpack.c.b16 %v1276, %v1273
      %v1331 = vpack.c.b16 %v1277, %v1274
      %v1332 = vpack.c.b16 %v1281, %v1278
      %v1333 = vpack.c.b16 %v1282, %v1279
      %v1334 = vpack.c.b16 %v1283, %v1280
      %v1335 = vpack.c.b16 %v1287, %v1284
      %v1336 = vpack.c.b16 %v1288, %v1285
      %v1337 = vpack.c.b16 %v1289, %v1286
      %v1338 = vpack.c.b16 %v1293, %v1290
      %v1339 = vpack.c.b16 %v1294, %v1291
      %v1340 = vpack.c.b16 %v1295, %v1292
      %v1341 = vpack.c.b16 %v1299, %v1296
      %v1342 = vpack.c.b16 %v1300, %v1297
      %v1343 = vpack.c.b16 %v1301, %v1298
      %v1344 = vpack.c.b16 %v1305, %v1302
      %v1345 = vpack.c.b16 %v1306, %v1303
      %v1346 = vpack.c.b16 %v1307, %v1304
      %v1347 = vpack.c.b16 %v1311, %v1308
      %v1348 = vpack.c.b16 %v1312, %v1309
      %v1349 = vpack.c.b16 %v1313, %v1310
      %v1387 = vsel %vm647, %v1147, 0
      %v1390 = vsel %vm647, %v1149, 0
      %v1393 = vsel %vm647, %v1151, 0
      %v1396 = vsel %vm647, %v1153, 0
      %v1399 = vsel %vm647, %v1155, 0
      %v1402 = vsel %vm647, %v1157, 0
      %v1405 = vsel %vm647, %v1159, 0
      %v1408 = vsel %vm647, %v1161, 0
      %v1411 = vsel %vm647, %v1163, 0
      %v1414 = vsel %vm647, %v1165, 0
      %v1417 = vsel %vm647, %v1167, 0
      %v1420 = vsel %vm647, %v1169, 0
      %v1423 = vsel %vm647, %v1171, 0
      %v1426 = vsel %vm647, %v1173, 0
      %v1429 = vsel %vm647, %v1175, 0
      %v1432 = vsel %vm647, %v1177, 0
      %1434 = vmatprep.subr.bf16.mxu0 %v1336
      %1435 = vmatpush1.bf16.msra.mxu0 %v1335
      %1436 = vmatprep.subr.bf16.mxu0 %v1333
      %1437 = vmatpush1.bf16.msra.mxu0 %v1332
      %1438 = vmatprep.subr.bf16.mxu0 %v1330
      %1439 = vmatpush1.bf16.msra.mxu0 %v1329
      %1440 = vmatprep.subr.bf16.mxu0 %v1327
      %1441 = vmatpush1.bf16.msra.mxu0 %v1326
      %1442 = vmatprep.subr.bf16.mxu0 %v1324
      %1443 = vmatpush1.bf16.msra.mxu0 %v1323
      %1444 = vmatprep.subr.bf16.mxu0 %v1321
      %1445 = vmatpush1.bf16.msra.mxu0 %v1320
      %1446 = vmatprep.subr.bf16.mxu0 %v1318
      %1447 = vmatpush1.bf16.msra.mxu0 %v1317
      %1448 = vmatprep.subr.bf16.mxu0 %v1315
      %1449 = vmatpush1.bf16.msra.mxu0 %v1314
      %1450 = vmatprep.subr.bf16.mxu0 0
      %1451 = vmatpush2.bf16.msra.mxu0 0
      %1452 = vmatprep.subr.bf16.mxu0 0
      %1453 = vmatpush2.bf16.msra.mxu0 0
      %1454 = vmatprep.subr.bf16.mxu0 0
      %1455 = vmatpush2.bf16.msra.mxu0 0
      %1456 = vmatprep.subr.bf16.mxu0 0
      %1457 = vmatpush2.bf16.msra.mxu0 0
      %1458 = vmatprep.subr.bf16.mxu0 %v1348
      %1459 = vmatpush2.bf16.msra.mxu0 %v1347
      %1460 = vmatprep.subr.bf16.mxu0 %v1345
      %1461 = vmatpush2.bf16.msra.mxu0 %v1344
      %1462 = vmatprep.subr.bf16.mxu0 %v1342
      %1463 = vmatpush2.bf16.msra.mxu0 %v1341
      %1464 = vmatprep.subr.bf16.mxu0 %v1339
      %1465 = vmatpush2.bf16.msra.mxu0 %v1338
      %1466 = vmatprep.mubr.bf16.mxu0 %v1387
      %1467 = vmatmul.mubr.bf16.gmra.mxu0 %v1146
      %v1468 = vpop.f32.mrf.mxu0
      %v1469 = vadd.f32 %v731, %v1468
      %v1470 = vpop.f32.mrf.mxu0
      %v1471 = vadd.f32 %v733, %v1470
      %v1472 = vpop.f32.mrf.mxu0
      %v1473 = vadd.f32 %v735, %v1472
      %v1474 = vpop.f32.mrf.mxu0
      %v1475 = vadd.f32 %v737, %v1474
      %1476 = vmatprep.mubr.bf16.mxu0 %v1390
      %1477 = vmatmul.mubr.bf16.gmra.mxu0 %v1148
      %v1478 = vpop.f32.mrf.mxu0
      %v1479 = vadd.f32 %v741, %v1478
      %v1480 = vpop.f32.mrf.mxu0
      %v1481 = vadd.f32 %v743, %v1480
      %v1482 = vpop.f32.mrf.mxu0
      %v1483 = vadd.f32 %v745, %v1482
      %v1484 = vpop.f32.mrf.mxu0
      %v1485 = vadd.f32 %v747, %v1484
      %1486 = vmatprep.mubr.bf16.mxu0 %v1393
      %1487 = vmatmul.mubr.bf16.gmra.mxu0 %v1150
      %v1488 = vpop.f32.mrf.mxu0
      %v1489 = vadd.f32 %v751, %v1488
      %v1490 = vpop.f32.mrf.mxu0
      %v1491 = vadd.f32 %v753, %v1490
      %v1492 = vpop.f32.mrf.mxu0
      %v1493 = vadd.f32 %v755, %v1492
      %v1494 = vpop.f32.mrf.mxu0
      %v1495 = vadd.f32 %v757, %v1494
      %1496 = vmatprep.mubr.bf16.mxu0 %v1396
      %1497 = vmatmul.mubr.bf16.gmra.mxu0 %v1152
      %v1498 = vpop.f32.mrf.mxu0
      %v1499 = vadd.f32 %v761, %v1498
      %v1500 = vpop.f32.mrf.mxu0
      %v1501 = vadd.f32 %v763, %v1500
      %v1502 = vpop.f32.mrf.mxu0
      %v1503 = vadd.f32 %v765, %v1502
      %v1504 = vpop.f32.mrf.mxu0
      %v1505 = vadd.f32 %v767, %v1504
      %1506 = vmatprep.mubr.bf16.mxu0 %v1399
      %1507 = vmatmul.mubr.bf16.gmra.mxu0 %v1154
      %v1508 = vpop.f32.mrf.mxu0
      %v1509 = vadd.f32 %v771, %v1508
      %v1510 = vpop.f32.mrf.mxu0
      %v1511 = vadd.f32 %v773, %v1510
      %v1512 = vpop.f32.mrf.mxu0
      %v1513 = vadd.f32 %v775, %v1512
      %v1514 = vpop.f32.mrf.mxu0
      %v1515 = vadd.f32 %v777, %v1514
      %1516 = vmatprep.mubr.bf16.mxu0 %v1402
      %1517 = vmatmul.mubr.bf16.gmra.mxu0 %v1156
      %v1518 = vpop.f32.mrf.mxu0
      %v1519 = vadd.f32 %v781, %v1518
      %v1520 = vpop.f32.mrf.mxu0
      %v1521 = vadd.f32 %v783, %v1520
      %v1522 = vpop.f32.mrf.mxu0
      %v1523 = vadd.f32 %v785, %v1522
      %v1524 = vpop.f32.mrf.mxu0
      %v1525 = vadd.f32 %v787, %v1524
      %1526 = vmatprep.mubr.bf16.mxu0 %v1405
      %1527 = vmatmul.mubr.bf16.gmra.mxu0 %v1158
      %v1528 = vpop.f32.mrf.mxu0
      %v1529 = vadd.f32 %v791, %v1528
      %v1530 = vpop.f32.mrf.mxu0
      %v1531 = vadd.f32 %v793, %v1530
      %v1532 = vpop.f32.mrf.mxu0
      %v1533 = vadd.f32 %v795, %v1532
      %v1534 = vpop.f32.mrf.mxu0
      %v1535 = vadd.f32 %v797, %v1534
      %1536 = vmatprep.mubr.bf16.mxu0 %v1408
      %1537 = vmatmul.mubr.bf16.gmra.mxu0 %v1160
      %v1538 = vpop.f32.mrf.mxu0
      %v1539 = vadd.f32 %v801, %v1538
      %v1540 = vpop.f32.mrf.mxu0
      %v1541 = vadd.f32 %v803, %v1540
      %v1542 = vpop.f32.mrf.mxu0
      %v1543 = vadd.f32 %v805, %v1542
      %v1544 = vpop.f32.mrf.mxu0
      %v1545 = vadd.f32 %v807, %v1544
      %1546 = vmatprep.mubr.bf16.mxu0 %v1411
      %1547 = vmatmul.mubr.bf16.gmra.mxu0 %v1162
      %v1548 = vpop.f32.mrf.mxu0
      %v1549 = vadd.f32 %v811, %v1548
      %v1550 = vpop.f32.mrf.mxu0
      %v1551 = vadd.f32 %v813, %v1550
      %v1552 = vpop.f32.mrf.mxu0
      %v1553 = vadd.f32 %v815, %v1552
      %v1554 = vpop.f32.mrf.mxu0
      %v1555 = vadd.f32 %v817, %v1554
      %1556 = vmatprep.mubr.bf16.mxu0 %v1414
      %1557 = vmatmul.mubr.bf16.gmra.mxu0 %v1164
      %v1558 = vpop.f32.mrf.mxu0
      %v1559 = vadd.f32 %v821, %v1558
      %v1560 = vpop.f32.mrf.mxu0
      %v1561 = vadd.f32 %v823, %v1560
      %v1562 = vpop.f32.mrf.mxu0
      %v1563 = vadd.f32 %v825, %v1562
      %v1564 = vpop.f32.mrf.mxu0
      %v1565 = vadd.f32 %v827, %v1564
      %1566 = vmatprep.mubr.bf16.mxu0 %v1417
      %1567 = vmatmul.mubr.bf16.gmra.mxu0 %v1166
      %v1568 = vpop.f32.mrf.mxu0
      %v1569 = vadd.f32 %v831, %v1568
      %v1570 = vpop.f32.mrf.mxu0
      %v1571 = vadd.f32 %v833, %v1570
      %v1572 = vpop.f32.mrf.mxu0
      %v1573 = vadd.f32 %v835, %v1572
      %v1574 = vpop.f32.mrf.mxu0
      %v1575 = vadd.f32 %v837, %v1574
      %1576 = vmatprep.mubr.bf16.mxu0 %v1420
      %1577 = vmatmul.mubr.bf16.gmra.mxu0 %v1168
      %v1578 = vpop.f32.mrf.mxu0
      %v1579 = vadd.f32 %v841, %v1578
      %v1580 = vpop.f32.mrf.mxu0
      %v1581 = vadd.f32 %v843, %v1580
      %v1582 = vpop.f32.mrf.mxu0
      %v1583 = vadd.f32 %v845, %v1582
      %v1584 = vpop.f32.mrf.mxu0
      %v1585 = vadd.f32 %v847, %v1584
      %1586 = vmatprep.mubr.bf16.mxu0 %v1423
      %1587 = vmatmul.mubr.bf16.gmra.mxu0 %v1170
      %v1588 = vpop.f32.mrf.mxu0
      %v1589 = vadd.f32 %v851, %v1588
      %v1590 = vpop.f32.mrf.mxu0
      %v1591 = vadd.f32 %v853, %v1590
      %v1592 = vpop.f32.mrf.mxu0
      %v1593 = vadd.f32 %v855, %v1592
      %v1594 = vpop.f32.mrf.mxu0
      %v1595 = vadd.f32 %v857, %v1594
      %1596 = vmatprep.mubr.bf16.mxu0 %v1426
      %1597 = vmatmul.mubr.bf16.gmra.mxu0 %v1172
      %v1598 = vpop.f32.mrf.mxu0
      %v1599 = vadd.f32 %v861, %v1598
      %v1600 = vpop.f32.mrf.mxu0
      %v1601 = vadd.f32 %v863, %v1600
      %v1602 = vpop.f32.mrf.mxu0
      %v1603 = vadd.f32 %v865, %v1602
      %v1604 = vpop.f32.mrf.mxu0
      %v1605 = vadd.f32 %v867, %v1604
      %1606 = vmatprep.mubr.bf16.mxu0 %v1429
      %1607 = vmatmul.mubr.bf16.gmra.mxu0 %v1174
      %v1608 = vpop.f32.mrf.mxu0
      %v1609 = vadd.f32 %v871, %v1608
      %v1610 = vpop.f32.mrf.mxu0
      %v1611 = vadd.f32 %v873, %v1610
      %v1612 = vpop.f32.mrf.mxu0
      %v1613 = vadd.f32 %v875, %v1612
      %v1614 = vpop.f32.mrf.mxu0
      %v1615 = vadd.f32 %v877, %v1614
      %1616 = vmatprep.mubr.bf16.mxu0 %v1432
      %1617 = vmatmul.mubr.bf16.gmra.mxu0 %v1176
      %v1618 = vpop.f32.mrf.mxu0
      %v1619 = vadd.f32 %v881, %v1618
      %v1620 = vpop.f32.mrf.mxu0
      %v1621 = vadd.f32 %v883, %v1620
      %v1622 = vpop.f32.mrf.mxu0
      %v1623 = vadd.f32 %v885, %v1622
      %v1624 = vpop.f32.mrf.mxu0
      %v1625 = vadd.f32 %v887, %v1624
      %1626 = vdwg.mxu0
      %1627 = vmatprep.subr.bf16.mxu0 0
      %1628 = vmatpush1.bf16.msra.mxu0 %v1337
      %1629 = vmatprep.subr.bf16.mxu0 0
      %1630 = vmatpush1.bf16.msra.mxu0 %v1334
      %1631 = vmatprep.subr.bf16.mxu0 0
      %1632 = vmatpush1.bf16.msra.mxu0 %v1331
      %1633 = vmatprep.subr.bf16.mxu0 0
      %1634 = vmatpush1.bf16.msra.mxu0 %v1328
      %1635 = vmatprep.subr.bf16.mxu0 0
      %1636 = vmatpush1.bf16.msra.mxu0 %v1325
      %1637 = vmatprep.subr.bf16.mxu0 0
      %1638 = vmatpush1.bf16.msra.mxu0 %v1322
      %1639 = vmatprep.subr.bf16.mxu0 0
      %1640 = vmatpush1.bf16.msra.mxu0 %v1319
      %1641 = vmatprep.subr.bf16.mxu0 0
      %1642 = vmatpush1.bf16.msra.mxu0 %v1316
      %1643 = vmatprep.subr.bf16.mxu0 0
      %1644 = vmatpush2.bf16.msra.mxu0 0
      %1645 = vmatprep.subr.bf16.mxu0 0
      %1646 = vmatpush2.bf16.msra.mxu0 0
      %1647 = vmatprep.subr.bf16.mxu0 0
      %1648 = vmatpush2.bf16.msra.mxu0 0
      %1649 = vmatprep.subr.bf16.mxu0 0
      %1650 = vmatpush2.bf16.msra.mxu0 0
      %1651 = vmatprep.subr.bf16.mxu0 0
      %1652 = vmatpush2.bf16.msra.mxu0 %v1349
      %1653 = vmatprep.subr.bf16.mxu0 0
      %1654 = vmatpush2.bf16.msra.mxu0 %v1346
      %1655 = vmatprep.subr.bf16.mxu0 0
      %1656 = vmatpush2.bf16.msra.mxu0 %v1343
      %1657 = vmatprep.subr.bf16.mxu0 0
      %1658 = vmatpush2.bf16.msra.mxu0 %v1340
      %1659 = vmatprep.mubr.bf16.mxu0 %v1387
      %1660 = vmatmul.mubr.bf16.gmra.mxu0 %v1146
      %v1661 = vpop.f32.mrf.mxu0
      %v1662 = vadd.f32 %v924, %v1661
      %v1663 = vpop.f32.mrf.mxu0
      %v1664 = vpop.f32.mrf.mxu0
      %v1665 = vadd.f32 %v927, %v1664
      %v1666 = vpop.f32.mrf.mxu0
      %1667 = vmatprep.mubr.bf16.mxu0 %v1390
      %1668 = vmatmul.mubr.bf16.gmra.mxu0 %v1148
      %v1669 = vpop.f32.mrf.mxu0
      %v1670 = vadd.f32 %v932, %v1669
      %v1671 = vpop.f32.mrf.mxu0
      %v1672 = vpop.f32.mrf.mxu0
      %v1673 = vadd.f32 %v935, %v1672
      %v1674 = vpop.f32.mrf.mxu0
      %1675 = vmatprep.mubr.bf16.mxu0 %v1393
      %1676 = vmatmul.mubr.bf16.gmra.mxu0 %v1150
      %v1677 = vpop.f32.mrf.mxu0
      %v1678 = vadd.f32 %v940, %v1677
      %v1679 = vpop.f32.mrf.mxu0
      %v1680 = vpop.f32.mrf.mxu0
      %v1681 = vadd.f32 %v943, %v1680
      %v1682 = vpop.f32.mrf.mxu0
      %1683 = vmatprep.mubr.bf16.mxu0 %v1396
      %1684 = vmatmul.mubr.bf16.gmra.mxu0 %v1152
      %v1685 = vpop.f32.mrf.mxu0
      %v1686 = vadd.f32 %v948, %v1685
      %v1687 = vpop.f32.mrf.mxu0
      %v1688 = vpop.f32.mrf.mxu0
      %v1689 = vadd.f32 %v951, %v1688
      %v1690 = vpop.f32.mrf.mxu0
      %1691 = vmatprep.mubr.bf16.mxu0 %v1399
      %1692 = vmatmul.mubr.bf16.gmra.mxu0 %v1154
      %v1693 = vpop.f32.mrf.mxu0
      %v1694 = vadd.f32 %v956, %v1693
      %v1695 = vpop.f32.mrf.mxu0
      %v1696 = vpop.f32.mrf.mxu0
      %v1697 = vadd.f32 %v959, %v1696
      %v1698 = vpop.f32.mrf.mxu0
      %1699 = vmatprep.mubr.bf16.mxu0 %v1402
      %1700 = vmatmul.mubr.bf16.gmra.mxu0 %v1156
      %v1701 = vpop.f32.mrf.mxu0
      %v1702 = vadd.f32 %v964, %v1701
      %v1703 = vpop.f32.mrf.mxu0
      %v1704 = vpop.f32.mrf.mxu0
      %v1705 = vadd.f32 %v967, %v1704
      %v1706 = vpop.f32.mrf.mxu0
      %1707 = vmatprep.mubr.bf16.mxu0 %v1405
      %1708 = vmatmul.mubr.bf16.gmra.mxu0 %v1158
      %v1709 = vpop.f32.mrf.mxu0
      %v1710 = vadd.f32 %v972, %v1709
      %v1711 = vpop.f32.mrf.mxu0
      %v1712 = vpop.f32.mrf.mxu0
      %v1713 = vadd.f32 %v975, %v1712
      %v1714 = vpop.f32.mrf.mxu0
      %1715 = vmatprep.mubr.bf16.mxu0 %v1408
      %1716 = vmatmul.mubr.bf16.gmra.mxu0 %v1160
      %v1717 = vpop.f32.mrf.mxu0
      %v1718 = vadd.f32 %v980, %v1717
      %v1719 = vpop.f32.mrf.mxu0
      %v1720 = vpop.f32.mrf.mxu0
      %v1721 = vadd.f32 %v983, %v1720
      %v1722 = vpop.f32.mrf.mxu0
      %1723 = vmatprep.mubr.bf16.mxu0 %v1411
      %1724 = vmatmul.mubr.bf16.gmra.mxu0 %v1162
      %v1725 = vpop.f32.mrf.mxu0
      %v1726 = vadd.f32 %v988, %v1725
      %v1727 = vpop.f32.mrf.mxu0
      %v1728 = vpop.f32.mrf.mxu0
      %v1729 = vadd.f32 %v991, %v1728
      %v1730 = vpop.f32.mrf.mxu0
      %1731 = vmatprep.mubr.bf16.mxu0 %v1414
      %1732 = vmatmul.mubr.bf16.gmra.mxu0 %v1164
      %v1733 = vpop.f32.mrf.mxu0
      %v1734 = vadd.f32 %v996, %v1733
      %v1735 = vpop.f32.mrf.mxu0
      %v1736 = vpop.f32.mrf.mxu0
      %v1737 = vadd.f32 %v999, %v1736
      %v1738 = vpop.f32.mrf.mxu0
      %1739 = vmatprep.mubr.bf16.mxu0 %v1417
      %1740 = vmatmul.mubr.bf16.gmra.mxu0 %v1166
      %v1741 = vpop.f32.mrf.mxu0
      %v1742 = vadd.f32 %v1004, %v1741
      %v1743 = vpop.f32.mrf.mxu0
      %v1744 = vpop.f32.mrf.mxu0
      %v1745 = vadd.f32 %v1007, %v1744
      %v1746 = vpop.f32.mrf.mxu0
      %1747 = vmatprep.mubr.bf16.mxu0 %v1420
      %1748 = vmatmul.mubr.bf16.gmra.mxu0 %v1168
      %v1749 = vpop.f32.mrf.mxu0
      %v1750 = vadd.f32 %v1012, %v1749
      %v1751 = vpop.f32.mrf.mxu0
      %v1752 = vpop.f32.mrf.mxu0
      %v1753 = vadd.f32 %v1015, %v1752
      %v1754 = vpop.f32.mrf.mxu0
      %1755 = vmatprep.mubr.bf16.mxu0 %v1423
      %1756 = vmatmul.mubr.bf16.gmra.mxu0 %v1170
      %v1757 = vpop.f32.mrf.mxu0
      %v1758 = vadd.f32 %v1020, %v1757
      %v1759 = vpop.f32.mrf.mxu0
      %v1760 = vpop.f32.mrf.mxu0
      %v1761 = vadd.f32 %v1023, %v1760
      %v1762 = vpop.f32.mrf.mxu0
      %1763 = vmatprep.mubr.bf16.mxu0 %v1426
      %1764 = vmatmul.mubr.bf16.gmra.mxu0 %v1172
      %v1765 = vpop.f32.mrf.mxu0
      %v1766 = vadd.f32 %v1028, %v1765
      %v1767 = vpop.f32.mrf.mxu0
      %v1768 = vpop.f32.mrf.mxu0
      %v1769 = vadd.f32 %v1031, %v1768
      %v1770 = vpop.f32.mrf.mxu0
      %1771 = vmatprep.mubr.bf16.mxu0 %v1429
      %1772 = vmatmul.mubr.bf16.gmra.mxu0 %v1174
      %v1773 = vpop.f32.mrf.mxu0
      %v1774 = vadd.f32 %v1036, %v1773
      %v1775 = vpop.f32.mrf.mxu0
      %v1776 = vpop.f32.mrf.mxu0
      %v1777 = vadd.f32 %v1039, %v1776
      %v1778 = vpop.f32.mrf.mxu0
      %1779 = vmatprep.mubr.bf16.mxu0 %v1432
      %1780 = vmatmul.mubr.bf16.gmra.mxu0 %v1176
      %v1781 = vpop.f32.mrf.mxu0
      %v1782 = vadd.f32 %v1044, %v1781
      %v1783 = vpop.f32.mrf.mxu0
      %v1784 = vpop.f32.mrf.mxu0
      %v1785 = vadd.f32 %v1047, %v1784
      %v1786 = vpop.f32.mrf.mxu0
      %1787 = vdwg.mxu0
      %s1788 = scalar_lea.vmem %s142, 16
      %v1789 = vld [vmem:[%s1788] sm:$0xff]
      %v1790 = vld [vmem:[%s1788 + $0x8] sm:$0xff]
      %v1791 = vld [vmem:[%s1788 + $0x10] sm:$0xff]
      %v1792 = vld [vmem:[%s1788 + $0x18] sm:$0xff]
      %v1793 = vld [vmem:[%s1788 + $0x20] sm:$0xff]
      %v1794 = vld [vmem:[%s1788 + $0x28] sm:$0xff]
      %v1795 = vld [vmem:[%s1788 + $0x30] sm:$0xff]
      %v1796 = vld [vmem:[%s1788 + $0x38] sm:$0xff]
      %v1797 = vld [vmem:[%s1788 + $0x50] sm:$0xff]
      %v1798 = vld [vmem:[%s1788 + $0x58] sm:$0xff]
      %v1799 = vld [vmem:[%s1788 + $0x60] sm:$0xff]
      %v1800 = vld [vmem:[%s1788 + $0x68] sm:$0xff]
      %v1801 = vld [vmem:[%s1788 + $0x70] sm:$0xff]
      %v1802 = vld [vmem:[%s1788 + $0x78] sm:$0xff]
      %v1803 = vld [vmem:[%s1788 + $0x80] sm:$0xff]
      %v1804 = vld [vmem:[%s1788 + $0x88] sm:$0xff]
      %v1805 = vld [vmem:[%s1788 + $0xa0] sm:$0xff]
      %v1806 = vld [vmem:[%s1788 + $0xa8] sm:$0xff]
      %v1807 = vld [vmem:[%s1788 + $0xb0] sm:$0xff]
      %v1808 = vld [vmem:[%s1788 + $0xb8] sm:$0xff]
      %v1809 = vld [vmem:[%s1788 + $0xc0] sm:$0xff]
      %v1810 = vld [vmem:[%s1788 + $0xc8] sm:$0xff]
      %v1811 = vld [vmem:[%s1788 + $0xd0] sm:$0xff]
      %v1812 = vld [vmem:[%s1788 + $0xd8] sm:$0xff]
      %v1813 = vld [vmem:[%s1788 + $0xf0] sm:$0xff]
      %v1814 = vld [vmem:[%s1788 + $0xf8] sm:$0xff]
      %v1815 = vld [vmem:[%s1788 + $0x100] sm:$0xff]
      %v1816 = vld [vmem:[%s1788 + $0x108] sm:$0xff]
      %v1817 = vld [vmem:[%s1788 + $0x110] sm:$0xff]
      %v1818 = vld [vmem:[%s1788 + $0x118] sm:$0xff]
      %v1819 = vld [vmem:[%s1788 + $0x120] sm:$0xff]
      %v1820 = vld [vmem:[%s1788 + $0x128] sm:$0xff]
      %v1821 = vld [vmem:[%s1 + $0x240] sm:$0xff]
      %v1822 = vld [vmem:[%s1 + $0x248] sm:$0xf]
      %v1823 = vld [vmem:[%s1 + $0x24c] sm:$0xff]
      %v1824 = vld [vmem:[%s1 + $0x254] sm:$0xf]
      %v1825 = vld [vmem:[%s1 + $0x258] sm:$0xff]
      %v1826 = vld [vmem:[%s1 + $0x260] sm:$0xf]
      %v1827 = vld [vmem:[%s1 + $0x264] sm:$0xff]
      %v1828 = vld [vmem:[%s1 + $0x26c] sm:$0xf]
      %v1829 = vld [vmem:[%s1 + $0x270] sm:$0xff]
      %v1830 = vld [vmem:[%s1 + $0x278] sm:$0xf]
      %v1831 = vld [vmem:[%s1 + $0x27c] sm:$0xff]
      %v1832 = vld [vmem:[%s1 + $0x284] sm:$0xf]
      %v1833 = vld [vmem:[%s1 + $0x288] sm:$0xff]
      %v1834 = vld [vmem:[%s1 + $0x290] sm:$0xf]
      %v1835 = vld [vmem:[%s1 + $0x294] sm:$0xff]
      %v1836 = vld [vmem:[%s1 + $0x29c] sm:$0xf]
      %v1837 = vld [vmem:[%s1 + $0x2a0] sm:$0xff]
      %v1838 = vld [vmem:[%s1 + $0x2a8] sm:$0xf]
      %v1839 = vld [vmem:[%s1 + $0x2ac] sm:$0xff]
      %v1840 = vld [vmem:[%s1 + $0x2b4] sm:$0xf]
      %v1841 = vld [vmem:[%s1 + $0x2b8] sm:$0xff]
      %v1842 = vld [vmem:[%s1 + $0x2c0] sm:$0xf]
      %v1843 = vld [vmem:[%s1 + $0x2c4] sm:$0xff]
      %v1844 = vld [vmem:[%s1 + $0x2cc] sm:$0xf]
      %v1845 = vld [vmem:[%s1 + $0x2d0] sm:$0xff]
      %v1846 = vld [vmem:[%s1 + $0x2d8] sm:$0xf]
      %v1847 = vld [vmem:[%s1 + $0x2dc] sm:$0xff]
      %v1848 = vld [vmem:[%s1 + $0x2e4] sm:$0xf]
      %v1849 = vld [vmem:[%s1 + $0x2e8] sm:$0xff]
      %v1850 = vld [vmem:[%s1 + $0x2f0] sm:$0xf]
      %v1851 = vld [vmem:[%s1 + $0x2f4] sm:$0xff]
      %v1852 = vld [vmem:[%s1 + $0x2fc] sm:$0xf]
      %v1853 = vld [vmem:[%s1 + $0x300] sm:$0xff]
      %v1854 = vld [vmem:[%s1 + $0x308] sm:$0xf]
      %v1855 = vld [vmem:[%s1 + $0x30c] sm:$0xff]
      %v1856 = vld [vmem:[%s1 + $0x314] sm:$0xf]
      %v1857 = vld [vmem:[%s1 + $0x318] sm:$0xff]
      %v1858 = vld [vmem:[%s1 + $0x320] sm:$0xf]
      %v1859 = vld [vmem:[%s1 + $0x324] sm:$0xff]
      %v1860 = vld [vmem:[%s1 + $0x32c] sm:$0xf]
      %v1861 = vld [vmem:[%s1 + $0x330] sm:$0xff]
      %v1862 = vld [vmem:[%s1 + $0x338] sm:$0xf]
      %v1863 = vld [vmem:[%s1 + $0x33c] sm:$0xff]
      %v1864 = vld [vmem:[%s1 + $0x344] sm:$0xf]
      %v1865 = vld [vmem:[%s1 + $0x348] sm:$0xff]
      %v1866 = vld [vmem:[%s1 + $0x350] sm:$0xf]
      %v1867 = vld [vmem:[%s1 + $0x354] sm:$0xff]
      %v1868 = vld [vmem:[%s1 + $0x35c] sm:$0xf]
      %v1901 = vunpack.c.l.b16 %v1789
      %v1902 = vunpack.c.h.b16 %v1789
      %v1903 = vunpack.c.l.b16 %v1790
      %v1904 = vunpack.c.h.b16 %v1790
      %v1905 = vunpack.c.l.b16 %v1791
      %v1906 = vunpack.c.h.b16 %v1791
      %v1907 = vunpack.c.l.b16 %v1792
      %v1908 = vunpack.c.h.b16 %v1792
      %v1909 = vunpack.c.l.b16 %v1793
      %v1910 = vunpack.c.h.b16 %v1793
      %v1911 = vunpack.c.l.b16 %v1794
      %v1912 = vunpack.c.h.b16 %v1794
      %v1913 = vunpack.c.l.b16 %v1795
      %v1914 = vunpack.c.h.b16 %v1795
      %v1915 = vunpack.c.l.b16 %v1796
      %v1916 = vunpack.c.h.b16 %v1796
      %v1917 = vunpack.c.l.b16 %v1797
      %v1918 = vunpack.c.h.b16 %v1797
      %v1919 = vunpack.c.l.b16 %v1798
      %v1920 = vunpack.c.h.b16 %v1798
      %v1921 = vunpack.c.l.b16 %v1799
      %v1922 = vunpack.c.h.b16 %v1799
      %v1923 = vunpack.c.l.b16 %v1800
      %v1924 = vunpack.c.h.b16 %v1800
      %v1925 = vunpack.c.l.b16 %v1801
      %v1926 = vunpack.c.h.b16 %v1801
      %v1927 = vunpack.c.l.b16 %v1802
      %v1928 = vunpack.c.h.b16 %v1802
      %v1929 = vunpack.c.l.b16 %v1803
      %v1930 = vunpack.c.h.b16 %v1803
      %v1931 = vunpack.c.l.b16 %v1804
      %v1932 = vunpack.c.h.b16 %v1804
      %v1933 = vunpack.c.l.b16 %v1805
      %v1934 = vunpack.c.h.b16 %v1805
      %v1935 = vunpack.c.l.b16 %v1806
      %v1936 = vunpack.c.h.b16 %v1806
      %v1937 = vunpack.c.l.b16 %v1807
      %v1938 = vunpack.c.h.b16 %v1807
      %v1939 = vunpack.c.l.b16 %v1808
      %v1940 = vunpack.c.h.b16 %v1808
      %v1941 = vunpack.c.l.b16 %v1809
      %v1942 = vunpack.c.h.b16 %v1809
      %v1943 = vunpack.c.l.b16 %v1810
      %v1944 = vunpack.c.h.b16 %v1810
      %v1945 = vunpack.c.l.b16 %v1811
      %v1946 = vunpack.c.h.b16 %v1811
      %v1947 = vunpack.c.l.b16 %v1812
      %v1948 = vunpack.c.h.b16 %v1812
      %v1949 = vunpack.c.l.b16 %v1813
      %v1950 = vunpack.c.h.b16 %v1813
      %v1951 = vunpack.c.l.b16 %v1814
      %v1952 = vunpack.c.h.b16 %v1814
      %v1953 = vunpack.c.l.b16 %v1815
      %v1954 = vunpack.c.h.b16 %v1815
      %v1955 = vunpack.c.l.b16 %v1816
      %v1956 = vunpack.c.h.b16 %v1816
      %v1957 = vunpack.c.l.b16 %v1817
      %v1958 = vunpack.c.h.b16 %v1817
      %v1959 = vunpack.c.l.b16 %v1818
      %v1960 = vunpack.c.h.b16 %v1818
      %v1961 = vunpack.c.l.b16 %v1819
      %v1962 = vunpack.c.h.b16 %v1819
      %v1963 = vunpack.c.l.b16 %v1820
      %v1964 = vunpack.c.h.b16 %v1820
      %v1965 = vpack.c.b16 %v1903, %v1901
      %v1966 = vpack.c.b16 %v1904, %v1902
      %v1967 = vpack.c.b16 %v1907, %v1905
      %v1968 = vpack.c.b16 %v1908, %v1906
      %v1969 = vpack.c.b16 %v1911, %v1909
      %v1970 = vpack.c.b16 %v1912, %v1910
      %v1971 = vpack.c.b16 %v1915, %v1913
      %v1972 = vpack.c.b16 %v1916, %v1914
      %v1973 = vpack.c.b16 %v1919, %v1917
      %v1974 = vpack.c.b16 %v1920, %v1918
      %v1975 = vpack.c.b16 %v1923, %v1921
      %v1976 = vpack.c.b16 %v1924, %v1922
      %v1977 = vpack.c.b16 %v1927, %v1925
      %v1978 = vpack.c.b16 %v1928, %v1926
      %v1979 = vpack.c.b16 %v1931, %v1929
      %v1980 = vpack.c.b16 %v1932, %v1930
      %v1981 = vpack.c.b16 %v1935, %v1933
      %v1982 = vpack.c.b16 %v1936, %v1934
      %v1983 = vpack.c.b16 %v1939, %v1937
      %v1984 = vpack.c.b16 %v1940, %v1938
      %v1985 = vpack.c.b16 %v1943, %v1941
      %v1986 = vpack.c.b16 %v1944, %v1942
      %v1987 = vpack.c.b16 %v1947, %v1945
      %v1988 = vpack.c.b16 %v1948, %v1946
      %v1989 = vpack.c.b16 %v1951, %v1949
      %v1990 = vpack.c.b16 %v1952, %v1950
      %v1991 = vpack.c.b16 %v1955, %v1953
      %v1992 = vpack.c.b16 %v1956, %v1954
      %v1993 = vpack.c.b16 %v1959, %v1957
      %v1994 = vpack.c.b16 %v1960, %v1958
      %v1995 = vpack.c.b16 %v1963, %v1961
      %v1996 = vpack.c.b16 %v1964, %v1962
      %v2061 = vunpack.c.l.b16 %v1821
      %v2062 = vunpack.c.h.b16 %v1821
      %v2063 = vunpack.c.l.b16 %v1822
      %v2064 = vunpack.c.l.b16 %v1823
      %v2065 = vunpack.c.h.b16 %v1823
      %v2066 = vunpack.c.l.b16 %v1824
      %v2067 = vunpack.c.l.b16 %v1825
      %v2068 = vunpack.c.h.b16 %v1825
      %v2069 = vunpack.c.l.b16 %v1826
      %v2070 = vunpack.c.l.b16 %v1827
      %v2071 = vunpack.c.h.b16 %v1827
      %v2072 = vunpack.c.l.b16 %v1828
      %v2073 = vunpack.c.l.b16 %v1829
      %v2074 = vunpack.c.h.b16 %v1829
      %v2075 = vunpack.c.l.b16 %v1830
      %v2076 = vunpack.c.l.b16 %v1831
      %v2077 = vunpack.c.h.b16 %v1831
      %v2078 = vunpack.c.l.b16 %v1832
      %v2079 = vunpack.c.l.b16 %v1833
      %v2080 = vunpack.c.h.b16 %v1833
      %v2081 = vunpack.c.l.b16 %v1834
      %v2082 = vunpack.c.l.b16 %v1835
      %v2083 = vunpack.c.h.b16 %v1835
      %v2084 = vunpack.c.l.b16 %v1836
      %v2085 = vunpack.c.l.b16 %v1837
      %v2086 = vunpack.c.h.b16 %v1837
      %v2087 = vunpack.c.l.b16 %v1838
      %v2088 = vunpack.c.l.b16 %v1839
      %v2089 = vunpack.c.h.b16 %v1839
      %v2090 = vunpack.c.l.b16 %v1840
      %v2091 = vunpack.c.l.b16 %v1841
      %v2092 = vunpack.c.h.b16 %v1841
      %v2093 = vunpack.c.l.b16 %v1842
      %v2094 = vunpack.c.l.b16 %v1843
      %v2095 = vunpack.c.h.b16 %v1843
      %v2096 = vunpack.c.l.b16 %v1844
      %v2097 = vunpack.c.l.b16 %v1845
      %v2098 = vunpack.c.h.b16 %v1845
      %v2099 = vunpack.c.l.b16 %v1846
      %v2100 = vunpack.c.l.b16 %v1847
      %v2101 = vunpack.c.h.b16 %v1847
      %v2102 = vunpack.c.l.b16 %v1848
      %v2103 = vunpack.c.l.b16 %v1849
      %v2104 = vunpack.c.h.b16 %v1849
      %v2105 = vunpack.c.l.b16 %v1850
      %v2106 = vunpack.c.l.b16 %v1851
      %v2107 = vunpack.c.h.b16 %v1851
      %v2108 = vunpack.c.l.b16 %v1852
      %v2109 = vunpack.c.l.b16 %v1853
      %v2110 = vunpack.c.h.b16 %v1853
      %v2111 = vunpack.c.l.b16 %v1854
      %v2112 = vunpack.c.l.b16 %v1855
      %v2113 = vunpack.c.h.b16 %v1855
      %v2114 = vunpack.c.l.b16 %v1856
      %v2115 = vunpack.c.l.b16 %v1857
      %v2116 = vunpack.c.h.b16 %v1857
      %v2117 = vunpack.c.l.b16 %v1858
      %v2118 = vunpack.c.l.b16 %v1859
      %v2119 = vunpack.c.h.b16 %v1859
      %v2120 = vunpack.c.l.b16 %v1860
      %v2121 = vunpack.c.l.b16 %v1861
      %v2122 = vunpack.c.h.b16 %v1861
      %v2123 = vunpack.c.l.b16 %v1862
      %v2124 = vunpack.c.l.b16 %v1863
      %v2125 = vunpack.c.h.b16 %v1863
      %v2126 = vunpack.c.l.b16 %v1864
      %v2127 = vunpack.c.l.b16 %v1865
      %v2128 = vunpack.c.h.b16 %v1865
      %v2129 = vunpack.c.l.b16 %v1866
      %v2130 = vunpack.c.l.b16 %v1867
      %v2131 = vunpack.c.h.b16 %v1867
      %v2132 = vunpack.c.l.b16 %v1868
      %v2133 = vpack.c.b16 %v2064, %v2061
      %v2134 = vpack.c.b16 %v2065, %v2062
      %v2135 = vpack.c.b16 %v2066, %v2063
      %v2136 = vpack.c.b16 %v2070, %v2067
      %v2137 = vpack.c.b16 %v2071, %v2068
      %v2138 = vpack.c.b16 %v2072, %v2069
      %v2139 = vpack.c.b16 %v2076, %v2073
      %v2140 = vpack.c.b16 %v2077, %v2074
      %v2141 = vpack.c.b16 %v2078, %v2075
      %v2142 = vpack.c.b16 %v2082, %v2079
      %v2143 = vpack.c.b16 %v2083, %v2080
      %v2144 = vpack.c.b16 %v2084, %v2081
      %v2145 = vpack.c.b16 %v2088, %v2085
      %v2146 = vpack.c.b16 %v2089, %v2086
      %v2147 = vpack.c.b16 %v2090, %v2087
      %v2148 = vpack.c.b16 %v2094, %v2091
      %v2149 = vpack.c.b16 %v2095, %v2092
      %v2150 = vpack.c.b16 %v2096, %v2093
      %v2151 = vpack.c.b16 %v2100, %v2097
      %v2152 = vpack.c.b16 %v2101, %v2098
      %v2153 = vpack.c.b16 %v2102, %v2099
      %v2154 = vpack.c.b16 %v2106, %v2103
      %v2155 = vpack.c.b16 %v2107, %v2104
      %v2156 = vpack.c.b16 %v2108, %v2105
      %v2157 = vpack.c.b16 %v2112, %v2109
      %v2158 = vpack.c.b16 %v2113, %v2110
      %v2159 = vpack.c.b16 %v2114, %v2111
      %v2160 = vpack.c.b16 %v2118, %v2115
      %v2161 = vpack.c.b16 %v2119, %v2116
      %v2162 = vpack.c.b16 %v2120, %v2117
      %v2163 = vpack.c.b16 %v2124, %v2121
      %v2164 = vpack.c.b16 %v2125, %v2122
      %v2165 = vpack.c.b16 %v2126, %v2123
      %v2166 = vpack.c.b16 %v2130, %v2127
      %v2167 = vpack.c.b16 %v2131, %v2128
      %v2168 = vpack.c.b16 %v2132, %v2129
      %v2206 = vsel %vm647, %v1966, 0
      %v2209 = vsel %vm647, %v1968, 0
      %v2212 = vsel %vm647, %v1970, 0
      %v2215 = vsel %vm647, %v1972, 0
      %v2218 = vsel %vm647, %v1974, 0
      %v2221 = vsel %vm647, %v1976, 0
      %v2224 = vsel %vm647, %v1978, 0
      %v2227 = vsel %vm647, %v1980, 0
      %v2230 = vsel %vm647, %v1982, 0
      %v2233 = vsel %vm647, %v1984, 0
      %v2236 = vsel %vm647, %v1986, 0
      %v2239 = vsel %vm647, %v1988, 0
      %v2242 = vsel %vm647, %v1990, 0
      %v2245 = vsel %vm647, %v1992, 0
      %v2248 = vsel %vm647, %v1994, 0
      %v2251 = vsel %vm647, %v1996, 0
      %2253 = vmatprep.subr.bf16.mxu0 %v2155
      %2254 = vmatpush1.bf16.msra.mxu0 %v2154
      %2255 = vmatprep.subr.bf16.mxu0 %v2152
      %2256 = vmatpush1.bf16.msra.mxu0 %v2151
      %2257 = vmatprep.subr.bf16.mxu0 %v2149
      %2258 = vmatpush1.bf16.msra.mxu0 %v2148
      %2259 = vmatprep.subr.bf16.mxu0 %v2146
      %2260 = vmatpush1.bf16.msra.mxu0 %v2145
      %2261 = vmatprep.subr.bf16.mxu0 %v2143
      %2262 = vmatpush1.bf16.msra.mxu0 %v2142
      %2263 = vmatprep.subr.bf16.mxu0 %v2140
      %2264 = vmatpush1.bf16.msra.mxu0 %v2139
      %2265 = vmatprep.subr.bf16.mxu0 %v2137
      %2266 = vmatpush1.bf16.msra.mxu0 %v2136
      %2267 = vmatprep.subr.bf16.mxu0 %v2134
      %2268 = vmatpush1.bf16.msra.mxu0 %v2133
      %2269 = vmatprep.subr.bf16.mxu0 0
      %2270 = vmatpush2.bf16.msra.mxu0 0
      %2271 = vmatprep.subr.bf16.mxu0 0
      %2272 = vmatpush2.bf16.msra.mxu0 0
      %2273 = vmatprep.subr.bf16.mxu0 0
      %2274 = vmatpush2.bf16.msra.mxu0 0
      %2275 = vmatprep.subr.bf16.mxu0 0
      %2276 = vmatpush2.bf16.msra.mxu0 0
      %2277 = vmatprep.subr.bf16.mxu0 %v2167
      %2278 = vmatpush2.bf16.msra.mxu0 %v2166
      %2279 = vmatprep.subr.bf16.mxu0 %v2164
      %2280 = vmatpush2.bf16.msra.mxu0 %v2163
      %2281 = vmatprep.subr.bf16.mxu0 %v2161
      %2282 = vmatpush2.bf16.msra.mxu0 %v2160
      %2283 = vmatprep.subr.bf16.mxu0 %v2158
      %2284 = vmatpush2.bf16.msra.mxu0 %v2157
      %2285 = vmatprep.mubr.bf16.mxu0 %v2206
      %2286 = vmatmul.mubr.bf16.gmra.mxu0 %v1965
      %v2287 = vpop.f32.mrf.mxu0
      %v2288 = vadd.f32 0.0, %v2287
      %v2289 = vpop.f32.mrf.mxu0
      %v2290 = vadd.f32 0.0, %v2289
      %v2291 = vpop.f32.mrf.mxu0
      %v2292 = vadd.f32 0.0, %v2291
      %v2293 = vpop.f32.mrf.mxu0
      %v2294 = vadd.f32 0.0, %v2293
      %2295 = vmatprep.mubr.bf16.mxu0 %v2209
      %2296 = vmatmul.mubr.bf16.gmra.mxu0 %v1967
      %v2297 = vpop.f32.mrf.mxu0
      %v2298 = vadd.f32 0.0, %v2297
      %v2299 = vpop.f32.mrf.mxu0
      %v2300 = vadd.f32 0.0, %v2299
      %v2301 = vpop.f32.mrf.mxu0
      %v2302 = vadd.f32 0.0, %v2301
      %v2303 = vpop.f32.mrf.mxu0
      %v2304 = vadd.f32 0.0, %v2303
      %2305 = vmatprep.mubr.bf16.mxu0 %v2212
      %2306 = vmatmul.mubr.bf16.gmra.mxu0 %v1969
      %v2307 = vpop.f32.mrf.mxu0
      %v2308 = vadd.f32 0.0, %v2307
      %v2309 = vpop.f32.mrf.mxu0
      %v2310 = vadd.f32 0.0, %v2309
      %v2311 = vpop.f32.mrf.mxu0
      %v2312 = vadd.f32 0.0, %v2311
      %v2313 = vpop.f32.mrf.mxu0
      %v2314 = vadd.f32 0.0, %v2313
      %2315 = vmatprep.mubr.bf16.mxu0 %v2215
      %2316 = vmatmul.mubr.bf16.gmra.mxu0 %v1971
      %v2317 = vpop.f32.mrf.mxu0
      %v2318 = vadd.f32 0.0, %v2317
      %v2319 = vpop.f32.mrf.mxu0
      %v2320 = vadd.f32 0.0, %v2319
      %v2321 = vpop.f32.mrf.mxu0
      %v2322 = vadd.f32 0.0, %v2321
      %v2323 = vpop.f32.mrf.mxu0
      %v2324 = vadd.f32 0.0, %v2323
      %2325 = vmatprep.mubr.bf16.mxu0 %v2218
      %2326 = vmatmul.mubr.bf16.gmra.mxu0 %v1973
      %v2327 = vpop.f32.mrf.mxu0
      %v2328 = vadd.f32 0.0, %v2327
      %v2329 = vpop.f32.mrf.mxu0
      %v2330 = vadd.f32 0.0, %v2329
      %v2331 = vpop.f32.mrf.mxu0
      %v2332 = vadd.f32 0.0, %v2331
      %v2333 = vpop.f32.mrf.mxu0
      %v2334 = vadd.f32 0.0, %v2333
      %2335 = vmatprep.mubr.bf16.mxu0 %v2221
      %2336 = vmatmul.mubr.bf16.gmra.mxu0 %v1975
      %v2337 = vpop.f32.mrf.mxu0
      %v2338 = vadd.f32 0.0, %v2337
      %v2339 = vpop.f32.mrf.mxu0
      %v2340 = vadd.f32 0.0, %v2339
      %v2341 = vpop.f32.mrf.mxu0
      %v2342 = vadd.f32 0.0, %v2341
      %v2343 = vpop.f32.mrf.mxu0
      %v2344 = vadd.f32 0.0, %v2343
      %2345 = vmatprep.mubr.bf16.mxu0 %v2224
      %2346 = vmatmul.mubr.bf16.gmra.mxu0 %v1977
      %v2347 = vpop.f32.mrf.mxu0
      %v2348 = vadd.f32 0.0, %v2347
      %v2349 = vpop.f32.mrf.mxu0
      %v2350 = vadd.f32 0.0, %v2349
      %v2351 = vpop.f32.mrf.mxu0
      %v2352 = vadd.f32 0.0, %v2351
      %v2353 = vpop.f32.mrf.mxu0
      %v2354 = vadd.f32 0.0, %v2353
      %2355 = vmatprep.mubr.bf16.mxu0 %v2227
      %2356 = vmatmul.mubr.bf16.gmra.mxu0 %v1979
      %v2357 = vpop.f32.mrf.mxu0
      %v2358 = vadd.f32 0.0, %v2357
      %v2359 = vpop.f32.mrf.mxu0
      %v2360 = vadd.f32 0.0, %v2359
      %v2361 = vpop.f32.mrf.mxu0
      %v2362 = vadd.f32 0.0, %v2361
      %v2363 = vpop.f32.mrf.mxu0
      %v2364 = vadd.f32 0.0, %v2363
      %2365 = vmatprep.mubr.bf16.mxu0 %v2230
      %2366 = vmatmul.mubr.bf16.gmra.mxu0 %v1981
      %v2367 = vpop.f32.mrf.mxu0
      %v2368 = vadd.f32 0.0, %v2367
      %v2369 = vpop.f32.mrf.mxu0
      %v2370 = vadd.f32 0.0, %v2369
      %v2371 = vpop.f32.mrf.mxu0
      %v2372 = vadd.f32 0.0, %v2371
      %v2373 = vpop.f32.mrf.mxu0
      %v2374 = vadd.f32 0.0, %v2373
      %2375 = vmatprep.mubr.bf16.mxu0 %v2233
      %2376 = vmatmul.mubr.bf16.gmra.mxu0 %v1983
      %v2377 = vpop.f32.mrf.mxu0
      %v2378 = vadd.f32 0.0, %v2377
      %v2379 = vpop.f32.mrf.mxu0
      %v2380 = vadd.f32 0.0, %v2379
      %v2381 = vpop.f32.mrf.mxu0
      %v2382 = vadd.f32 0.0, %v2381
      %v2383 = vpop.f32.mrf.mxu0
      %v2384 = vadd.f32 0.0, %v2383
      %2385 = vmatprep.mubr.bf16.mxu0 %v2236
      %2386 = vmatmul.mubr.bf16.gmra.mxu0 %v1985
      %v2387 = vpop.f32.mrf.mxu0
      %v2388 = vadd.f32 0.0, %v2387
      %v2389 = vpop.f32.mrf.mxu0
      %v2390 = vadd.f32 0.0, %v2389
      %v2391 = vpop.f32.mrf.mxu0
      %v2392 = vadd.f32 0.0, %v2391
      %v2393 = vpop.f32.mrf.mxu0
      %v2394 = vadd.f32 0.0, %v2393
      %2395 = vmatprep.mubr.bf16.mxu0 %v2239
      %2396 = vmatmul.mubr.bf16.gmra.mxu0 %v1987
      %v2397 = vpop.f32.mrf.mxu0
      %v2398 = vadd.f32 0.0, %v2397
      %v2399 = vpop.f32.mrf.mxu0
      %v2400 = vadd.f32 0.0, %v2399
      %v2401 = vpop.f32.mrf.mxu0
      %v2402 = vadd.f32 0.0, %v2401
      %v2403 = vpop.f32.mrf.mxu0
      %v2404 = vadd.f32 0.0, %v2403
      %2405 = vmatprep.mubr.bf16.mxu0 %v2242
      %2406 = vmatmul.mubr.bf16.gmra.mxu0 %v1989
      %v2407 = vpop.f32.mrf.mxu0
      %v2408 = vadd.f32 0.0, %v2407
      %v2409 = vpop.f32.mrf.mxu0
      %v2410 = vadd.f32 0.0, %v2409
      %v2411 = vpop.f32.mrf.mxu0
      %v2412 = vadd.f32 0.0, %v2411
      %v2413 = vpop.f32.mrf.mxu0
      %v2414 = vadd.f32 0.0, %v2413
      %2415 = vmatprep.mubr.bf16.mxu0 %v2245
      %2416 = vmatmul.mubr.bf16.gmra.mxu0 %v1991
      %v2417 = vpop.f32.mrf.mxu0
      %v2418 = vadd.f32 0.0, %v2417
      %v2419 = vpop.f32.mrf.mxu0
      %v2420 = vadd.f32 0.0, %v2419
      %v2421 = vpop.f32.mrf.mxu0
      %v2422 = vadd.f32 0.0, %v2421
      %v2423 = vpop.f32.mrf.mxu0
      %v2424 = vadd.f32 0.0, %v2423
      %2425 = vmatprep.mubr.bf16.mxu0 %v2248
      %2426 = vmatmul.mubr.bf16.gmra.mxu0 %v1993
      %v2427 = vpop.f32.mrf.mxu0
      %v2428 = vadd.f32 0.0, %v2427
      %v2429 = vpop.f32.mrf.mxu0
      %v2430 = vadd.f32 0.0, %v2429
      %v2431 = vpop.f32.mrf.mxu0
      %v2432 = vadd.f32 0.0, %v2431
      %v2433 = vpop.f32.mrf.mxu0
      %v2434 = vadd.f32 0.0, %v2433
      %2435 = vmatprep.mubr.bf16.mxu0 %v2251
      %2436 = vmatmul.mubr.bf16.gmra.mxu0 %v1995
      %v2437 = vpop.f32.mrf.mxu0
      %v2438 = vadd.f32 0.0, %v2437
      %v2439 = vpop.f32.mrf.mxu0
      %v2440 = vadd.f32 0.0, %v2439
      %v2441 = vpop.f32.mrf.mxu0
      %v2442 = vadd.f32 0.0, %v2441
      %v2443 = vpop.f32.mrf.mxu0
      %v2444 = vadd.f32 0.0, %v2443
      %2445 = vdwg.mxu0
      %2446 = vmatprep.subr.bf16.mxu0 0
      %2447 = vmatpush1.bf16.msra.mxu0 %v2156
      %2448 = vmatprep.subr.bf16.mxu0 0
      %2449 = vmatpush1.bf16.msra.mxu0 %v2153
      %2450 = vmatprep.subr.bf16.mxu0 0
      %2451 = vmatpush1.bf16.msra.mxu0 %v2150
      %2452 = vmatprep.subr.bf16.mxu0 0
      %2453 = vmatpush1.bf16.msra.mxu0 %v2147
      %2454 = vmatprep.subr.bf16.mxu0 0
      %2455 = vmatpush1.bf16.msra.mxu0 %v2144
      %2456 = vmatprep.subr.bf16.mxu0 0
      %2457 = vmatpush1.bf16.msra.mxu0 %v2141
      %2458 = vmatprep.subr.bf16.mxu0 0
      %2459 = vmatpush1.bf16.msra.mxu0 %v2138
      %2460 = vmatprep.subr.bf16.mxu0 0
      %2461 = vmatpush1.bf16.msra.mxu0 %v2135
      %2462 = vmatprep.subr.bf16.mxu0 0
      %2463 = vmatpush2.bf16.msra.mxu0 0
      %2464 = vmatprep.subr.bf16.mxu0 0
      %2465 = vmatpush2.bf16.msra.mxu0 0
      %2466 = vmatprep.subr.bf16.mxu0 0
      %2467 = vmatpush2.bf16.msra.mxu0 0
      %2468 = vmatprep.subr.bf16.mxu0 0
      %2469 = vmatpush2.bf16.msra.mxu0 0
      %2470 = vmatprep.subr.bf16.mxu0 0
      %2471 = vmatpush2.bf16.msra.mxu0 %v2168
      %2472 = vmatprep.subr.bf16.mxu0 0
      %2473 = vmatpush2.bf16.msra.mxu0 %v2165
      %2474 = vmatprep.subr.bf16.mxu0 0
      %2475 = vmatpush2.bf16.msra.mxu0 %v2162
      %2476 = vmatprep.subr.bf16.mxu0 0
      %2477 = vmatpush2.bf16.msra.mxu0 %v2159
      %2478 = vmatprep.mubr.bf16.mxu0 %v2206
      %2479 = vmatmul.mubr.bf16.gmra.mxu0 %v1965
      %v2480 = vpop.f32.mrf.mxu0
      %v2481 = vadd.f32 0.0, %v2480
      %v2482 = vpop.f32.mrf.mxu0
      %v2483 = vpop.f32.mrf.mxu0
      %v2484 = vadd.f32 0.0, %v2483
      %v2485 = vpop.f32.mrf.mxu0
      %2486 = vmatprep.mubr.bf16.mxu0 %v2209
      %2487 = vmatmul.mubr.bf16.gmra.mxu0 %v1967
      %v2488 = vpop.f32.mrf.mxu0
      %v2489 = vadd.f32 0.0, %v2488
      %v2490 = vpop.f32.mrf.mxu0
      %v2491 = vpop.f32.mrf.mxu0
      %v2492 = vadd.f32 0.0, %v2491
      %v2493 = vpop.f32.mrf.mxu0
      %2494 = vmatprep.mubr.bf16.mxu0 %v2212
      %2495 = vmatmul.mubr.bf16.gmra.mxu0 %v1969
      %v2496 = vpop.f32.mrf.mxu0
      %v2497 = vadd.f32 0.0, %v2496
      %v2498 = vpop.f32.mrf.mxu0
      %v2499 = vpop.f32.mrf.mxu0
      %v2500 = vadd.f32 0.0, %v2499
      %v2501 = vpop.f32.mrf.mxu0
      %2502 = vmatprep.mubr.bf16.mxu0 %v2215
      %2503 = vmatmul.mubr.bf16.gmra.mxu0 %v1971
      %v2504 = vpop.f32.mrf.mxu0
      %v2505 = vadd.f32 0.0, %v2504
      %v2506 = vpop.f32.mrf.mxu0
      %v2507 = vpop.f32.mrf.mxu0
      %v2508 = vadd.f32 0.0, %v2507
      %v2509 = vpop.f32.mrf.mxu0
      %2510 = vmatprep.mubr.bf16.mxu0 %v2218
      %2511 = vmatmul.mubr.bf16.gmra.mxu0 %v1973
      %v2512 = vpop.f32.mrf.mxu0
      %v2513 = vadd.f32 0.0, %v2512
      %v2514 = vpop.f32.mrf.mxu0
      %v2515 = vpop.f32.mrf.mxu0
      %v2516 = vadd.f32 0.0, %v2515
      %v2517 = vpop.f32.mrf.mxu0
      %2518 = vmatprep.mubr.bf16.mxu0 %v2221
      %2519 = vmatmul.mubr.bf16.gmra.mxu0 %v1975
      %v2520 = vpop.f32.mrf.mxu0
      %v2521 = vadd.f32 0.0, %v2520
      %v2522 = vpop.f32.mrf.mxu0
      %v2523 = vpop.f32.mrf.mxu0
      %v2524 = vadd.f32 0.0, %v2523
      %v2525 = vpop.f32.mrf.mxu0
      %2526 = vmatprep.mubr.bf16.mxu0 %v2224
      %2527 = vmatmul.mubr.bf16.gmra.mxu0 %v1977
      %v2528 = vpop.f32.mrf.mxu0
      %v2529 = vadd.f32 0.0, %v2528
      %v2530 = vpop.f32.mrf.mxu0
      %v2531 = vpop.f32.mrf.mxu0
      %v2532 = vadd.f32 0.0, %v2531
      %v2533 = vpop.f32.mrf.mxu0
      %2534 = vmatprep.mubr.bf16.mxu0 %v2227
      %2535 = vmatmul.mubr.bf16.gmra.mxu0 %v1979
      %v2536 = vpop.f32.mrf.mxu0
      %v2537 = vadd.f32 0.0, %v2536
      %v2538 = vpop.f32.mrf.mxu0
      %v2539 = vpop.f32.mrf.mxu0
      %v2540 = vadd.f32 0.0, %v2539
      %v2541 = vpop.f32.mrf.mxu0
      %2542 = vmatprep.mubr.bf16.mxu0 %v2230
      %2543 = vmatmul.mubr.bf16.gmra.mxu0 %v1981
      %v2544 = vpop.f32.mrf.mxu0
      %v2545 = vadd.f32 0.0, %v2544
      %v2546 = vpop.f32.mrf.mxu0
      %v2547 = vpop.f32.mrf.mxu0
      %v2548 = vadd.f32 0.0, %v2547
      %v2549 = vpop.f32.mrf.mxu0
      %2550 = vmatprep.mubr.bf16.mxu0 %v2233
      %2551 = vmatmul.mubr.bf16.gmra.mxu0 %v1983
      %v2552 = vpop.f32.mrf.mxu0
      %v2553 = vadd.f32 0.0, %v2552
      %v2554 = vpop.f32.mrf.mxu0
      %v2555 = vpop.f32.mrf.mxu0
      %v2556 = vadd.f32 0.0, %v2555
      %v2557 = vpop.f32.mrf.mxu0
      %2558 = vmatprep.mubr.bf16.mxu0 %v2236
      %2559 = vmatmul.mubr.bf16.gmra.mxu0 %v1985
      %v2560 = vpop.f32.mrf.mxu0
      %v2561 = vadd.f32 0.0, %v2560
      %v2562 = vpop.f32.mrf.mxu0
      %v2563 = vpop.f32.mrf.mxu0
      %v2564 = vadd.f32 0.0, %v2563
      %v2565 = vpop.f32.mrf.mxu0
      %2566 = vmatprep.mubr.bf16.mxu0 %v2239
      %2567 = vmatmul.mubr.bf16.gmra.mxu0 %v1987
      %v2568 = vpop.f32.mrf.mxu0
      %v2569 = vadd.f32 0.0, %v2568
      %v2570 = vpop.f32.mrf.mxu0
      %v2571 = vpop.f32.mrf.mxu0
      %v2572 = vadd.f32 0.0, %v2571
      %v2573 = vpop.f32.mrf.mxu0
      %2574 = vmatprep.mubr.bf16.mxu0 %v2242
      %2575 = vmatmul.mubr.bf16.gmra.mxu0 %v1989
      %v2576 = vpop.f32.mrf.mxu0
      %v2577 = vadd.f32 0.0, %v2576
      %v2578 = vpop.f32.mrf.mxu0
      %v2579 = vpop.f32.mrf.mxu0
      %v2580 = vadd.f32 0.0, %v2579
      %v2581 = vpop.f32.mrf.mxu0
      %2582 = vmatprep.mubr.bf16.mxu0 %v2245
      %2583 = vmatmul.mubr.bf16.gmra.mxu0 %v1991
      %v2584 = vpop.f32.mrf.mxu0
      %v2585 = vadd.f32 0.0, %v2584
      %v2586 = vpop.f32.mrf.mxu0
      %v2587 = vpop.f32.mrf.mxu0
      %v2588 = vadd.f32 0.0, %v2587
      %v2589 = vpop.f32.mrf.mxu0
      %2590 = vmatprep.mubr.bf16.mxu0 %v2248
      %2591 = vmatmul.mubr.bf16.gmra.mxu0 %v1993
      %v2592 = vpop.f32.mrf.mxu0
      %v2593 = vadd.f32 0.0, %v2592
      %v2594 = vpop.f32.mrf.mxu0
      %v2595 = vpop.f32.mrf.mxu0
      %v2596 = vadd.f32 0.0, %v2595
      %v2597 = vpop.f32.mrf.mxu0
      %2598 = vmatprep.mubr.bf16.mxu0 %v2251
      %2599 = vmatmul.mubr.bf16.gmra.mxu0 %v1995
      %v2600 = vpop.f32.mrf.mxu0
      %v2601 = vadd.f32 0.0, %v2600
      %v2602 = vpop.f32.mrf.mxu0
      %v2603 = vpop.f32.mrf.mxu0
      %v2604 = vadd.f32 0.0, %v2603
      %v2605 = vpop.f32.mrf.mxu0
      %2606 = vdwg.mxu0
      %v2607 = vadd.f32 %v1469, %v2288
      %v2608 = vadd.f32 %v1471, %v2290
      %v2609 = vadd.f32 %v1662, %v2481
      %v2610 = vadd.f32 %v1473, %v2292
      %v2611 = vadd.f32 %v1475, %v2294
      %v2612 = vadd.f32 %v1665, %v2484
      %v2613 = vadd.f32 %v1479, %v2298
      %v2614 = vadd.f32 %v1481, %v2300
      %v2615 = vadd.f32 %v1670, %v2489
      %v2616 = vadd.f32 %v1483, %v2302
      %v2617 = vadd.f32 %v1485, %v2304
      %v2618 = vadd.f32 %v1673, %v2492
      %v2619 = vadd.f32 %v1489, %v2308
      %v2620 = vadd.f32 %v1491, %v2310
      %v2621 = vadd.f32 %v1678, %v2497
      %v2622 = vadd.f32 %v1493, %v2312
      %v2623 = vadd.f32 %v1495, %v2314
      %v2624 = vadd.f32 %v1681, %v2500
      %v2625 = vadd.f32 %v1499, %v2318
      %v2626 = vadd.f32 %v1501, %v2320
      %v2627 = vadd.f32 %v1686, %v2505
      %v2628 = vadd.f32 %v1503, %v2322
      %v2629 = vadd.f32 %v1505, %v2324
      %v2630 = vadd.f32 %v1689, %v2508
      %v2631 = vadd.f32 %v1509, %v2328
      %v2632 = vadd.f32 %v1511, %v2330
      %v2633 = vadd.f32 %v1694, %v2513
      %v2634 = vadd.f32 %v1513, %v2332
      %v2635 = vadd.f32 %v1515, %v2334
      %v2636 = vadd.f32 %v1697, %v2516
      %v2637 = vadd.f32 %v1519, %v2338
      %v2638 = vadd.f32 %v1521, %v2340
      %v2639 = vadd.f32 %v1702, %v2521
      %v2640 = vadd.f32 %v1523, %v2342
      %v2641 = vadd.f32 %v1525, %v2344
      %v2642 = vadd.f32 %v1705, %v2524
      %v2643 = vadd.f32 %v1529, %v2348
      %v2644 = vadd.f32 %v1531, %v2350
      %v2645 = vadd.f32 %v1710, %v2529
      %v2646 = vadd.f32 %v1533, %v2352
      %v2647 = vadd.f32 %v1535, %v2354
      %v2648 = vadd.f32 %v1713, %v2532
      %v2649 = vadd.f32 %v1539, %v2358
      %v2650 = vadd.f32 %v1541, %v2360
      %v2651 = vadd.f32 %v1718, %v2537
      %v2652 = vadd.f32 %v1543, %v2362
      %v2653 = vadd.f32 %v1545, %v2364
      %v2654 = vadd.f32 %v1721, %v2540
      %v2655 = vadd.f32 %v1549, %v2368
      %v2656 = vadd.f32 %v1551, %v2370
      %v2657 = vadd.f32 %v1726, %v2545
      %v2658 = vadd.f32 %v1553, %v2372
      %v2659 = vadd.f32 %v1555, %v2374
      %v2660 = vadd.f32 %v1729, %v2548
      %v2661 = vadd.f32 %v1559, %v2378
      %v2662 = vadd.f32 %v1561, %v2380
      %v2663 = vadd.f32 %v1734, %v2553
      %v2664 = vadd.f32 %v1563, %v2382
      %v2665 = vadd.f32 %v1565, %v2384
      %v2666 = vadd.f32 %v1737, %v2556
      %v2667 = vadd.f32 %v1569, %v2388
      %v2668 = vadd.f32 %v1571, %v2390
      %v2669 = vadd.f32 %v1742, %v2561
      %v2670 = vadd.f32 %v1573, %v2392
      %v2671 = vadd.f32 %v1575, %v2394
      %v2672 = vadd.f32 %v1745, %v2564
      %v2673 = vadd.f32 %v1579, %v2398
      %v2674 = vadd.f32 %v1581, %v2400
      %v2675 = vadd.f32 %v1750, %v2569
      %v2676 = vadd.f32 %v1583, %v2402
      %v2677 = vadd.f32 %v1585, %v2404
      %v2678 = vadd.f32 %v1753, %v2572
      %v2679 = vadd.f32 %v1589, %v2408
      %v2680 = vadd.f32 %v1591, %v2410
      %v2681 = vadd.f32 %v1758, %v2577
      %v2682 = vadd.f32 %v1593, %v2412
      %v2683 = vadd.f32 %v1595, %v2414
      %v2684 = vadd.f32 %v1761, %v2580
      %v2685 = vadd.f32 %v1599, %v2418
      %v2686 = vadd.f32 %v1601, %v2420
      %v2687 = vadd.f32 %v1766, %v2585
      %v2688 = vadd.f32 %v1603, %v2422
      %v2689 = vadd.f32 %v1605, %v2424
      %v2690 = vadd.f32 %v1769, %v2588
      %v2691 = vadd.f32 %v1609, %v2428
      %v2692 = vadd.f32 %v1611, %v2430
      %v2693 = vadd.f32 %v1774, %v2593
      %v2694 = vadd.f32 %v1613, %v2432
      %v2695 = vadd.f32 %v1615, %v2434
      %v2696 = vadd.f32 %v1777, %v2596
      %v2697 = vadd.f32 %v1619, %v2438
      %v2698 = vadd.f32 %v1621, %v2440
      %v2699 = vadd.f32 %v1782, %v2601
      %v2700 = vadd.f32 %v1623, %v2442
      %v2701 = vadd.f32 %v1625, %v2444
      %v2702 = vadd.f32 %v1785, %v2604
      %v2703 = vadd.f32 %v2607, %v2610
      %v2704 = vadd.f32 %v2703, %v2613
      %v2705 = vadd.f32 %v2704, %v2616
      %v2706 = vadd.f32 %v2705, %v2619
      %v2707 = vadd.f32 %v2706, %v2622
      %v2708 = vadd.f32 %v2707, %v2625
      %v2709 = vadd.f32 %v2708, %v2628
      %v2710 = vadd.f32 %v2709, %v2631
      %v2711 = vadd.f32 %v2710, %v2634
      %v2712 = vadd.f32 %v2711, %v2637
      %v2713 = vadd.f32 %v2712, %v2640
      %v2714 = vadd.f32 %v2713, %v2643
      %v2715 = vadd.f32 %v2714, %v2646
      %v2716 = vadd.f32 %v2715, %v2649
      %v2717 = vadd.f32 %v2716, %v2652
      %v2718 = vadd.f32 %v2717, %v2655
      %v2719 = vadd.f32 %v2718, %v2658
      %v2720 = vadd.f32 %v2719, %v2661
      %v2721 = vadd.f32 %v2720, %v2664
      %v2722 = vadd.f32 %v2721, %v2667
      %v2723 = vadd.f32 %v2722, %v2670
      %v2724 = vadd.f32 %v2723, %v2673
      %v2725 = vadd.f32 %v2724, %v2676
      %v2726 = vadd.f32 %v2725, %v2679
      %v2727 = vadd.f32 %v2726, %v2682
      %v2728 = vadd.f32 %v2727, %v2685
      %v2729 = vadd.f32 %v2728, %v2688
      %v2730 = vadd.f32 %v2729, %v2691
      %v2731 = vadd.f32 %v2730, %v2694
      %v2732 = vadd.f32 %v2731, %v2697
      %v2733 = vadd.f32 %v2732, %v2700
      %v2734 = vrot.slane %v2733, 4
      %v2735 = vadd.f32 %v2733, %v2734
      %v2736 = vrot.slane %v2735, 2
      %v2737 = vadd.f32 %v2735, %v2736
      %v2738 = vrot.slane %v2737, 1
      %v2739 = vadd.f32 %v2737, %v2738
      %v2740 = vadd.f32 %v2608, %v2611
      %v2741 = vadd.f32 %v2740, %v2614
      %v2742 = vadd.f32 %v2741, %v2617
      %v2743 = vadd.f32 %v2742, %v2620
      %v2744 = vadd.f32 %v2743, %v2623
      %v2745 = vadd.f32 %v2744, %v2626
      %v2746 = vadd.f32 %v2745, %v2629
      %v2747 = vadd.f32 %v2746, %v2632
      %v2748 = vadd.f32 %v2747, %v2635
      %v2749 = vadd.f32 %v2748, %v2638
      %v2750 = vadd.f32 %v2749, %v2641
      %v2751 = vadd.f32 %v2750, %v2644
      %v2752 = vadd.f32 %v2751, %v2647
      %v2753 = vadd.f32 %v2752, %v2650
      %v2754 = vadd.f32 %v2753, %v2653
      %v2755 = vadd.f32 %v2754, %v2656
      %v2756 = vadd.f32 %v2755, %v2659
      %v2757 = vadd.f32 %v2756, %v2662
      %v2758 = vadd.f32 %v2757, %v2665
      %v2759 = vadd.f32 %v2758, %v2668
      %v2760 = vadd.f32 %v2759, %v2671
      %v2761 = vadd.f32 %v2760, %v2674
      %v2762 = vadd.f32 %v2761, %v2677
      %v2763 = vadd.f32 %v2762, %v2680
      %v2764 = vadd.f32 %v2763, %v2683
      %v2765 = vadd.f32 %v2764, %v2686
      %v2766 = vadd.f32 %v2765, %v2689
      %v2767 = vadd.f32 %v2766, %v2692
      %v2768 = vadd.f32 %v2767, %v2695
      %v2769 = vadd.f32 %v2768, %v2698
      %v2770 = vadd.f32 %v2769, %v2701
      %v2771 = vrot.slane %v2770, 4
      %v2772 = vadd.f32 %v2770, %v2771
      %v2773 = vrot.slane %v2772, 2
      %v2774 = vadd.f32 %v2772, %v2773
      %v2775 = vrot.slane %v2774, 1
      %v2776 = vadd.f32 %v2774, %v2775
      %v2777 = vsel %vm647, %v2609, 0.0
      %v2778 = vsel %vm647, %v2612, 0.0
      %v2779 = vadd.f32 %v2777, %v2778
      %v2780 = vsel %vm647, %v2615, 0.0
      %v2781 = vadd.f32 %v2779, %v2780
      %v2782 = vsel %vm647, %v2618, 0.0
      %v2783 = vadd.f32 %v2781, %v2782
      %v2784 = vsel %vm647, %v2621, 0.0
      %v2785 = vadd.f32 %v2783, %v2784
      %v2786 = vsel %vm647, %v2624, 0.0
      %v2787 = vadd.f32 %v2785, %v2786
      %v2788 = vsel %vm647, %v2627, 0.0
      %v2789 = vadd.f32 %v2787, %v2788
      %v2790 = vsel %vm647, %v2630, 0.0
      %v2791 = vadd.f32 %v2789, %v2790
      %v2792 = vsel %vm647, %v2633, 0.0
      %v2793 = vadd.f32 %v2791, %v2792
      %v2794 = vsel %vm647, %v2636, 0.0
      %v2795 = vadd.f32 %v2793, %v2794
      %v2796 = vsel %vm647, %v2639, 0.0
      %v2797 = vadd.f32 %v2795, %v2796
      %v2798 = vsel %vm647, %v2642, 0.0
      %v2799 = vadd.f32 %v2797, %v2798
      %v2800 = vsel %vm647, %v2645, 0.0
      %v2801 = vadd.f32 %v2799, %v2800
      %v2802 = vsel %vm647, %v2648, 0.0
      %v2803 = vadd.f32 %v2801, %v2802
      %v2804 = vsel %vm647, %v2651, 0.0
      %v2805 = vadd.f32 %v2803, %v2804
      %v2806 = vsel %vm647, %v2654, 0.0
      %v2807 = vadd.f32 %v2805, %v2806
      %v2808 = vsel %vm647, %v2657, 0.0
      %v2809 = vadd.f32 %v2807, %v2808
      %v2810 = vsel %vm647, %v2660, 0.0
      %v2811 = vadd.f32 %v2809, %v2810
      %v2812 = vsel %vm647, %v2663, 0.0
      %v2813 = vadd.f32 %v2811, %v2812
      %v2814 = vsel %vm647, %v2666, 0.0
      %v2815 = vadd.f32 %v2813, %v2814
      %v2816 = vsel %vm647, %v2669, 0.0
      %v2817 = vadd.f32 %v2815, %v2816
      %v2818 = vsel %vm647, %v2672, 0.0
      %v2819 = vadd.f32 %v2817, %v2818
      %v2820 = vsel %vm647, %v2675, 0.0
      %v2821 = vadd.f32 %v2819, %v2820
      %v2822 = vsel %vm647, %v2678, 0.0
      %v2823 = vadd.f32 %v2821, %v2822
      %v2824 = vsel %vm647, %v2681, 0.0
      %v2825 = vadd.f32 %v2823, %v2824
      %v2826 = vsel %vm647, %v2684, 0.0
      %v2827 = vadd.f32 %v2825, %v2826
      %v2828 = vsel %vm647, %v2687, 0.0
      %v2829 = vadd.f32 %v2827, %v2828
      %v2830 = vsel %vm647, %v2690, 0.0
      %v2831 = vadd.f32 %v2829, %v2830
      %v2832 = vsel %vm647, %v2693, 0.0
      %v2833 = vadd.f32 %v2831, %v2832
      %v2834 = vsel %vm647, %v2696, 0.0
      %v2835 = vadd.f32 %v2833, %v2834
      %v2836 = vsel %vm647, %v2699, 0.0
      %v2837 = vadd.f32 %v2835, %v2836
      %v2838 = vsel %vm647, %v2702, 0.0
      %v2839 = vadd.f32 %v2837, %v2838
      %v2840 = vrot.slane %v2839, 4
      %v2841 = vadd.f32 %v2839, %v2840
      %v2842 = vrot.slane %v2841, 2
      %v2843 = vadd.f32 %v2841, %v2842
      %v2844 = vrot.slane %v2843, 1
      %v2845 = vadd.f32 %v2843, %v2844
      %v2846 = vmul.f32 %v2607, %v2607
      %v2847 = vmul.f32 %v2608, %v2608
      %v2848 = vmul.f32 %v2609, %v2609
      %v2849 = vmul.f32 %v2610, %v2610
      %v2850 = vmul.f32 %v2611, %v2611
      %v2851 = vmul.f32 %v2612, %v2612
      %v2852 = vmul.f32 %v2613, %v2613
      %v2853 = vmul.f32 %v2614, %v2614
      %v2854 = vmul.f32 %v2615, %v2615
      %v2855 = vmul.f32 %v2616, %v2616
      %v2856 = vmul.f32 %v2617, %v2617
      %v2857 = vmul.f32 %v2618, %v2618
      %v2858 = vmul.f32 %v2619, %v2619
      %v2859 = vmul.f32 %v2620, %v2620
      %v2860 = vmul.f32 %v2621, %v2621
      %v2861 = vmul.f32 %v2622, %v2622
      %v2862 = vmul.f32 %v2623, %v2623
      %v2863 = vmul.f32 %v2624, %v2624
      %v2864 = vmul.f32 %v2625, %v2625
      %v2865 = vmul.f32 %v2626, %v2626
      %v2866 = vmul.f32 %v2627, %v2627
      %v2867 = vmul.f32 %v2628, %v2628
      %v2868 = vmul.f32 %v2629, %v2629
      %v2869 = vmul.f32 %v2630, %v2630
      %v2870 = vmul.f32 %v2631, %v2631
      %v2871 = vmul.f32 %v2632, %v2632
      %v2872 = vmul.f32 %v2633, %v2633
      %v2873 = vmul.f32 %v2634, %v2634
      %v2874 = vmul.f32 %v2635, %v2635
      %v2875 = vmul.f32 %v2636, %v2636
      %v2876 = vmul.f32 %v2637, %v2637
      %v2877 = vmul.f32 %v2638, %v2638
      %v2878 = vmul.f32 %v2639, %v2639
      %v2879 = vmul.f32 %v2640, %v2640
      %v2880 = vmul.f32 %v2641, %v2641
      %v2881 = vmul.f32 %v2642, %v2642
      %v2882 = vmul.f32 %v2643, %v2643
      %v2883 = vmul.f32 %v2644, %v2644
      %v2884 = vmul.f32 %v2645, %v2645
      %v2885 = vmul.f32 %v2646, %v2646
      %v2886 = vmul.f32 %v2647, %v2647
      %v2887 = vmul.f32 %v2648, %v2648
      %v2888 = vmul.f32 %v2649, %v2649
      %v2889 = vmul.f32 %v2650, %v2650
      %v2890 = vmul.f32 %v2651, %v2651
      %v2891 = vmul.f32 %v2652, %v2652
      %v2892 = vmul.f32 %v2653, %v2653
      %v2893 = vmul.f32 %v2654, %v2654
      %v2894 = vmul.f32 %v2655, %v2655
      %v2895 = vmul.f32 %v2656, %v2656
      %v2896 = vmul.f32 %v2657, %v2657
      %v2897 = vmul.f32 %v2658, %v2658
      %v2898 = vmul.f32 %v2659, %v2659
      %v2899 = vmul.f32 %v2660, %v2660
      %v2900 = vmul.f32 %v2661, %v2661
      %v2901 = vmul.f32 %v2662, %v2662
      %v2902 = vmul.f32 %v2663, %v2663
      %v2903 = vmul.f32 %v2664, %v2664
      %v2904 = vmul.f32 %v2665, %v2665
      %v2905 = vmul.f32 %v2666, %v2666
      %v2906 = vmul.f32 %v2667, %v2667
      %v2907 = vmul.f32 %v2668, %v2668
      %v2908 = vmul.f32 %v2669, %v2669
      %v2909 = vmul.f32 %v2670, %v2670
      %v2910 = vmul.f32 %v2671, %v2671
      %v2911 = vmul.f32 %v2672, %v2672
      %v2912 = vmul.f32 %v2673, %v2673
      %v2913 = vmul.f32 %v2674, %v2674
      %v2914 = vmul.f32 %v2675, %v2675
      %v2915 = vmul.f32 %v2676, %v2676
      %v2916 = vmul.f32 %v2677, %v2677
      %v2917 = vmul.f32 %v2678, %v2678
      %v2918 = vmul.f32 %v2679, %v2679
      %v2919 = vmul.f32 %v2680, %v2680
      %v2920 = vmul.f32 %v2681, %v2681
      %v2921 = vmul.f32 %v2682, %v2682
      %v2922 = vmul.f32 %v2683, %v2683
      %v2923 = vmul.f32 %v2684, %v2684
      %v2924 = vmul.f32 %v2685, %v2685
      %v2925 = vmul.f32 %v2686, %v2686
      %v2926 = vmul.f32 %v2687, %v2687
      %v2927 = vmul.f32 %v2688, %v2688
      %v2928 = vmul.f32 %v2689, %v2689
      %v2929 = vmul.f32 %v2690, %v2690
      %v2930 = vmul.f32 %v2691, %v2691
      %v2931 = vmul.f32 %v2692, %v2692
      %v2932 = vmul.f32 %v2693, %v2693
      %v2933 = vmul.f32 %v2694, %v2694
      %v2934 = vmul.f32 %v2695, %v2695
      %v2935 = vmul.f32 %v2696, %v2696
      %v2936 = vmul.f32 %v2697, %v2697
      %v2937 = vmul.f32 %v2698, %v2698
      %v2938 = vmul.f32 %v2699, %v2699
      %v2939 = vmul.f32 %v2700, %v2700
      %v2940 = vmul.f32 %v2701, %v2701
      %v2941 = vmul.f32 %v2702, %v2702
      %v2942 = vadd.f32 %v2846, %v2849
      %v2943 = vadd.f32 %v2942, %v2852
      %v2944 = vadd.f32 %v2943, %v2855
      %v2945 = vadd.f32 %v2944, %v2858
      %v2946 = vadd.f32 %v2945, %v2861
      %v2947 = vadd.f32 %v2946, %v2864
      %v2948 = vadd.f32 %v2947, %v2867
      %v2949 = vadd.f32 %v2948, %v2870
      %v2950 = vadd.f32 %v2949, %v2873
      %v2951 = vadd.f32 %v2950, %v2876
      %v2952 = vadd.f32 %v2951, %v2879
      %v2953 = vadd.f32 %v2952, %v2882
      %v2954 = vadd.f32 %v2953, %v2885
      %v2955 = vadd.f32 %v2954, %v2888
      %v2956 = vadd.f32 %v2955, %v2891
      %v2957 = vadd.f32 %v2956, %v2894
      %v2958 = vadd.f32 %v2957, %v2897
      %v2959 = vadd.f32 %v2958, %v2900
      %v2960 = vadd.f32 %v2959, %v2903
      %v2961 = vadd.f32 %v2960, %v2906
      %v2962 = vadd.f32 %v2961, %v2909
      %v2963 = vadd.f32 %v2962, %v2912
      %v2964 = vadd.f32 %v2963, %v2915
      %v2965 = vadd.f32 %v2964, %v2918
      %v2966 = vadd.f32 %v2965, %v2921
      %v2967 = vadd.f32 %v2966, %v2924
      %v2968 = vadd.f32 %v2967, %v2927
      %v2969 = vadd.f32 %v2968, %v2930
      %v2970 = vadd.f32 %v2969, %v2933
      %v2971 = vadd.f32 %v2970, %v2936
      %v2972 = vadd.f32 %v2971, %v2939
      %v2973 = vrot.slane %v2972, 4
      %v2974 = vadd.f32 %v2972, %v2973
      %v2975 = vrot.slane %v2974, 2
      %v2976 = vadd.f32 %v2974, %v2975
      %v2977 = vrot.slane %v2976, 1
      %v2978 = vadd.f32 %v2976, %v2977
      %v2979 = vadd.f32 %v2847, %v2850
      %v2980 = vadd.f32 %v2979, %v2853
      %v2981 = vadd.f32 %v2980, %v2856
      %v2982 = vadd.f32 %v2981, %v2859
      %v2983 = vadd.f32 %v2982, %v2862
      %v2984 = vadd.f32 %v2983, %v2865
      %v2985 = vadd.f32 %v2984, %v2868
      %v2986 = vadd.f32 %v2985, %v2871
      %v2987 = vadd.f32 %v2986, %v2874
      %v2988 = vadd.f32 %v2987, %v2877
      %v2989 = vadd.f32 %v2988, %v2880
      %v2990 = vadd.f32 %v2989, %v2883
      %v2991 = vadd.f32 %v2990, %v2886
      %v2992 = vadd.f32 %v2991, %v2889
      %v2993 = vadd.f32 %v2992, %v2892
      %v2994 = vadd.f32 %v2993, %v2895
      %v2995 = vadd.f32 %v2994, %v2898
      %v2996 = vadd.f32 %v2995, %v2901
      %v2997 = vadd.f32 %v2996, %v2904
      %v2998 = vadd.f32 %v2997, %v2907
      %v2999 = vadd.f32 %v2998, %v2910
      %v3000 = vadd.f32 %v2999, %v2913
      %v3001 = vadd.f32 %v3000, %v2916
      %v3002 = vadd.f32 %v3001, %v2919
      %v3003 = vadd.f32 %v3002, %v2922
      %v3004 = vadd.f32 %v3003, %v2925
      %v3005 = vadd.f32 %v3004, %v2928
      %v3006 = vadd.f32 %v3005, %v2931
      %v3007 = vadd.f32 %v3006, %v2934
      %v3008 = vadd.f32 %v3007, %v2937
      %v3009 = vadd.f32 %v3008, %v2940
      %v3010 = vrot.slane %v3009, 4
      %v3011 = vadd.f32 %v3009, %v3010
      %v3012 = vrot.slane %v3011, 2
      %v3013 = vadd.f32 %v3011, %v3012
      %v3014 = vrot.slane %v3013, 1
      %v3015 = vadd.f32 %v3013, %v3014
      %v3016 = vsel %vm647, %v2848, 0.0
      %v3017 = vsel %vm647, %v2851, 0.0
      %v3018 = vadd.f32 %v3016, %v3017
      %v3019 = vsel %vm647, %v2854, 0.0
      %v3020 = vadd.f32 %v3018, %v3019
      %v3021 = vsel %vm647, %v2857, 0.0
      %v3022 = vadd.f32 %v3020, %v3021
      %v3023 = vsel %vm647, %v2860, 0.0
      %v3024 = vadd.f32 %v3022, %v3023
      %v3025 = vsel %vm647, %v2863, 0.0
      %v3026 = vadd.f32 %v3024, %v3025
      %v3027 = vsel %vm647, %v2866, 0.0
      %v3028 = vadd.f32 %v3026, %v3027
      %v3029 = vsel %vm647, %v2869, 0.0
      %v3030 = vadd.f32 %v3028, %v3029
      %v3031 = vsel %vm647, %v2872, 0.0
      %v3032 = vadd.f32 %v3030, %v3031
      %v3033 = vsel %vm647, %v2875, 0.0
      %v3034 = vadd.f32 %v3032, %v3033
      %v3035 = vsel %vm647, %v2878, 0.0
      %v3036 = vadd.f32 %v3034, %v3035
      %v3037 = vsel %vm647, %v2881, 0.0
      %v3038 = vadd.f32 %v3036, %v3037
      %v3039 = vsel %vm647, %v2884, 0.0
      %v3040 = vadd.f32 %v3038, %v3039
      %v3041 = vsel %vm647, %v2887, 0.0
      %v3042 = vadd.f32 %v3040, %v3041
      %v3043 = vsel %vm647, %v2890, 0.0
      %v3044 = vadd.f32 %v3042, %v3043
      %v3045 = vsel %vm647, %v2893, 0.0
      %v3046 = vadd.f32 %v3044, %v3045
      %v3047 = vsel %vm647, %v2896, 0.0
      %v3048 = vadd.f32 %v3046, %v3047
      %v3049 = vsel %vm647, %v2899, 0.0
      %v3050 = vadd.f32 %v3048, %v3049
      %v3051 = vsel %vm647, %v2902, 0.0
      %v3052 = vadd.f32 %v3050, %v3051
      %v3053 = vsel %vm647, %v2905, 0.0
      %v3054 = vadd.f32 %v3052, %v3053
      %v3055 = vsel %vm647, %v2908, 0.0
      %v3056 = vadd.f32 %v3054, %v3055
      %v3057 = vsel %vm647, %v2911, 0.0
      %v3058 = vadd.f32 %v3056, %v3057
      %v3059 = vsel %vm647, %v2914, 0.0
      %v3060 = vadd.f32 %v3058, %v3059
      %v3061 = vsel %vm647, %v2917, 0.0
      %v3062 = vadd.f32 %v3060, %v3061
      %v3063 = vsel %vm647, %v2920, 0.0
      %v3064 = vadd.f32 %v3062, %v3063
      %v3065 = vsel %vm647, %v2923, 0.0
      %v3066 = vadd.f32 %v3064, %v3065
      %v3067 = vsel %vm647, %v2926, 0.0
      %v3068 = vadd.f32 %v3066, %v3067
      %v3069 = vsel %vm647, %v2929, 0.0
      %v3070 = vadd.f32 %v3068, %v3069
      %v3071 = vsel %vm647, %v2932, 0.0
      %v3072 = vadd.f32 %v3070, %v3071
      %v3073 = vsel %vm647, %v2935, 0.0
      %v3074 = vadd.f32 %v3072, %v3073
      %v3075 = vsel %vm647, %v2938, 0.0
      %v3076 = vadd.f32 %v3074, %v3075
      %v3077 = vsel %vm647, %v2941, 0.0
      %v3078 = vadd.f32 %v3076, %v3077
      %v3079 = vrot.slane %v3078, 4
      %v3080 = vadd.f32 %v3078, %v3079
      %v3081 = vrot.slane %v3080, 2
      %v3082 = vadd.f32 %v3080, %v3081
      %v3083 = vrot.slane %v3082, 1
      %v3084 = vadd.f32 %v3082, %v3083
      %vm3085 = vcmask 1040384
      %v3086 = vsel %vm3085, %v2739, %v2978
      %v3087 = vsel %vm3085, %v2776, %v3015
      %v3088 = vsel %vm3085, %v2845, %v3084
      %vm3089 = vcmask 1041408
      %v3090 = vsel %vm3089, %v3086, 0.0
      %v3091 = vsel %vm3089, %v3087, 0.0
      %v3092 = vsel %vm3089, %v3088, 0.0
      %3093 = vst [vmem:[%s148] sm:$0xff] %v3090
      %3094 = vst [vmem:[%s148 + $0x8] sm:$0xff] %v3091
      %3095 = vst.msk [vmem:[%s148 + $0x10] sm:$0xff] %vm647, %v3092
      %p3096 = scmp.lt.s32.totalorder %s13, 1
      %s3097 = scalar_select %p3096, %s13, 1
      %s3098 = smul.addr %s3097, 3
      %s3099 = smul.addr %s3098, 8
      %s3100 = scalar_lea.vmem %s2, %s3099
      // Predicated region
      $region29: #{assconv_forward.2} parent=27 // pred_check
        %p3101 = pneg %p78
      $region30: #{assconv_forward.2} parent=27 // pred_check_branch
        %3103 = sbr.rel (%p3101) target = $region32
      $region31: #{assconv_forward.2} parent=27 // pred_region
        _
      $region32: #{assconv_forward.2} parent=27 // pred_fallthru
        _
    $region28: #{assconv_forward.2} parent=5 // pred_fallthru
      _
    %p3104 = scmp.le.s32.totalorder 2, %s8
    // Predicated region
    $region33: #{assconv_forward.2} parent=5 // pred_check
      %p3105 = pneg %p3104
    $region34: #{assconv_forward.2} parent=5 // pred_check_branch
      %3107 = sbr.rel (%p3105) target = $region36
    $region35: #{assconv_forward.2} parent=5 // pred_region
      %s3108 = ssub.s32 %s8, 2
      // Predicated region
      $region37: #{assconv_forward.2} parent=35 // pred_check
        %p3109 = pneg %p84
      $region38: #{assconv_forward.2} parent=35 // pred_check_branch
        %3111 = sbr.rel (%p3109) target = $region40
      $region39: #{assconv_forward.2} parent=35 // pred_region
        %p3112 = scmp.lt.s32.totalorder %s14, 1
        %s3113 = scalar_select %p3112, %s14, 1
        %s3114 = smul.addr %s3113, 3
        %s3115 = smul.addr %s3114, 8
        %s3116 = scalar_lea.vmem %s2, %s3115
      $region40: #{assconv_forward.2} parent=35 // pred_fallthru
        _
    $region36: #{assconv_forward.2} parent=5 // pred_fallthru
      _
  $region6: #{assconv_forward.2} parent=0 // loop_footer
    %s12 = sadd.s32 1, %s8
  $region7: #{assconv_forward.2} parent=0 // loop_footer_branch
    %7 = sbr.rel target = $region3
  $region8: #{assconv_forward.2} parent=0 // loop_exit
    _

// kernel: assconv_forward.3
$region0: #{assconv_forward.3}
  #allocation0 [shape = 'u32[]', space=smem, size = 0x4, offset = 0x4, fixed_abs, tag = 'smem constant byte address 0x4 - core index']
  #allocation1 [shape = 'u32[144,128]{1,0:T(1,128)}', space=vmem, size = 0x12000, scoped, tag = 'internal scratch']
  %s0 = inlined_call_operand.vmem [shape: bf16[8,10,8,192], index: 0, kind: input, shape index: {}]
  %s1 = inlined_call_operand.vmem [shape: bf16[576,320], index: 1, kind: input, shape index: {}]
  %s2 = inlined_call_operand.vmem [shape: f32[1,320], index: 2, kind: input, shape index: {}]
  %s3 = inlined_call_operand.vmem [shape: f32[1,64], index: 3, kind: input, shape index: {}]
  %s4 = inlined_call_operand.hbm [shape: f32[512,64], index: 4, kind: output, shape index: {}]
  %s5 = sld [smem:[#allocation0]]
  $region49: #{assconv_forward.3} parent=0
    _
  %s7 = ssub.s32 1, %s5
  %s8 = scalar_select 0, %s7, %s5
  $region1: #{assconv_forward.3} parent=0
    #allocation2 [shape = 'u8[262144]{0}', space=vmem, size = 0x40000, scoped, tag = 'output window, operand 0']
    #allocation3 [shape = 's32[2]{0}', space=sflag, size = 0x8, scoped, tag = 'scoped memory for assconv_forward.3']
    %9 = vsyncpa [#allocation3], 0
    %s10 = scalar_lea.sflag [#allocation3], 1
    %11 = vsyncpa %s10, 0
    loop: start=0, step=1, limit=4
    $region2: #{assconv_forward.3} parent=1 // loop_pre_header
      _
    $region3: #{assconv_forward.3} parent=1 // loop_header
      %s13 = sphi 0, %s17
      %p14 = scmp.ge.s32.totalorder %s13, 4
      %s23 = sphi 0, %s25
      %s26 = sphi 0, %s23
      %s27 = sphi 0, %s26
      %s43 = sphi 0, %s27
      %s47 = sphi 0, %s47
      %s49 = sphi 0, %s47
      %s50 = sphi 0, %s49
      %s64 = sphi 0, %s50
      %s68 = sphi 0, %s68
      %s70 = sphi 0, %s68
      %s71 = sphi 0, %s70
      %s85 = sphi 0, %s71
      %s89 = sphi 0, %s89
      %s91 = sphi 0, %s89
      %s92 = sphi 0, %s91
      %s106 = sphi 0, %s92
      %s112 = sphi 0, %s114
      %s115 = sphi 0, %s112
      %s116 = sphi 0, %s115
      %s132 = sphi 0, %s116
    $region4: #{assconv_forward.3} parent=1 // loop_header_branch
      %16 = sbr.rel (%p14) target = $region8
    $region5: #{assconv_forward.3} parent=1 // loop_body
      %s18 = ssub.s32 %s13, 1
      %s19 = ssub.s32 %s13, 2
      %s20 = sadd.s32 %s13, 1
      %s21 = ssub.s32 %s13, %s20
      %p22 = scmp.eq.s32.totalorder %s21, 0
      %s24 = sadd.s32 %s23, 1
      %s25 = scalar_select %p22, %s23, %s24
      %p28 = pneg %p22
      %p29 = scmp.eq.s32.totalorder %s13, 1
      %p30 = por %p28, %p29
      %p31 = scmp.ne.s32.totalorder %s23, %s26
      %p32 = scmp.eq.s32.totalorder %s13, 0
      %p33 = por %p31, %p32
      %p34 = scmp.ne.s32.totalorder %s23, %s26
      %p35 = scmp.eq.s32.totalorder %s18, 1
      %p36 = por %p34, %p35
      %p37 = scmp.ne.s32.totalorder %s26, %s27
      %p38 = scmp.eq.s32.totalorder %s18, 0
      %p39 = por %p37, %p38
      %p40 = scmp.ne.s32.totalorder %s26, %s27
      %p41 = scmp.eq.s32.totalorder %s19, 1
      %p42 = por %p40, %p41
      %p44 = scmp.ne.s32.totalorder %s27, %s43
      %p45 = scmp.eq.s32.totalorder %s19, 0
      %p46 = por %p44, %p45
      %s48 = sadd.s32 %s47, 1
      %p51 = scmp.eq.s32.totalorder %s13, 1
      %p52 = scmp.ne.s32.totalorder %s47, %s49
      %p53 = scmp.eq.s32.totalorder %s13, 0
      %p54 = por %p52, %p53
      %p55 = scmp.ne.s32.totalorder %s47, %s49
      %p56 = scmp.eq.s32.totalorder %s18, 1
      %p57 = por %p55, %p56
      %p58 = scmp.ne.s32.totalorder %s49, %s50
      %p59 = scmp.eq.s32.totalorder %s18, 0
      %p60 = por %p58, %p59
      %p61 = scmp.ne.s32.totalorder %s49, %s50
      %p62 = scmp.eq.s32.totalorder %s19, 1
      %p63 = por %p61, %p62
      %p65 = scmp.ne.s32.totalorder %s50, %s64
      %p66 = scmp.eq.s32.totalorder %s19, 0
      %p67 = por %p65, %p66
      %s69 = sadd.s32 %s68, 1
      %p72 = scmp.eq.s32.totalorder %s13, 1
      %p73 = scmp.ne.s32.totalorder %s68, %s70
      %p74 = scmp.eq.s32.totalorder %s13, 0
      %p75 = por %p73, %p74
      %p76 = scmp.ne.s32.totalorder %s68, %s70
      %p77 = scmp.eq.s32.totalorder %s18, 1
      %p78 = por %p76, %p77
      %p79 = scmp.ne.s32.totalorder %s70, %s71
      %p80 = scmp.eq.s32.totalorder %s18, 0
      %p81 = por %p79, %p80
      %p82 = scmp.ne.s32.totalorder %s70, %s71
      %p83 = scmp.eq.s32.totalorder %s19, 1
      %p84 = por %p82, %p83
      %p86 = scmp.ne.s32.totalorder %s71, %s85
      %p87 = scmp.eq.s32.totalorder %s19, 0
      %p88 = por %p86, %p87
      %s90 = sadd.s32 %s89, 1
      %p93 = scmp.eq.s32.totalorder %s13, 1
      %p94 = scmp.ne.s32.totalorder %s89, %s91
      %p95 = scmp.eq.s32.totalorder %s13, 0
      %p96 = por %p94, %p95
      %p97 = scmp.ne.s32.totalorder %s89, %s91
      %p98 = scmp.eq.s32.totalorder %s18, 1
      %p99 = por %p97, %p98
      %p100 = scmp.ne.s32.totalorder %s91, %s92
      %p101 = scmp.eq.s32.totalorder %s18, 0
      %p102 = por %p100, %p101
      %p103 = scmp.ne.s32.totalorder %s91, %s92
      %p104 = scmp.eq.s32.totalorder %s19, 1
      %p105 = por %p103, %p104
      %p107 = scmp.ne.s32.totalorder %s92, %s106
      %p108 = scmp.eq.s32.totalorder %s19, 0
      %p109 = por %p107, %p108
      %s110 = ssub.s32 %s13, %s20
      %p111 = scmp.eq.s32.totalorder %s110, 0
      %s113 = sadd.s32 %s112, 1
      %s114 = scalar_select %p111, %s112, %s113
      %p117 = pneg %p111
      %p118 = scmp.eq.s32.totalorder %s13, 1
      %p119 = por %p117, %p118
      %p120 = scmp.ne.s32.totalorder %s112, %s115
      %p121 = scmp.eq.s32.totalorder %s13, 0
      %p122 = por %p120, %p121
      %p123 = scmp.ne.s32.totalorder %s112, %s115
      %p124 = scmp.eq.s32.totalorder %s18, 1
      %p125 = por %p123, %p124
      %p126 = scmp.ne.s32.totalorder %s115, %s116
      %p127 = scmp.eq.s32.totalorder %s18, 0
      %p128 = por %p126, %p127
      %p129 = scmp.ne.s32.totalorder %s115, %s116
      %p130 = scmp.eq.s32.totalorder %s19, 1
      %p131 = por %p129, %p130
      %p133 = scmp.ne.s32.totalorder %s116, %s132
      %p134 = scmp.eq.s32.totalorder %s19, 0
      %p135 = por %p133, %p134
      %p136 = scmp.le.s32.totalorder 1, %s13
      %p137 = scmp.lt.s32.totalorder %s13, 3
      %p138 = pnand %p136, %p137
      %p139 = pneg %p138
      // Predicated region
      $region9: #{assconv_forward.3} parent=5 // pred_check
        _
      $region10: #{assconv_forward.3} parent=5 // pred_check_branch
        %141 = sbr.rel (%p138) target = $region12
      $region11: #{assconv_forward.3} parent=5 // pred_region
        %s142 = ssub.s32 %s13, 1
        // Predicated region
        $region13: #{assconv_forward.3} parent=11 // pred_check
          %p143 = pneg %p60
        $region14: #{assconv_forward.3} parent=11 // pred_check_branch
          %145 = sbr.rel (%p143) target = $region16
        $region15: #{assconv_forward.3} parent=11 // pred_region
          _
        $region16: #{assconv_forward.3} parent=11 // pred_fallthru
          _
        // Predicated region
        $region17: #{assconv_forward.3} parent=11 // pred_check
          %p146 = pneg %p81
        $region18: #{assconv_forward.3} parent=11 // pred_check_branch
          %148 = sbr.rel (%p146) target = $region20
        $region19: #{assconv_forward.3} parent=11 // pred_region
          _
        $region20: #{assconv_forward.3} parent=11 // pred_fallthru
          _
        // Predicated region
        $region21: #{assconv_forward.3} parent=11 // pred_check
          %p149 = pneg %p102
        $region22: #{assconv_forward.3} parent=11 // pred_check_branch
          %151 = sbr.rel (%p149) target = $region24
        $region23: #{assconv_forward.3} parent=11 // pred_region
          _
        $region24: #{assconv_forward.3} parent=11 // pred_fallthru
          _
      $region12: #{assconv_forward.3} parent=5 // pred_fallthru
        _
      %p152 = scmp.lt.s32.totalorder %s13, 2
      // Predicated region
      $region25: #{assconv_forward.3} parent=5 // pred_check
        %p153 = pneg %p152
      $region26: #{assconv_forward.3} parent=5 // pred_check_branch
        %155 = sbr.rel (%p153) target = $region28
      $region27: #{assconv_forward.3} parent=5 // pred_region
        // Predicated region
        $region29: #{assconv_forward.3} parent=27 // pred_check
          %p156 = pneg %p33
        $region30: #{assconv_forward.3} parent=27 // pred_check_branch
          %158 = sbr.rel (%p156) target = $region32
        $region31: #{assconv_forward.3} parent=27 // pred_region
          %s159 = smul.u32 4, %s13
          %p160 = scmp.lt.s32.totalorder %s159, 7
          %s161 = scalar_select %p160, %s159, 7
          %s162 = smul.addr %s161, 20
          %s163 = smul.addr %s162, 4
          %s164 = scalar_lea.vmem %s0, %s163
          %s165 = smul.u32 4, %s13
        $region32: #{assconv_forward.3} parent=27 // pred_fallthru
          _
      $region28: #{assconv_forward.3} parent=5 // pred_fallthru
        _
      %p166 = scmp.le.s32.totalorder 1, %s13
      %p167 = scmp.lt.s32.totalorder %s13, 3
      %p168 = pnand %p166, %p167
      %p169 = pneg %p168
      // Predicated region
      $region33: #{assconv_forward.3} parent=5 // pred_check
        _
      $region34: #{assconv_forward.3} parent=5 // pred_check_branch
        %171 = sbr.rel (%p168) target = $region36
      $region35: #{assconv_forward.3} parent=5 // pred_region
        %s172 = ssub.s32 %s13, 1
        %s173 = smul.u32 4, %s18
        %p174 = scmp.lt.s32.totalorder %s173, 7
        %s175 = scalar_select %p174, %s173, 7
        %s176 = smul.addr %s175, 20
        %s177 = smul.addr %s176, 4
        %s178 = scalar_lea.vmem %s0, %s177
        %p179 = pneg %p39
        %p180 = pneg %p36
        %p181 = pneg %p60
        %p182 = pneg %p57
        %p183 = pneg %p81
        %p184 = pneg %p78
        %p185 = pneg %p102
        %p186 = pneg %p99
        %p187 = pneg %p128
        %p188 = pneg %p125
        %s189 = sand.u32 %s115, 1
        %s190 = scalar_lea.sflag [#allocation3], %s189
        %s191 = sand.u32 %s115, 1
        %s192 = smul.addr %s191, 256
        %s193 = scalar_lea.vmem [#allocation2], %s192
        %s194 = smul.u32 4, %s18
        %p195 = scmp.lt.s32.totalorder %s194, 7
        %s196 = scalar_select %p195, %s194, 7
        %s197 = smul.addr %s196, 20
        %s198 = smul.addr %s197, 4
        %s199 = scalar_lea.vmem %s0, %s198
        %s200 = smul.u32 4, %s18
        %s201 = smul.u32 32, %s18
        %v203 = vld [vmem:[%s199] sm:$0xff]
        %v204 = vld [vmem:[%s199 + $0x8] sm:$0xff]
        %v205 = vld [vmem:[%s199 + $0x10] sm:$0xff]
        %v206 = vld [vmem:[%s199 + $0x18] sm:$0xff]
        %v207 = vld [vmem:[%s199 + $0x20] sm:$0xff]
        %v208 = vld [vmem:[%s199 + $0x28] sm:$0xff]
        %v209 = vld [vmem:[%s199 + $0x30] sm:$0xff]
        %v210 = vld [vmem:[%s199 + $0x38] sm:$0xff]
        %v211 = vld [vmem:[%s199 + $0x50] sm:$0xff]
        %v212 = vld [vmem:[%s199 + $0x58] sm:$0xff]
        %v213 = vld [vmem:[%s199 + $0x60] sm:$0xff]
        %v214 = vld [vmem:[%s199 + $0x68] sm:$0xff]
        %v215 = vld [vmem:[%s199 + $0x70] sm:$0xff]
        %v216 = vld [vmem:[%s199 + $0x78] sm:$0xff]
        %v217 = vld [vmem:[%s199 + $0x80] sm:$0xff]
        %v218 = vld [vmem:[%s199 + $0x88] sm:$0xff]
        %v219 = vld [vmem:[%s199 + $0xa0] sm:$0xff]
        %v220 = vld [vmem:[%s199 + $0xa8] sm:$0xff]
        %v221 = vld [vmem:[%s199 + $0xb0] sm:$0xff]
        %v222 = vld [vmem:[%s199 + $0xb8] sm:$0xff]
        %v223 = vld [vmem:[%s199 + $0xc0] sm:$0xff]
        %v224 = vld [vmem:[%s199 + $0xc8] sm:$0xff]
        %v225 = vld [vmem:[%s199 + $0xd0] sm:$0xff]
        %v226 = vld [vmem:[%s199 + $0xd8] sm:$0xff]
        %v227 = vld [vmem:[%s199 + $0xf0] sm:$0xff]
        %v228 = vld [vmem:[%s199 + $0xf8] sm:$0xff]
        %v229 = vld [vmem:[%s199 + $0x100] sm:$0xff]
        %v230 = vld [vmem:[%s199 + $0x108] sm:$0xff]
        %v231 = vld [vmem:[%s199 + $0x110] sm:$0xff]
        %v232 = vld [vmem:[%s199 + $0x118] sm:$0xff]
        %v233 = vld [vmem:[%s199 + $0x120] sm:$0xff]
        %v234 = vld [vmem:[%s199 + $0x128] sm:$0xff]
        %v235 = vld [vmem:[%s1] sm:$0xff]
        %v236 = vld [vmem:[%s1 + $0x8] sm:$0xf]
        %v237 = vld [vmem:[%s1 + $0xc] sm:$0xff]
        %v238 = vld [vmem:[%s1 + $0x14] sm:$0xf]
        %v239 = vld [vmem:[%s1 + $0x18] sm:$0xff]
        %v240 = vld [vmem:[%s1 + $0x20] sm:$0xf]
        %v241 = vld [vmem:[%s1 + $0x24] sm:$0xff]
        %v242 = vld [vmem:[%s1 + $0x2c] sm:$0xf]
        %v243 = vld [vmem:[%s1 + $0x30] sm:$0xff]
        %v244 = vld [vmem:[%s1 + $0x38] sm:$0xf]
        %v245 = vld [vmem:[%s1 + $0x3c] sm:$0xff]
        %v246 = vld [vmem:[%s1 + $0x44] sm:$0xf]
        %v247 = vld [vmem:[%s1 + $0x48] sm:$0xff]
        %v248 = vld [vmem:[%s1 + $0x50] sm:$0xf]
        %v249 = vld [vmem:[%s1 + $0x54] sm:$0xff]
        %v250 = vld [vmem:[%s1 + $0x5c] sm:$0xf]
        %v251 = vld [vmem:[%s1 + $0x60] sm:$0xff]
        %v252 = vld [vmem:[%s1 + $0x68] sm:$0xf]
        %v253 = vld [vmem:[%s1 + $0x6c] sm:$0xff]
        %v254 = vld [vmem:[%s1 + $0x74] sm:$0xf]
        %v255 = vld [vmem:[%s1 + $0x78] sm:$0xff]
        %v256 = vld [vmem:[%s1 + $0x80] sm:$0xf]
        %v257 = vld [vmem:[%s1 + $0x84] sm:$0xff]
        %v258 = vld [vmem:[%s1 + $0x8c] sm:$0xf]
        %v259 = vld [vmem:[%s1 + $0x90] sm:$0xff]
        %v260 = vld [vmem:[%s1 + $0x98] sm:$0xf]
        %v261 = vld [vmem:[%s1 + $0x9c] sm:$0xff]
        %v262 = vld [vmem:[%s1 + $0xa4] sm:$0xf]
        %v263 = vld [vmem:[%s1 + $0xa8] sm:$0xff]
        %v264 = vld [vmem:[%s1 + $0xb0] sm:$0xf]
        %v265 = vld [vmem:[%s1 + $0xb4] sm:$0xff]
        %v266 = vld [vmem:[%s1 + $0xbc] sm:$0xf]
        %v267 = vld [vmem:[%s1 + $0xc0] sm:$0xff]
        %v268 = vld [vmem:[%s1 + $0xc8] sm:$0xf]
        %v269 = vld [vmem:[%s1 + $0xcc] sm:$0xff]
        %v270 = vld [vmem:[%s1 + $0xd4] sm:$0xf]
        %v271 = vld [vmem:[%s1 + $0xd8] sm:$0xff]
        %v272 = vld [vmem:[%s1 + $0xe0] sm:$0xf]
        %v273 = vld [vmem:[%s1 + $0xe4] sm:$0xff]
        %v274 = vld [vmem:[%s1 + $0xec] sm:$0xf]
        %v275 = vld [vmem:[%s1 + $0xf0] sm:$0xff]
        %v276 = vld [vmem:[%s1 + $0xf8] sm:$0xf]
        %v277 = vld [vmem:[%s1 + $0xfc] sm:$0xff]
        %v278 = vld [vmem:[%s1 + $0x104] sm:$0xf]
        %v279 = vld [vmem:[%s1 + $0x108] sm:$0xff]
        %v280 = vld [vmem:[%s1 + $0x110] sm:$0xf]
        %v281 = vld [vmem:[%s1 + $0x114] sm:$0xff]
        %v282 = vld [vmem:[%s1 + $0x11c] sm:$0xf]
        %s283 = scalar_lea.vmem %s199, 8
        %v284 = vld [vmem:[%s283] sm:$0xff]
        %v285 = vld [vmem:[%s283 + $0x8] sm:$0xff]
        %v286 = vld [vmem:[%s283 + $0x10] sm:$0xff]
        %v287 = vld [vmem:[%s283 + $0x18] sm:$0xff]
        %v288 = vld [vmem:[%s283 + $0x20] sm:$0xff]
        %v289 = vld [vmem:[%s283 + $0x28] sm:$0xff]
        %v290 = vld [vmem:[%s283 + $0x30] sm:$0xff]
        %v291 = vld [vmem:[%s283 + $0x38] sm:$0xff]
        %v292 = vld [vmem:[%s283 + $0x50] sm:$0xff]
        %v293 = vld [vmem:[%s283 + $0x58] sm:$0xff]
        %v294 = vld [vmem:[%s283 + $0x60] sm:$0xff]
        %v295 = vld [vmem:[%s283 + $0x68] sm:$0xff]
        %v296 = vld [vmem:[%s283 + $0x70] sm:$0xff]
        %v297 = vld [vmem:[%s283 + $0x78] sm:$0xff]
        %v298 = vld [vmem:[%s283 + $0x80] sm:$0xff]
        %v299 = vld [vmem:[%s283 + $0x88] sm:$0xff]
        %v300 = vld [vmem:[%s283 + $0xa0] sm:$0xff]
        %v301 = vld [vmem:[%s283 + $0xa8] sm:$0xff]
        %v302 = vld [vmem:[%s283 + $0xb0] sm:$0xff]
        %v303 = vld [vmem:[%s283 + $0xb8] sm:$0xff]
        %v304 = vld [vmem:[%s283 + $0xc0] sm:$0xff]
        %v305 = vld [vmem:[%s283 + $0xc8] sm:$0xff]
        %v306 = vld [vmem:[%s283 + $0xd0] sm:$0xff]
        %v307 = vld [vmem:[%s283 + $0xd8] sm:$0xff]
        %v308 = vld [vmem:[%s283 + $0xf0] sm:$0xff]
        %v309 = vld [vmem:[%s283 + $0xf8] sm:$0xff]
        %v310 = vld [vmem:[%s283 + $0x100] sm:$0xff]
        %v311 = vld [vmem:[%s283 + $0x108] sm:$0xff]
        %v312 = vld [vmem:[%s283 + $0x110] sm:$0xff]
        %v313 = vld [vmem:[%s283 + $0x118] sm:$0xff]
        %v314 = vld [vmem:[%s283 + $0x120] sm:$0xff]
        %v315 = vld [vmem:[%s283 + $0x128] sm:$0xff]
        %v316 = vld [vmem:[%s1 + $0x120] sm:$0xff]
        %v317 = vld [vmem:[%s1 + $0x128] sm:$0xf]
        %v318 = vld [vmem:[%s1 + $0x12c] sm:$0xff]
        %v319 = vld [vmem:[%s1 + $0x134] sm:$0xf]
        %v320 = vld [vmem:[%s1 + $0x138] sm:$0xff]
        %v321 = vld [vmem:[%s1 + $0x140] sm:$0xf]
        %v322 = vld [vmem:[%s1 + $0x144] sm:$0xff]
        %v323 = vld [vmem:[%s1 + $0x14c] sm:$0xf]
        %v324 = vld [vmem:[%s1 + $0x150] sm:$0xff]
        %v325 = vld [vmem:[%s1 + $0x158] sm:$0xf]
        %v326 = vld [vmem:[%s1 + $0x15c] sm:$0xff]
        %v327 = vld [vmem:[%s1 + $0x164] sm:$0xf]
        %v328 = vld [vmem:[%s1 + $0x168] sm:$0xff]
        %v329 = vld [vmem:[%s1 + $0x170] sm:$0xf]
        %v330 = vld [vmem:[%s1 + $0x174] sm:$0xff]
        %v331 = vld [vmem:[%s1 + $0x17c] sm:$0xf]
        %v332 = vld [vmem:[%s1 + $0x180] sm:$0xff]
        %v333 = vld [vmem:[%s1 + $0x188] sm:$0xf]
        %v334 = vld [vmem:[%s1 + $0x18c] sm:$0xff]
        %v335 = vld [vmem:[%s1 + $0x194] sm:$0xf]
        %v336 = vld [vmem:[%s1 + $0x198] sm:$0xff]
        %v337 = vld [vmem:[%s1 + $0x1a0] sm:$0xf]
        %v338 = vld [vmem:[%s1 + $0x1a4] sm:$0xff]
        %v339 = vld [vmem:[%s1 + $0x1ac] sm:$0xf]
        %v340 = vld [vmem:[%s1 + $0x1b0] sm:$0xff]
        %v341 = vld [vmem:[%s1 + $0x1b8] sm:$0xf]
        %v342 = vld [vmem:[%s1 + $0x1bc] sm:$0xff]
        %v343 = vld [vmem:[%s1 + $0x1c4] sm:$0xf]
        %v344 = vld [vmem:[%s1 + $0x1c8] sm:$0xff]
        %v345 = vld [vmem:[%s1 + $0x1d0] sm:$0xf]
        %v346 = vld [vmem:[%s1 + $0x1d4] sm:$0xff]
        %v347 = vld [vmem:[%s1 + $0x1dc] sm:$0xf]
        %v348 = vld [vmem:[%s1 + $0x1e0] sm:$0xff]
        %v349 = vld [vmem:[%s1 + $0x1e8] sm:$0xf]
        %v350 = vld [vmem:[%s1 + $0x1ec] sm:$0xff]
        %v351 = vld [vmem:[%s1 + $0x1f4] sm:$0xf]
        %v352 = vld [vmem:[%s1 + $0x1f8] sm:$0xff]
        %v353 = vld [vmem:[%s1 + $0x200] sm:$0xf]
        %v354 = vld [vmem:[%s1 + $0x204] sm:$0xff]
        %v355 = vld [vmem:[%s1 + $0x20c] sm:$0xf]
        %v356 = vld [vmem:[%s1 + $0x210] sm:$0xff]
        %v357 = vld [vmem:[%s1 + $0x218] sm:$0xf]
        %v358 = vld [vmem:[%s1 + $0x21c] sm:$0xff]
        %v359 = vld [vmem:[%s1 + $0x224] sm:$0xf]
        %v360 = vld [vmem:[%s1 + $0x228] sm:$0xff]
        %v361 = vld [vmem:[%s1 + $0x230] sm:$0xf]
        %v362 = vld [vmem:[%s1 + $0x234] sm:$0xff]
        %v363 = vld [vmem:[%s1 + $0x23c] sm:$0xf]
        %v396 = vunpack.c.l.b16 %v284
        %v397 = vunpack.c.h.b16 %v284
        %v398 = vunpack.c.l.b16 %v285
        %v399 = vunpack.c.h.b16 %v285
        %v400 = vunpack.c.l.b16 %v286
        %v401 = vunpack.c.h.b16 %v286
        %v402 = vunpack.c.l.b16 %v287
        %v403 = vunpack.c.h.b16 %v287
        %v404 = vunpack.c.l.b16 %v288
        %v405 = vunpack.c.h.b16 %v288
        %v406 = vunpack.c.l.b16 %v289
        %v407 = vunpack.c.h.b16 %v289
        %v408 = vunpack.c.l.b16 %v290
        %v409 = vunpack.c.h.b16 %v290
        %v410 = vunpack.c.l.b16 %v291
        %v411 = vunpack.c.h.b16 %v291
        %v412 = vunpack.c.l.b16 %v292
        %v413 = vunpack.c.h.b16 %v292
        %v414 = vunpack.c.l.b16 %v293
        %v415 = vunpack.c.h.b16 %v293
        %v416 = vunpack.c.l.b16 %v294
        %v417 = vunpack.c.h.b16 %v294
        %v418 = vunpack.c.l.b16 %v295
        %v419 = vunpack.c.h.b16 %v295
        %v420 = vunpack.c.l.b16 %v296
        %v421 = vunpack.c.h.b16 %v296
        %v422 = vunpack.c.l.b16 %v297
        %v423 = vunpack.c.h.b16 %v297
        %v424 = vunpack.c.l.b16 %v298
        %v425 = vunpack.c.h.b16 %v298
        %v426 = vunpack.c.l.b16 %v299
        %v427 = vunpack.c.h.b16 %v299
        %v428 = vunpack.c.l.b16 %v300
        %v429 = vunpack.c.h.b16 %v300
        %v430 = vunpack.c.l.b16 %v301
        %v431 = vunpack.c.h.b16 %v301
        %v432 = vunpack.c.l.b16 %v302
        %v433 = vunpack.c.h.b16 %v302
        %v434 = vunpack.c.l.b16 %v303
        %v435 = vunpack.c.h.b16 %v303
        %v436 = vunpack.c.l.b16 %v304
        %v437 = vunpack.c.h.b16 %v304
        %v438 = vunpack.c.l.b16 %v305
        %v439 = vunpack.c.h.b16 %v305
        %v440 = vunpack.c.l.b16 %v306
        %v441 = vunpack.c.h.b16 %v306
        %v442 = vunpack.c.l.b16 %v307
        %v443 = vunpack.c.h.b16 %v307
        %v444 = vunpack.c.l.b16 %v308
        %v445 = vunpack.c.h.b16 %v308
        %v446 = vunpack.c.l.b16 %v309
        %v447 = vunpack.c.h.b16 %v309
        %v448 = vunpack.c.l.b16 %v310
        %v449 = vunpack.c.h.b16 %v310
        %v450 = vunpack.c.l.b16 %v311
        %v451 = vunpack.c.h.b16 %v311
        %v452 = vunpack.c.l.b16 %v312
        %v453 = vunpack.c.h.b16 %v312
        %v454 = vunpack.c.l.b16 %v313
        %v455 = vunpack.c.h.b16 %v313
        %v456 = vunpack.c.l.b16 %v314
        %v457 = vunpack.c.h.b16 %v314
        %v458 = vunpack.c.l.b16 %v315
        %v459 = vunpack.c.h.b16 %v315
        %v460 = vpack.c.b16 %v398, %v396
        %v461 = vpack.c.b16 %v399, %v397
        %v462 = vpack.c.b16 %v402, %v400
        %v463 = vpack.c.b16 %v403, %v401
        %v464 = vpack.c.b16 %v406, %v404
        %v465 = vpack.c.b16 %v407, %v405
        %v466 = vpack.c.b16 %v410, %v408
        %v467 = vpack.c.b16 %v411, %v409
        %v468 = vpack.c.b16 %v414, %v412
        %v469 = vpack.c.b16 %v415, %v413
        %v470 = vpack.c.b16 %v418, %v416
        %v471 = vpack.c.b16 %v419, %v417
        %v472 = vpack.c.b16 %v422, %v420
        %v473 = vpack.c.b16 %v423, %v421
        %v474 = vpack.c.b16 %v426, %v424
        %v475 = vpack.c.b16 %v427, %v425
        %v476 = vpack.c.b16 %v430, %v428
        %v477 = vpack.c.b16 %v431, %v429
        %v478 = vpack.c.b16 %v434, %v432
        %v479 = vpack.c.b16 %v435, %v433
        %v480 = vpack.c.b16 %v438, %v436
        %v481 = vpack.c.b16 %v439, %v437
        %v482 = vpack.c.b16 %v442, %v440
        %v483 = vpack.c.b16 %v443, %v441
        %v484 = vpack.c.b16 %v446, %v444
        %v485 = vpack.c.b16 %v447, %v445
        %v486 = vpack.c.b16 %v450, %v448
        %v487 = vpack.c.b16 %v451, %v449
        %v488 = vpack.c.b16 %v454, %v452
        %v489 = vpack.c.b16 %v455, %v453
        %v490 = vpack.c.b16 %v458, %v456
        %v491 = vpack.c.b16 %v459, %v457
        %v556 = vunpack.c.l.b16 %v316
        %v557 = vunpack.c.h.b16 %v316
        %v558 = vunpack.c.l.b16 %v317
        %v559 = vunpack.c.l.b16 %v318
        %v560 = vunpack.c.h.b16 %v318
        %v561 = vunpack.c.l.b16 %v319
        %v562 = vunpack.c.l.b16 %v320
        %v563 = vunpack.c.h.b16 %v320
        %v564 = vunpack.c.l.b16 %v321
        %v565 = vunpack.c.l.b16 %v322
        %v566 = vunpack.c.h.b16 %v322
        %v567 = vunpack.c.l.b16 %v323
        %v568 = vunpack.c.l.b16 %v324
        %v569 = vunpack.c.h.b16 %v324
        %v570 = vunpack.c.l.b16 %v325
        %v571 = vunpack.c.l.b16 %v326
        %v572 = vunpack.c.h.b16 %v326
        %v573 = vunpack.c.l.b16 %v327
        %v574 = vunpack.c.l.b16 %v328
        %v575 = vunpack.c.h.b16 %v328
        %v576 = vunpack.c.l.b16 %v329
        %v577 = vunpack.c.l.b16 %v330
        %v578 = vunpack.c.h.b16 %v330
        %v579 = vunpack.c.l.b16 %v331
        %v580 = vunpack.c.l.b16 %v332
        %v581 = vunpack.c.h.b16 %v332
        %v582 = vunpack.c.l.b16 %v333
        %v583 = vunpack.c.l.b16 %v334
        %v584 = vunpack.c.h.b16 %v334
        %v585 = vunpack.c.l.b16 %v335
        %v586 = vunpack.c.l.b16 %v336
        %v587 = vunpack.c.h.b16 %v336
        %v588 = vunpack.c.l.b16 %v337
        %v589 = vunpack.c.l.b16 %v338
        %v590 = vunpack.c.h.b16 %v338
        %v591 = vunpack.c.l.b16 %v339
        %v592 = vunpack.c.l.b16 %v340
        %v593 = vunpack.c.h.b16 %v340
        %v594 = vunpack.c.l.b16 %v341
        %v595 = vunpack.c.l.b16 %v342
        %v596 = vunpack.c.h.b16 %v342
        %v597 = vunpack.c.l.b16 %v343
        %v598 = vunpack.c.l.b16 %v344
        %v599 = vunpack.c.h.b16 %v344
        %v600 = vunpack.c.l.b16 %v345
        %v601 = vunpack.c.l.b16 %v346
        %v602 = vunpack.c.h.b16 %v346
        %v603 = vunpack.c.l.b16 %v347
        %v604 = vunpack.c.l.b16 %v348
        %v605 = vunpack.c.h.b16 %v348
        %v606 = vunpack.c.l.b16 %v349
        %v607 = vunpack.c.l.b16 %v350
        %v608 = vunpack.c.h.b16 %v350
        %v609 = vunpack.c.l.b16 %v351
        %v610 = vunpack.c.l.b16 %v352
        %v611 = vunpack.c.h.b16 %v352
        %v612 = vunpack.c.l.b16 %v353
        %v613 = vunpack.c.l.b16 %v354
        %v614 = vunpack.c.h.b16 %v354
        %v615 = vunpack.c.l.b16 %v355
        %v616 = vunpack.c.l.b16 %v356
        %v617 = vunpack.c.h.b16 %v356
        %v618 = vunpack.c.l.b16 %v357
        %v619 = vunpack.c.l.b16 %v358
        %v620 = vunpack.c.h.b16 %v358
        %v621 = vunpack.c.l.b16 %v359
        %v622 = vunpack.c.l.b16 %v360
        %v623 = vunpack.c.h.b16 %v360
        %v624 = vunpack.c.l.b16 %v361
        %v625 = vunpack.c.l.b16 %v362
        %v626 = vunpack.c.h.b16 %v362
        %v627 = vunpack.c.l.b16 %v363
        %v628 = vpack.c.b16 %v559, %v556
        %v629 = vpack.c.b16 %v560, %v557
        %v630 = vpack.c.b16 %v561, %v558
        %v631 = vpack.c.b16 %v565, %v562
        %v632 = vpack.c.b16 %v566, %v563
        %v633 = vpack.c.b16 %v567, %v564
        %v634 = vpack.c.b16 %v571, %v568
        %v635 = vpack.c.b16 %v572, %v569
        %v636 = vpack.c.b16 %v573, %v570
        %v637 = vpack.c.b16 %v577, %v574
        %v638 = vpack.c.b16 %v578, %v575
        %v639 = vpack.c.b16 %v579, %v576
        %v640 = vpack.c.b16 %v583, %v580
        %v641 = vpack.c.b16 %v584, %v581
        %v642 = vpack.c.b16 %v585, %v582
        %v643 = vpack.c.b16 %v589, %v586
        %v644 = vpack.c.b16 %v590, %v587
        %v645 = vpack.c.b16 %v591, %v588
        %v646 = vpack.c.b16 %v595, %v592
        %v647 = vpack.c.b16 %v596, %v593
        %v648 = vpack.c.b16 %v597, %v594
        %v649 = vpack.c.b16 %v601, %v598
        %v650 = vpack.c.b16 %v602, %v599
        %v651 = vpack.c.b16 %v603, %v600
        %v652 = vpack.c.b16 %v607, %v604
        %v653 = vpack.c.b16 %v608, %v605
        %v654 = vpack.c.b16 %v609, %v606
        %v655 = vpack.c.b16 %v613, %v610
        %v656 = vpack.c.b16 %v614, %v611
        %v657 = vpack.c.b16 %v615, %v612
        %v658 = vpack.c.b16 %v619, %v616
        %v659 = vpack.c.b16 %v620, %v617
        %v660 = vpack.c.b16 %v621, %v618
        %v661 = vpack.c.b16 %v625, %v622
        %v662 = vpack.c.b16 %v626, %v623
        %v663 = vpack.c.b16 %v627, %v624
        %vm700 = vcmask 523264
        %v702 = vsel %vm700, %v461, 0
        %v705 = vsel %vm700, %v463, 0
        %v708 = vsel %vm700, %v465, 0
        %v711 = vsel %vm700, %v467, 0
        %v714 = vsel %vm700, %v469, 0
        %v717 = vsel %vm700, %v471, 0
        %v720 = vsel %vm700, %v473, 0
        %v723 = vsel %vm700, %v475, 0
        %v726 = vsel %vm700, %v477, 0
        %v729 = vsel %vm700, %v479, 0
        %v732 = vsel %vm700, %v481, 0
        %v735 = vsel %vm700, %v483, 0
        %v738 = vsel %vm700, %v485, 0
        %v741 = vsel %vm700, %v487, 0
        %v744 = vsel %vm700, %v489, 0
        %v747 = vsel %vm700, %v491, 0
        %749 = vmatprep.subr.bf16.mxu0 %v650
        %750 = vmatpush1.bf16.msra.mxu0 %v649
        %751 = vmatprep.subr.bf16.mxu0 %v647
        %752 = vmatpush1.bf16.msra.mxu0 %v646
        %753 = vmatprep.subr.bf16.mxu0 %v644
        %754 = vmatpush1.bf16.msra.mxu0 %v643
        %755 = vmatprep.subr.bf16.mxu0 %v641
        %756 = vmatpush1.bf16.msra.mxu0 %v640
        %757 = vmatprep.subr.bf16.mxu0 %v638
        %758 = vmatpush1.bf16.msra.mxu0 %v637
        %759 = vmatprep.subr.bf16.mxu0 %v635
        %760 = vmatpush1.bf16.msra.mxu0 %v634
        %761 = vmatprep.subr.bf16.mxu0 %v632
        %762 = vmatpush1.bf16.msra.mxu0 %v631
        %763 = vmatprep.subr.bf16.mxu0 %v629
        %764 = vmatpush1.bf16.msra.mxu0 %v628
        %765 = vmatprep.subr.bf16.mxu0 0
        %766 = vmatpush2.bf16.msra.mxu0 0
        %767 = vmatprep.subr.bf16.mxu0 0
        %768 = vmatpush2.bf16.msra.mxu0 0
        %769 = vmatprep.subr.bf16.mxu0 0
        %770 = vmatpush2.bf16.msra.mxu0 0
        %771 = vmatprep.subr.bf16.mxu0 0
        %772 = vmatpush2.bf16.msra.mxu0 0
        %773 = vmatprep.subr.bf16.mxu0 %v662
        %774 = vmatpush2.bf16.msra.mxu0 %v661
        %775 = vmatprep.subr.bf16.mxu0 %v659
        %776 = vmatpush2.bf16.msra.mxu0 %v658
        %777 = vmatprep.subr.bf16.mxu0 %v656
        %778 = vmatpush2.bf16.msra.mxu0 %v655
        %779 = vmatprep.subr.bf16.mxu0 %v653
        %780 = vmatpush2.bf16.msra.mxu0 %v652
        %781 = vmatprep.mubr.bf16.mxu0 %v702
        %782 = vmatmul.mubr.bf16.gmra.mxu0 %v460
        %v783 = vpop.f32.mrf.mxu0
        %v784 = vadd.f32 0.0, %v783
        %v785 = vpop.f32.mrf.mxu0
        %v786 = vadd.f32 0.0, %v785
        %v787 = vpop.f32.mrf.mxu0
        %v788 = vadd.f32 0.0, %v787
        %v789 = vpop.f32.mrf.mxu0
        %v790 = vadd.f32 0.0, %v789
        %791 = vmatprep.mubr.bf16.mxu0 %v705
        %792 = vmatmul.mubr.bf16.gmra.mxu0 %v462
        %v793 = vpop.f32.mrf.mxu0
        %v794 = vadd.f32 0.0, %v793
        %v795 = vpop.f32.mrf.mxu0
        %v796 = vadd.f32 0.0, %v795
        %v797 = vpop.f32.mrf.mxu0
        %v798 = vadd.f32 0.0, %v797
        %v799 = vpop.f32.mrf.mxu0
        %v800 = vadd.f32 0.0, %v799
        %801 = vmatprep.mubr.bf16.mxu0 %v708
        %802 = vmatmul.mubr.bf16.gmra.mxu0 %v464
        %v803 = vpop.f32.mrf.mxu0
        %v804 = vadd.f32 0.0, %v803
        %v805 = vpop.f32.mrf.mxu0
        %v806 = vadd.f32 0.0, %v805
        %v807 = vpop.f32.mrf.mxu0
        %v808 = vadd.f32 0.0, %v807
        %v809 = vpop.f32.mrf.mxu0
        %v810 = vadd.f32 0.0, %v809
        %811 = vmatprep.mubr.bf16.mxu0 %v711
        %812 = vmatmul.mubr.bf16.gmra.mxu0 %v466
        %v813 = vpop.f32.mrf.mxu0
        %v814 = vadd.f32 0.0, %v813
        %v815 = vpop.f32.mrf.mxu0
        %v816 = vadd.f32 0.0, %v815
        %v817 = vpop.f32.mrf.mxu0
        %v818 = vadd.f32 0.0, %v817
        %v819 = vpop.f32.mrf.mxu0
        %v820 = vadd.f32 0.0, %v819
        %821 = vmatprep.mubr.bf16.mxu0 %v714
        %822 = vmatmul.mubr.bf16.gmra.mxu0 %v468
        %v823 = vpop.f32.mrf.mxu0
        %v824 = vadd.f32 0.0, %v823
        %v825 = vpop.f32.mrf.mxu0
        %v826 = vadd.f32 0.0, %v825
        %v827 = vpop.f32.mrf.mxu0
        %v828 = vadd.f32 0.0, %v827
        %v829 = vpop.f32.mrf.mxu0
        %v830 = vadd.f32 0.0, %v829
        %831 = vmatprep.mubr.bf16.mxu0 %v717
        %832 = vmatmul.mubr.bf16.gmra.mxu0 %v470
        %v833 = vpop.f32.mrf.mxu0
        %v834 = vadd.f32 0.0, %v833
        %v835 = vpop.f32.mrf.mxu0
        %v836 = vadd.f32 0.0, %v835
        %v837 = vpop.f32.mrf.mxu0
        %v838 = vadd.f32 0.0, %v837
        %v839 = vpop.f32.mrf.mxu0
        %v840 = vadd.f32 0.0, %v839
        %841 = vmatprep.mubr.bf16.mxu0 %v720
        %842 = vmatmul.mubr.bf16.gmra.mxu0 %v472
        %v843 = vpop.f32.mrf.mxu0
        %v844 = vadd.f32 0.0, %v843
        %v845 = vpop.f32.mrf.mxu0
        %v846 = vadd.f32 0.0, %v845
        %v847 = vpop.f32.mrf.mxu0
        %v848 = vadd.f32 0.0, %v847
        %v849 = vpop.f32.mrf.mxu0
        %v850 = vadd.f32 0.0, %v849
        %851 = vmatprep.mubr.bf16.mxu0 %v723
        %852 = vmatmul.mubr.bf16.gmra.mxu0 %v474
        %v853 = vpop.f32.mrf.mxu0
        %v854 = vadd.f32 0.0, %v853
        %v855 = vpop.f32.mrf.mxu0
        %v856 = vadd.f32 0.0, %v855
        %v857 = vpop.f32.mrf.mxu0
        %v858 = vadd.f32 0.0, %v857
        %v859 = vpop.f32.mrf.mxu0
        %v860 = vadd.f32 0.0, %v859
        %861 = vmatprep.mubr.bf16.mxu0 %v726
        %862 = vmatmul.mubr.bf16.gmra.mxu0 %v476
        %v863 = vpop.f32.mrf.mxu0
        %v864 = vadd.f32 0.0, %v863
        %v865 = vpop.f32.mrf.mxu0
        %v866 = vadd.f32 0.0, %v865
        %v867 = vpop.f32.mrf.mxu0
        %v868 = vadd.f32 0.0, %v867
        %v869 = vpop.f32.mrf.mxu0
        %v870 = vadd.f32 0.0, %v869
        %871 = vmatprep.mubr.bf16.mxu0 %v729
        %872 = vmatmul.mubr.bf16.gmra.mxu0 %v478
        %v873 = vpop.f32.mrf.mxu0
        %v874 = vadd.f32 0.0, %v873
        %v875 = vpop.f32.mrf.mxu0
        %v876 = vadd.f32 0.0, %v875
        %v877 = vpop.f32.mrf.mxu0
        %v878 = vadd.f32 0.0, %v877
        %v879 = vpop.f32.mrf.mxu0
        %v880 = vadd.f32 0.0, %v879
        %881 = vmatprep.mubr.bf16.mxu0 %v732
        %882 = vmatmul.mubr.bf16.gmra.mxu0 %v480
        %v883 = vpop.f32.mrf.mxu0
        %v884 = vadd.f32 0.0, %v883
        %v885 = vpop.f32.mrf.mxu0
        %v886 = vadd.f32 0.0, %v885
        %v887 = vpop.f32.mrf.mxu0
        %v888 = vadd.f32 0.0, %v887
        %v889 = vpop.f32.mrf.mxu0
        %v890 = vadd.f32 0.0, %v889
        %891 = vmatprep.mubr.bf16.mxu0 %v735
        %892 = vmatmul.mubr.bf16.gmra.mxu0 %v482
        %v893 = vpop.f32.mrf.mxu0
        %v894 = vadd.f32 0.0, %v893
        %v895 = vpop.f32.mrf.mxu0
        %v896 = vadd.f32 0.0, %v895
        %v897 = vpop.f32.mrf.mxu0
        %v898 = vadd.f32 0.0, %v897
        %v899 = vpop.f32.mrf.mxu0
        %v900 = vadd.f32 0.0, %v899
        %901 = vmatprep.mubr.bf16.mxu0 %v738
        %902 = vmatmul.mubr.bf16.gmra.mxu0 %v484
        %v903 = vpop.f32.mrf.mxu0
        %v904 = vadd.f32 0.0, %v903
        %v905 = vpop.f32.mrf.mxu0
        %v906 = vadd.f32 0.0, %v905
        %v907 = vpop.f32.mrf.mxu0
        %v908 = vadd.f32 0.0, %v907
        %v909 = vpop.f32.mrf.mxu0
        %v910 = vadd.f32 0.0, %v909
        %911 = vmatprep.mubr.bf16.mxu0 %v741
        %912 = vmatmul.mubr.bf16.gmra.mxu0 %v486
        %v913 = vpop.f32.mrf.mxu0
        %v914 = vadd.f32 0.0, %v913
        %v915 = vpop.f32.mrf.mxu0
        %v916 = vadd.f32 0.0, %v915
        %v917 = vpop.f32.mrf.mxu0
        %v918 = vadd.f32 0.0, %v917
        %v919 = vpop.f32.mrf.mxu0
        %v920 = vadd.f32 0.0, %v919
        %921 = vmatprep.mubr.bf16.mxu0 %v744
        %922 = vmatmul.mubr.bf16.gmra.mxu0 %v488
        %v923 = vpop.f32.mrf.mxu0
        %v924 = vadd.f32 0.0, %v923
        %v925 = vpop.f32.mrf.mxu0
        %v926 = vadd.f32 0.0, %v925
        %v927 = vpop.f32.mrf.mxu0
        %v928 = vadd.f32 0.0, %v927
        %v929 = vpop.f32.mrf.mxu0
        %v930 = vadd.f32 0.0, %v929
        %931 = vmatprep.mubr.bf16.mxu0 %v747
        %932 = vmatmul.mubr.bf16.gmra.mxu0 %v490
        %v933 = vpop.f32.mrf.mxu0
        %v934 = vadd.f32 0.0, %v933
        %v935 = vpop.f32.mrf.mxu0
        %v936 = vadd.f32 0.0, %v935
        %v937 = vpop.f32.mrf.mxu0
        %v938 = vadd.f32 0.0, %v937
        %v939 = vpop.f32.mrf.mxu0
        %v940 = vadd.f32 0.0, %v939
        %941 = vdwg.mxu0
        %942 = vmatprep.subr.bf16.mxu0 0
        %943 = vmatpush1.bf16.msra.mxu0 %v651
        %944 = vmatprep.subr.bf16.mxu0 0
        %945 = vmatpush1.bf16.msra.mxu0 %v648
        %946 = vmatprep.subr.bf16.mxu0 0
        %947 = vmatpush1.bf16.msra.mxu0 %v645
        %948 = vmatprep.subr.bf16.mxu0 0
        %949 = vmatpush1.bf16.msra.mxu0 %v642
        %950 = vmatprep.subr.bf16.mxu0 0
        %951 = vmatpush1.bf16.msra.mxu0 %v639
        %952 = vmatprep.subr.bf16.mxu0 0
        %953 = vmatpush1.bf16.msra.mxu0 %v636
        %954 = vmatprep.subr.bf16.mxu0 0
        %955 = vmatpush1.bf16.msra.mxu0 %v633
        %956 = vmatprep.subr.bf16.mxu0 0
        %957 = vmatpush1.bf16.msra.mxu0 %v630
        %958 = vmatprep.subr.bf16.mxu0 0
        %959 = vmatpush2.bf16.msra.mxu0 0
        %960 = vmatprep.subr.bf16.mxu0 0
        %961 = vmatpush2.bf16.msra.mxu0 0
        %962 = vmatprep.subr.bf16.mxu0 0
        %963 = vmatpush2.bf16.msra.mxu0 0
        %964 = vmatprep.subr.bf16.mxu0 0
        %965 = vmatpush2.bf16.msra.mxu0 0
        %966 = vmatprep.subr.bf16.mxu0 0
        %967 = vmatpush2.bf16.msra.mxu0 %v663
        %968 = vmatprep.subr.bf16.mxu0 0
        %969 = vmatpush2.bf16.msra.mxu0 %v660
        %970 = vmatprep.subr.bf16.mxu0 0
        %971 = vmatpush2.bf16.msra.mxu0 %v657
        %972 = vmatprep.subr.bf16.mxu0 0
        %973 = vmatpush2.bf16.msra.mxu0 %v654
        %974 = vmatprep.mubr.bf16.mxu0 %v702
        %975 = vmatmul.mubr.bf16.gmra.mxu0 %v460
        %v976 = vpop.f32.mrf.mxu0
        %v977 = vadd.f32 0.0, %v976
        %v978 = vpop.f32.mrf.mxu0
        %v979 = vpop.f32.mrf.mxu0
        %v980 = vadd.f32 0.0, %v979
        %v981 = vpop.f32.mrf.mxu0
        %982 = vmatprep.mubr.bf16.mxu0 %v705
        %983 = vmatmul.mubr.bf16.gmra.mxu0 %v462
        %v984 = vpop.f32.mrf.mxu0
        %v985 = vadd.f32 0.0, %v984
        %v986 = vpop.f32.mrf.mxu0
        %v987 = vpop.f32.mrf.mxu0
        %v988 = vadd.f32 0.0, %v987
        %v989 = vpop.f32.mrf.mxu0
        %990 = vmatprep.mubr.bf16.mxu0 %v708
        %991 = vmatmul.mubr.bf16.gmra.mxu0 %v464
        %v992 = vpop.f32.mrf.mxu0
        %v993 = vadd.f32 0.0, %v992
        %v994 = vpop.f32.mrf.mxu0
        %v995 = vpop.f32.mrf.mxu0
        %v996 = vadd.f32 0.0, %v995
        %v997 = vpop.f32.mrf.mxu0
        %998 = vmatprep.mubr.bf16.mxu0 %v711
        %999 = vmatmul.mubr.bf16.gmra.mxu0 %v466
        %v1000 = vpop.f32.mrf.mxu0
        %v1001 = vadd.f32 0.0, %v1000
        %v1002 = vpop.f32.mrf.mxu0
        %v1003 = vpop.f32.mrf.mxu0
        %v1004 = vadd.f32 0.0, %v1003
        %v1005 = vpop.f32.mrf.mxu0
        %1006 = vmatprep.mubr.bf16.mxu0 %v714
        %1007 = vmatmul.mubr.bf16.gmra.mxu0 %v468
        %v1008 = vpop.f32.mrf.mxu0
        %v1009 = vadd.f32 0.0, %v1008
        %v1010 = vpop.f32.mrf.mxu0
        %v1011 = vpop.f32.mrf.mxu0
        %v1012 = vadd.f32 0.0, %v1011
        %v1013 = vpop.f32.mrf.mxu0
        %1014 = vmatprep.mubr.bf16.mxu0 %v717
        %1015 = vmatmul.mubr.bf16.gmra.mxu0 %v470
        %v1016 = vpop.f32.mrf.mxu0
        %v1017 = vadd.f32 0.0, %v1016
        %v1018 = vpop.f32.mrf.mxu0
        %v1019 = vpop.f32.mrf.mxu0
        %v1020 = vadd.f32 0.0, %v1019
        %v1021 = vpop.f32.mrf.mxu0
        %1022 = vmatprep.mubr.bf16.mxu0 %v720
        %1023 = vmatmul.mubr.bf16.gmra.mxu0 %v472
        %v1024 = vpop.f32.mrf.mxu0
        %v1025 = vadd.f32 0.0, %v1024
        %v1026 = vpop.f32.mrf.mxu0
        %v1027 = vpop.f32.mrf.mxu0
        %v1028 = vadd.f32 0.0, %v1027
        %v1029 = vpop.f32.mrf.mxu0
        %1030 = vmatprep.mubr.bf16.mxu0 %v723
        %1031 = vmatmul.mubr.bf16.gmra.mxu0 %v474
        %v1032 = vpop.f32.mrf.mxu0
        %v1033 = vadd.f32 0.0, %v1032
        %v1034 = vpop.f32.mrf.mxu0
        %v1035 = vpop.f32.mrf.mxu0
        %v1036 = vadd.f32 0.0, %v1035
        %v1037 = vpop.f32.mrf.mxu0
        %1038 = vmatprep.mubr.bf16.mxu0 %v726
        %1039 = vmatmul.mubr.bf16.gmra.mxu0 %v476
        %v1040 = vpop.f32.mrf.mxu0
        %v1041 = vadd.f32 0.0, %v1040
        %v1042 = vpop.f32.mrf.mxu0
        %v1043 = vpop.f32.mrf.mxu0
        %v1044 = vadd.f32 0.0, %v1043
        %v1045 = vpop.f32.mrf.mxu0
        %1046 = vmatprep.mubr.bf16.mxu0 %v729
        %1047 = vmatmul.mubr.bf16.gmra.mxu0 %v478
        %v1048 = vpop.f32.mrf.mxu0
        %v1049 = vadd.f32 0.0, %v1048
        %v1050 = vpop.f32.mrf.mxu0
        %v1051 = vpop.f32.mrf.mxu0
        %v1052 = vadd.f32 0.0, %v1051
        %v1053 = vpop.f32.mrf.mxu0
        %1054 = vmatprep.mubr.bf16.mxu0 %v732
        %1055 = vmatmul.mubr.bf16.gmra.mxu0 %v480
        %v1056 = vpop.f32.mrf.mxu0
        %v1057 = vadd.f32 0.0, %v1056
        %v1058 = vpop.f32.mrf.mxu0
        %v1059 = vpop.f32.mrf.mxu0
        %v1060 = vadd.f32 0.0, %v1059
        %v1061 = vpop.f32.mrf.mxu0
        %1062 = vmatprep.mubr.bf16.mxu0 %v735
        %1063 = vmatmul.mubr.bf16.gmra.mxu0 %v482
        %v1064 = vpop.f32.mrf.mxu0
        %v1065 = vadd.f32 0.0, %v1064
        %v1066 = vpop.f32.mrf.mxu0
        %v1067 = vpop.f32.mrf.mxu0
        %v1068 = vadd.f32 0.0, %v1067
        %v1069 = vpop.f32.mrf.mxu0
        %1070 = vmatprep.mubr.bf16.mxu0 %v738
        %1071 = vmatmul.mubr.bf16.gmra.mxu0 %v484
        %v1072 = vpop.f32.mrf.mxu0
        %v1073 = vadd.f32 0.0, %v1072
        %v1074 = vpop.f32.mrf.mxu0
        %v1075 = vpop.f32.mrf.mxu0
        %v1076 = vadd.f32 0.0, %v1075
        %v1077 = vpop.f32.mrf.mxu0
        %1078 = vmatprep.mubr.bf16.mxu0 %v741
        %1079 = vmatmul.mubr.bf16.gmra.mxu0 %v486
        %v1080 = vpop.f32.mrf.mxu0
        %v1081 = vadd.f32 0.0, %v1080
        %v1082 = vpop.f32.mrf.mxu0
        %v1083 = vpop.f32.mrf.mxu0
        %v1084 = vadd.f32 0.0, %v1083
        %v1085 = vpop.f32.mrf.mxu0
        %1086 = vmatprep.mubr.bf16.mxu0 %v744
        %1087 = vmatmul.mubr.bf16.gmra.mxu0 %v488
        %v1088 = vpop.f32.mrf.mxu0
        %v1089 = vadd.f32 0.0, %v1088
        %v1090 = vpop.f32.mrf.mxu0
        %v1091 = vpop.f32.mrf.mxu0
        %v1092 = vadd.f32 0.0, %v1091
        %v1093 = vpop.f32.mrf.mxu0
        %1094 = vmatprep.mubr.bf16.mxu0 %v747
        %1095 = vmatmul.mubr.bf16.gmra.mxu0 %v490
        %v1096 = vpop.f32.mrf.mxu0
        %v1097 = vadd.f32 0.0, %v1096
        %v1098 = vpop.f32.mrf.mxu0
        %v1099 = vpop.f32.mrf.mxu0
        %v1100 = vadd.f32 0.0, %v1099
        %v1101 = vpop.f32.mrf.mxu0
        %1102 = vdwg.mxu0
        %v1135 = vunpack.c.l.b16 %v203
        %v1136 = vunpack.c.h.b16 %v203
        %v1137 = vunpack.c.l.b16 %v204
        %v1138 = vunpack.c.h.b16 %v204
        %v1139 = vunpack.c.l.b16 %v205
        %v1140 = vunpack.c.h.b16 %v205
        %v1141 = vunpack.c.l.b16 %v206
        %v1142 = vunpack.c.h.b16 %v206
        %v1143 = vunpack.c.l.b16 %v207
        %v1144 = vunpack.c.h.b16 %v207
        %v1145 = vunpack.c.l.b16 %v208
        %v1146 = vunpack.c.h.b16 %v208
        %v1147 = vunpack.c.l.b16 %v209
        %v1148 = vunpack.c.h.b16 %v209
        %v1149 = vunpack.c.l.b16 %v210
        %v1150 = vunpack.c.h.b16 %v210
        %v1151 = vunpack.c.l.b16 %v211
        %v1152 = vunpack.c.h.b16 %v211
        %v1153 = vunpack.c.l.b16 %v212
        %v1154 = vunpack.c.h.b16 %v212
        %v1155 = vunpack.c.l.b16 %v213
        %v1156 = vunpack.c.h.b16 %v213
        %v1157 = vunpack.c.l.b16 %v214
        %v1158 = vunpack.c.h.b16 %v214
        %v1159 = vunpack.c.l.b16 %v215
        %v1160 = vunpack.c.h.b16 %v215
        %v1161 = vunpack.c.l.b16 %v216
        %v1162 = vunpack.c.h.b16 %v216
        %v1163 = vunpack.c.l.b16 %v217
        %v1164 = vunpack.c.h.b16 %v217
        %v1165 = vunpack.c.l.b16 %v218
        %v1166 = vunpack.c.h.b16 %v218
        %v1167 = vunpack.c.l.b16 %v219
        %v1168 = vunpack.c.h.b16 %v219
        %v1169 = vunpack.c.l.b16 %v220
        %v1170 = vunpack.c.h.b16 %v220
        %v1171 = vunpack.c.l.b16 %v221
        %v1172 = vunpack.c.h.b16 %v221
        %v1173 = vunpack.c.l.b16 %v222
        %v1174 = vunpack.c.h.b16 %v222
        %v1175 = vunpack.c.l.b16 %v223
        %v1176 = vunpack.c.h.b16 %v223
        %v1177 = vunpack.c.l.b16 %v224
        %v1178 = vunpack.c.h.b16 %v224
        %v1179 = vunpack.c.l.b16 %v225
        %v1180 = vunpack.c.h.b16 %v225
        %v1181 = vunpack.c.l.b16 %v226
        %v1182 = vunpack.c.h.b16 %v226
        %v1183 = vunpack.c.l.b16 %v227
        %v1184 = vunpack.c.h.b16 %v227
        %v1185 = vunpack.c.l.b16 %v228
        %v1186 = vunpack.c.h.b16 %v228
        %v1187 = vunpack.c.l.b16 %v229
        %v1188 = vunpack.c.h.b16 %v229
        %v1189 = vunpack.c.l.b16 %v230
        %v1190 = vunpack.c.h.b16 %v230
        %v1191 = vunpack.c.l.b16 %v231
        %v1192 = vunpack.c.h.b16 %v231
        %v1193 = vunpack.c.l.b16 %v232
        %v1194 = vunpack.c.h.b16 %v232
        %v1195 = vunpack.c.l.b16 %v233
        %v1196 = vunpack.c.h.b16 %v233
        %v1197 = vunpack.c.l.b16 %v234
        %v1198 = vunpack.c.h.b16 %v234
        %v1199 = vpack.c.b16 %v1137, %v1135
        %v1200 = vpack.c.b16 %v1138, %v1136
        %v1201 = vpack.c.b16 %v1141, %v1139
        %v1202 = vpack.c.b16 %v1142, %v1140
        %v1203 = vpack.c.b16 %v1145, %v1143
        %v1204 = vpack.c.b16 %v1146, %v1144
        %v1205 = vpack.c.b16 %v1149, %v1147
        %v1206 = vpack.c.b16 %v1150, %v1148
        %v1207 = vpack.c.b16 %v1153, %v1151
        %v1208 = vpack.c.b16 %v1154, %v1152
        %v1209 = vpack.c.b16 %v1157, %v1155
        %v1210 = vpack.c.b16 %v1158, %v1156
        %v1211 = vpack.c.b16 %v1161, %v1159
        %v1212 = vpack.c.b16 %v1162, %v1160
        %v1213 = vpack.c.b16 %v1165, %v1163
        %v1214 = vpack.c.b16 %v1166, %v1164
        %v1215 = vpack.c.b16 %v1169, %v1167
        %v1216 = vpack.c.b16 %v1170, %v1168
        %v1217 = vpack.c.b16 %v1173, %v1171
        %v1218 = vpack.c.b16 %v1174, %v1172
        %v1219 = vpack.c.b16 %v1177, %v1175
        %v1220 = vpack.c.b16 %v1178, %v1176
        %v1221 = vpack.c.b16 %v1181, %v1179
        %v1222 = vpack.c.b16 %v1182, %v1180
        %v1223 = vpack.c.b16 %v1185, %v1183
        %v1224 = vpack.c.b16 %v1186, %v1184
        %v1225 = vpack.c.b16 %v1189, %v1187
        %v1226 = vpack.c.b16 %v1190, %v1188
        %v1227 = vpack.c.b16 %v1193, %v1191
        %v1228 = vpack.c.b16 %v1194, %v1192
        %v1229 = vpack.c.b16 %v1197, %v1195
        %v1230 = vpack.c.b16 %v1198, %v1196
        %v1295 = vunpack.c.l.b16 %v235
        %v1296 = vunpack.c.h.b16 %v235
        %v1297 = vunpack.c.l.b16 %v236
        %v1298 = vunpack.c.l.b16 %v237
        %v1299 = vunpack.c.h.b16 %v237
        %v1300 = vunpack.c.l.b16 %v238
        %v1301 = vunpack.c.l.b16 %v239
        %v1302 = vunpack.c.h.b16 %v239
        %v1303 = vunpack.c.l.b16 %v240
        %v1304 = vunpack.c.l.b16 %v241
        %v1305 = vunpack.c.h.b16 %v241
        %v1306 = vunpack.c.l.b16 %v242
        %v1307 = vunpack.c.l.b16 %v243
        %v1308 = vunpack.c.h.b16 %v243
        %v1309 = vunpack.c.l.b16 %v244
        %v1310 = vunpack.c.l.b16 %v245
        %v1311 = vunpack.c.h.b16 %v245
        %v1312 = vunpack.c.l.b16 %v246
        %v1313 = vunpack.c.l.b16 %v247
        %v1314 = vunpack.c.h.b16 %v247
        %v1315 = vunpack.c.l.b16 %v248
        %v1316 = vunpack.c.l.b16 %v249
        %v1317 = vunpack.c.h.b16 %v249
        %v1318 = vunpack.c.l.b16 %v250
        %v1319 = vunpack.c.l.b16 %v251
        %v1320 = vunpack.c.h.b16 %v251
        %v1321 = vunpack.c.l.b16 %v252
        %v1322 = vunpack.c.l.b16 %v253
        %v1323 = vunpack.c.h.b16 %v253
        %v1324 = vunpack.c.l.b16 %v254
        %v1325 = vunpack.c.l.b16 %v255
        %v1326 = vunpack.c.h.b16 %v255
        %v1327 = vunpack.c.l.b16 %v256
        %v1328 = vunpack.c.l.b16 %v257
        %v1329 = vunpack.c.h.b16 %v257
        %v1330 = vunpack.c.l.b16 %v258
        %v1331 = vunpack.c.l.b16 %v259
        %v1332 = vunpack.c.h.b16 %v259
        %v1333 = vunpack.c.l.b16 %v260
        %v1334 = vunpack.c.l.b16 %v261
        %v1335 = vunpack.c.h.b16 %v261
        %v1336 = vunpack.c.l.b16 %v262
        %v1337 = vunpack.c.l.b16 %v263
        %v1338 = vunpack.c.h.b16 %v263
        %v1339 = vunpack.c.l.b16 %v264
        %v1340 = vunpack.c.l.b16 %v265
        %v1341 = vunpack.c.h.b16 %v265
        %v1342 = vunpack.c.l.b16 %v266
        %v1343 = vunpack.c.l.b16 %v267
        %v1344 = vunpack.c.h.b16 %v267
        %v1345 = vunpack.c.l.b16 %v268
        %v1346 = vunpack.c.l.b16 %v269
        %v1347 = vunpack.c.h.b16 %v269
        %v1348 = vunpack.c.l.b16 %v270
        %v1349 = vunpack.c.l.b16 %v271
        %v1350 = vunpack.c.h.b16 %v271
        %v1351 = vunpack.c.l.b16 %v272
        %v1352 = vunpack.c.l.b16 %v273
        %v1353 = vunpack.c.h.b16 %v273
        %v1354 = vunpack.c.l.b16 %v274
        %v1355 = vunpack.c.l.b16 %v275
        %v1356 = vunpack.c.h.b16 %v275
        %v1357 = vunpack.c.l.b16 %v276
        %v1358 = vunpack.c.l.b16 %v277
        %v1359 = vunpack.c.h.b16 %v277
        %v1360 = vunpack.c.l.b16 %v278
        %v1361 = vunpack.c.l.b16 %v279
        %v1362 = vunpack.c.h.b16 %v279
        %v1363 = vunpack.c.l.b16 %v280
        %v1364 = vunpack.c.l.b16 %v281
        %v1365 = vunpack.c.h.b16 %v281
        %v1366 = vunpack.c.l.b16 %v282
        %v1367 = vpack.c.b16 %v1298, %v1295
        %v1368 = vpack.c.b16 %v1299, %v1296
        %v1369 = vpack.c.b16 %v1300, %v1297
        %v1370 = vpack.c.b16 %v1304, %v1301
        %v1371 = vpack.c.b16 %v1305, %v1302
        %v1372 = vpack.c.b16 %v1306, %v1303
        %v1373 = vpack.c.b16 %v1310, %v1307
        %v1374 = vpack.c.b16 %v1311, %v1308
        %v1375 = vpack.c.b16 %v1312, %v1309
        %v1376 = vpack.c.b16 %v1316, %v1313
        %v1377 = vpack.c.b16 %v1317, %v1314
        %v1378 = vpack.c.b16 %v1318, %v1315
        %v1379 = vpack.c.b16 %v1322, %v1319
        %v1380 = vpack.c.b16 %v1323, %v1320
        %v1381 = vpack.c.b16 %v1324, %v1321
        %v1382 = vpack.c.b16 %v1328, %v1325
        %v1383 = vpack.c.b16 %v1329, %v1326
        %v1384 = vpack.c.b16 %v1330, %v1327
        %v1385 = vpack.c.b16 %v1334, %v1331
        %v1386 = vpack.c.b16 %v1335, %v1332
        %v1387 = vpack.c.b16 %v1336, %v1333
        %v1388 = vpack.c.b16 %v1340, %v1337
        %v1389 = vpack.c.b16 %v1341, %v1338
        %v1390 = vpack.c.b16 %v1342, %v1339
        %v1391 = vpack.c.b16 %v1346, %v1343
        %v1392 = vpack.c.b16 %v1347, %v1344
        %v1393 = vpack.c.b16 %v1348, %v1345
        %v1394 = vpack.c.b16 %v1352, %v1349
        %v1395 = vpack.c.b16 %v1353, %v1350
        %v1396 = vpack.c.b16 %v1354, %v1351
        %v1397 = vpack.c.b16 %v1358, %v1355
        %v1398 = vpack.c.b16 %v1359, %v1356
        %v1399 = vpack.c.b16 %v1360, %v1357
        %v1400 = vpack.c.b16 %v1364, %v1361
        %v1401 = vpack.c.b16 %v1365, %v1362
        %v1402 = vpack.c.b16 %v1366, %v1363
        %v1440 = vsel %vm700, %v1200, 0
        %v1443 = vsel %vm700, %v1202, 0
        %v1446 = vsel %vm700, %v1204, 0
        %v1449 = vsel %vm700, %v1206, 0
        %v1452 = vsel %vm700, %v1208, 0
        %v1455 = vsel %vm700, %v1210, 0
        %v1458 = vsel %vm700, %v1212, 0
        %v1461 = vsel %vm700, %v1214, 0
        %v1464 = vsel %vm700, %v1216, 0
        %v1467 = vsel %vm700, %v1218, 0
        %v1470 = vsel %vm700, %v1220, 0
        %v1473 = vsel %vm700, %v1222, 0
        %v1476 = vsel %vm700, %v1224, 0
        %v1479 = vsel %vm700, %v1226, 0
        %v1482 = vsel %vm700, %v1228, 0
        %v1485 = vsel %vm700, %v1230, 0
        %1487 = vmatprep.subr.bf16.mxu0 %v1389
        %1488 = vmatpush1.bf16.msra.mxu0 %v1388
        %1489 = vmatprep.subr.bf16.mxu0 %v1386
        %1490 = vmatpush1.bf16.msra.mxu0 %v1385
        %1491 = vmatprep.subr.bf16.mxu0 %v1383
        %1492 = vmatpush1.bf16.msra.mxu0 %v1382
        %1493 = vmatprep.subr.bf16.mxu0 %v1380
        %1494 = vmatpush1.bf16.msra.mxu0 %v1379
        %1495 = vmatprep.subr.bf16.mxu0 %v1377
        %1496 = vmatpush1.bf16.msra.mxu0 %v1376
        %1497 = vmatprep.subr.bf16.mxu0 %v1374
        %1498 = vmatpush1.bf16.msra.mxu0 %v1373
        %1499 = vmatprep.subr.bf16.mxu0 %v1371
        %1500 = vmatpush1.bf16.msra.mxu0 %v1370
        %1501 = vmatprep.subr.bf16.mxu0 %v1368
        %1502 = vmatpush1.bf16.msra.mxu0 %v1367
        %1503 = vmatprep.subr.bf16.mxu0 0
        %1504 = vmatpush2.bf16.msra.mxu0 0
        %1505 = vmatprep.subr.bf16.mxu0 0
        %1506 = vmatpush2.bf16.msra.mxu0 0
        %1507 = vmatprep.subr.bf16.mxu0 0
        %1508 = vmatpush2.bf16.msra.mxu0 0
        %1509 = vmatprep.subr.bf16.mxu0 0
        %1510 = vmatpush2.bf16.msra.mxu0 0
        %1511 = vmatprep.subr.bf16.mxu0 %v1401
        %1512 = vmatpush2.bf16.msra.mxu0 %v1400
        %1513 = vmatprep.subr.bf16.mxu0 %v1398
        %1514 = vmatpush2.bf16.msra.mxu0 %v1397
        %1515 = vmatprep.subr.bf16.mxu0 %v1395
        %1516 = vmatpush2.bf16.msra.mxu0 %v1394
        %1517 = vmatprep.subr.bf16.mxu0 %v1392
        %1518 = vmatpush2.bf16.msra.mxu0 %v1391
        %1519 = vmatprep.mubr.bf16.mxu0 %v1440
        %1520 = vmatmul.mubr.bf16.gmra.mxu0 %v1199
        %v1521 = vpop.f32.mrf.mxu0
        %v1522 = vadd.f32 %v784, %v1521
        %v1523 = vpop.f32.mrf.mxu0
        %v1524 = vadd.f32 %v786, %v1523
        %v1525 = vpop.f32.mrf.mxu0
        %v1526 = vadd.f32 %v788, %v1525
        %v1527 = vpop.f32.mrf.mxu0
        %v1528 = vadd.f32 %v790, %v1527
        %1529 = vmatprep.mubr.bf16.mxu0 %v1443
        %1530 = vmatmul.mubr.bf16.gmra.mxu0 %v1201
        %v1531 = vpop.f32.mrf.mxu0
        %v1532 = vadd.f32 %v794, %v1531
        %v1533 = vpop.f32.mrf.mxu0
        %v1534 = vadd.f32 %v796, %v1533
        %v1535 = vpop.f32.mrf.mxu0
        %v1536 = vadd.f32 %v798, %v1535
        %v1537 = vpop.f32.mrf.mxu0
        %v1538 = vadd.f32 %v800, %v1537
        %1539 = vmatprep.mubr.bf16.mxu0 %v1446
        %1540 = vmatmul.mubr.bf16.gmra.mxu0 %v1203
        %v1541 = vpop.f32.mrf.mxu0
        %v1542 = vadd.f32 %v804, %v1541
        %v1543 = vpop.f32.mrf.mxu0
        %v1544 = vadd.f32 %v806, %v1543
        %v1545 = vpop.f32.mrf.mxu0
        %v1546 = vadd.f32 %v808, %v1545
        %v1547 = vpop.f32.mrf.mxu0
        %v1548 = vadd.f32 %v810, %v1547
        %1549 = vmatprep.mubr.bf16.mxu0 %v1449
        %1550 = vmatmul.mubr.bf16.gmra.mxu0 %v1205
        %v1551 = vpop.f32.mrf.mxu0
        %v1552 = vadd.f32 %v814, %v1551
        %v1553 = vpop.f32.mrf.mxu0
        %v1554 = vadd.f32 %v816, %v1553
        %v1555 = vpop.f32.mrf.mxu0
        %v1556 = vadd.f32 %v818, %v1555
        %v1557 = vpop.f32.mrf.mxu0
        %v1558 = vadd.f32 %v820, %v1557
        %1559 = vmatprep.mubr.bf16.mxu0 %v1452
        %1560 = vmatmul.mubr.bf16.gmra.mxu0 %v1207
        %v1561 = vpop.f32.mrf.mxu0
        %v1562 = vadd.f32 %v824, %v1561
        %v1563 = vpop.f32.mrf.mxu0
        %v1564 = vadd.f32 %v826, %v1563
        %v1565 = vpop.f32.mrf.mxu0
        %v1566 = vadd.f32 %v828, %v1565
        %v1567 = vpop.f32.mrf.mxu0
        %v1568 = vadd.f32 %v830, %v1567
        %1569 = vmatprep.mubr.bf16.mxu0 %v1455
        %1570 = vmatmul.mubr.bf16.gmra.mxu0 %v1209
        %v1571 = vpop.f32.mrf.mxu0
        %v1572 = vadd.f32 %v834, %v1571
        %v1573 = vpop.f32.mrf.mxu0
        %v1574 = vadd.f32 %v836, %v1573
        %v1575 = vpop.f32.mrf.mxu0
        %v1576 = vadd.f32 %v838, %v1575
        %v1577 = vpop.f32.mrf.mxu0
        %v1578 = vadd.f32 %v840, %v1577
        %1579 = vmatprep.mubr.bf16.mxu0 %v1458
        %1580 = vmatmul.mubr.bf16.gmra.mxu0 %v1211
        %v1581 = vpop.f32.mrf.mxu0
        %v1582 = vadd.f32 %v844, %v1581
        %v1583 = vpop.f32.mrf.mxu0
        %v1584 = vadd.f32 %v846, %v1583
        %v1585 = vpop.f32.mrf.mxu0
        %v1586 = vadd.f32 %v848, %v1585
        %v1587 = vpop.f32.mrf.mxu0
        %v1588 = vadd.f32 %v850, %v1587
        %1589 = vmatprep.mubr.bf16.mxu0 %v1461
        %1590 = vmatmul.mubr.bf16.gmra.mxu0 %v1213
        %v1591 = vpop.f32.mrf.mxu0
        %v1592 = vadd.f32 %v854, %v1591
        %v1593 = vpop.f32.mrf.mxu0
        %v1594 = vadd.f32 %v856, %v1593
        %v1595 = vpop.f32.mrf.mxu0
        %v1596 = vadd.f32 %v858, %v1595
        %v1597 = vpop.f32.mrf.mxu0
        %v1598 = vadd.f32 %v860, %v1597
        %1599 = vmatprep.mubr.bf16.mxu0 %v1464
        %1600 = vmatmul.mubr.bf16.gmra.mxu0 %v1215
        %v1601 = vpop.f32.mrf.mxu0
        %v1602 = vadd.f32 %v864, %v1601
        %v1603 = vpop.f32.mrf.mxu0
        %v1604 = vadd.f32 %v866, %v1603
        %v1605 = vpop.f32.mrf.mxu0
        %v1606 = vadd.f32 %v868, %v1605
        %v1607 = vpop.f32.mrf.mxu0
        %v1608 = vadd.f32 %v870, %v1607
        %1609 = vmatprep.mubr.bf16.mxu0 %v1467
        %1610 = vmatmul.mubr.bf16.gmra.mxu0 %v1217
        %v1611 = vpop.f32.mrf.mxu0
        %v1612 = vadd.f32 %v874, %v1611
        %v1613 = vpop.f32.mrf.mxu0
        %v1614 = vadd.f32 %v876, %v1613
        %v1615 = vpop.f32.mrf.mxu0
        %v1616 = vadd.f32 %v878, %v1615
        %v1617 = vpop.f32.mrf.mxu0
        %v1618 = vadd.f32 %v880, %v1617
        %1619 = vmatprep.mubr.bf16.mxu0 %v1470
        %1620 = vmatmul.mubr.bf16.gmra.mxu0 %v1219
        %v1621 = vpop.f32.mrf.mxu0
        %v1622 = vadd.f32 %v884, %v1621
        %v1623 = vpop.f32.mrf.mxu0
        %v1624 = vadd.f32 %v886, %v1623
        %v1625 = vpop.f32.mrf.mxu0
        %v1626 = vadd.f32 %v888, %v1625
        %v1627 = vpop.f32.mrf.mxu0
        %v1628 = vadd.f32 %v890, %v1627
        %1629 = vmatprep.mubr.bf16.mxu0 %v1473
        %1630 = vmatmul.mubr.bf16.gmra.mxu0 %v1221
        %v1631 = vpop.f32.mrf.mxu0
        %v1632 = vadd.f32 %v894, %v1631
        %v1633 = vpop.f32.mrf.mxu0
        %v1634 = vadd.f32 %v896, %v1633
        %v1635 = vpop.f32.mrf.mxu0
        %v1636 = vadd.f32 %v898, %v1635
        %v1637 = vpop.f32.mrf.mxu0
        %v1638 = vadd.f32 %v900, %v1637
        %1639 = vmatprep.mubr.bf16.mxu0 %v1476
        %1640 = vmatmul.mubr.bf16.gmra.mxu0 %v1223
        %v1641 = vpop.f32.mrf.mxu0
        %v1642 = vadd.f32 %v904, %v1641
        %v1643 = vpop.f32.mrf.mxu0
        %v1644 = vadd.f32 %v906, %v1643
        %v1645 = vpop.f32.mrf.mxu0
        %v1646 = vadd.f32 %v908, %v1645
        %v1647 = vpop.f32.mrf.mxu0
        %v1648 = vadd.f32 %v910, %v1647
        %1649 = vmatprep.mubr.bf16.mxu0 %v1479
        %1650 = vmatmul.mubr.bf16.gmra.mxu0 %v1225
        %v1651 = vpop.f32.mrf.mxu0
        %v1652 = vadd.f32 %v914, %v1651
        %v1653 = vpop.f32.mrf.mxu0
        %v1654 = vadd.f32 %v916, %v1653
        %v1655 = vpop.f32.mrf.mxu0
        %v1656 = vadd.f32 %v918, %v1655
        %v1657 = vpop.f32.mrf.mxu0
        %v1658 = vadd.f32 %v920, %v1657
        %1659 = vmatprep.mubr.bf16.mxu0 %v1482
        %1660 = vmatmul.mubr.bf16.gmra.mxu0 %v1227
        %v1661 = vpop.f32.mrf.mxu0
        %v1662 = vadd.f32 %v924, %v1661
        %v1663 = vpop.f32.mrf.mxu0
        %v1664 = vadd.f32 %v926, %v1663
        %v1665 = vpop.f32.mrf.mxu0
        %v1666 = vadd.f32 %v928, %v1665
        %v1667 = vpop.f32.mrf.mxu0
        %v1668 = vadd.f32 %v930, %v1667
        %1669 = vmatprep.mubr.bf16.mxu0 %v1485
        %1670 = vmatmul.mubr.bf16.gmra.mxu0 %v1229
        %v1671 = vpop.f32.mrf.mxu0
        %v1672 = vadd.f32 %v934, %v1671
        %v1673 = vpop.f32.mrf.mxu0
        %v1674 = vadd.f32 %v936, %v1673
        %v1675 = vpop.f32.mrf.mxu0
        %v1676 = vadd.f32 %v938, %v1675
        %v1677 = vpop.f32.mrf.mxu0
        %v1678 = vadd.f32 %v940, %v1677
        %1679 = vdwg.mxu0
        %1680 = vmatprep.subr.bf16.mxu0 0
        %1681 = vmatpush1.bf16.msra.mxu0 %v1390
        %1682 = vmatprep.subr.bf16.mxu0 0
        %1683 = vmatpush1.bf16.msra.mxu0 %v1387
        %1684 = vmatprep.subr.bf16.mxu0 0
        %1685 = vmatpush1.bf16.msra.mxu0 %v1384
        %1686 = vmatprep.subr.bf16.mxu0 0
        %1687 = vmatpush1.bf16.msra.mxu0 %v1381
        %1688 = vmatprep.subr.bf16.mxu0 0
        %1689 = vmatpush1.bf16.msra.mxu0 %v1378
        %1690 = vmatprep.subr.bf16.mxu0 0
        %1691 = vmatpush1.bf16.msra.mxu0 %v1375
        %1692 = vmatprep.subr.bf16.mxu0 0
        %1693 = vmatpush1.bf16.msra.mxu0 %v1372
        %1694 = vmatprep.subr.bf16.mxu0 0
        %1695 = vmatpush1.bf16.msra.mxu0 %v1369
        %1696 = vmatprep.subr.bf16.mxu0 0
        %1697 = vmatpush2.bf16.msra.mxu0 0
        %1698 = vmatprep.subr.bf16.mxu0 0
        %1699 = vmatpush2.bf16.msra.mxu0 0
        %1700 = vmatprep.subr.bf16.mxu0 0
        %1701 = vmatpush2.bf16.msra.mxu0 0
        %1702 = vmatprep.subr.bf16.mxu0 0
        %1703 = vmatpush2.bf16.msra.mxu0 0
        %1704 = vmatprep.subr.bf16.mxu0 0
        %1705 = vmatpush2.bf16.msra.mxu0 %v1402
        %1706 = vmatprep.subr.bf16.mxu0 0
        %1707 = vmatpush2.bf16.msra.mxu0 %v1399
        %1708 = vmatprep.subr.bf16.mxu0 0
        %1709 = vmatpush2.bf16.msra.mxu0 %v1396
        %1710 = vmatprep.subr.bf16.mxu0 0
        %1711 = vmatpush2.bf16.msra.mxu0 %v1393
        %1712 = vmatprep.mubr.bf16.mxu0 %v1440
        %1713 = vmatmul.mubr.bf16.gmra.mxu0 %v1199
        %v1714 = vpop.f32.mrf.mxu0
        %v1715 = vadd.f32 %v977, %v1714
        %v1716 = vpop.f32.mrf.mxu0
        %v1717 = vpop.f32.mrf.mxu0
        %v1718 = vadd.f32 %v980, %v1717
        %v1719 = vpop.f32.mrf.mxu0
        %1720 = vmatprep.mubr.bf16.mxu0 %v1443
        %1721 = vmatmul.mubr.bf16.gmra.mxu0 %v1201
        %v1722 = vpop.f32.mrf.mxu0
        %v1723 = vadd.f32 %v985, %v1722
        %v1724 = vpop.f32.mrf.mxu0
        %v1725 = vpop.f32.mrf.mxu0
        %v1726 = vadd.f32 %v988, %v1725
        %v1727 = vpop.f32.mrf.mxu0
        %1728 = vmatprep.mubr.bf16.mxu0 %v1446
        %1729 = vmatmul.mubr.bf16.gmra.mxu0 %v1203
        %v1730 = vpop.f32.mrf.mxu0
        %v1731 = vadd.f32 %v993, %v1730
        %v1732 = vpop.f32.mrf.mxu0
        %v1733 = vpop.f32.mrf.mxu0
        %v1734 = vadd.f32 %v996, %v1733
        %v1735 = vpop.f32.mrf.mxu0
        %1736 = vmatprep.mubr.bf16.mxu0 %v1449
        %1737 = vmatmul.mubr.bf16.gmra.mxu0 %v1205
        %v1738 = vpop.f32.mrf.mxu0
        %v1739 = vadd.f32 %v1001, %v1738
        %v1740 = vpop.f32.mrf.mxu0
        %v1741 = vpop.f32.mrf.mxu0
        %v1742 = vadd.f32 %v1004, %v1741
        %v1743 = vpop.f32.mrf.mxu0
        %1744 = vmatprep.mubr.bf16.mxu0 %v1452
        %1745 = vmatmul.mubr.bf16.gmra.mxu0 %v1207
        %v1746 = vpop.f32.mrf.mxu0
        %v1747 = vadd.f32 %v1009, %v1746
        %v1748 = vpop.f32.mrf.mxu0
        %v1749 = vpop.f32.mrf.mxu0
        %v1750 = vadd.f32 %v1012, %v1749
        %v1751 = vpop.f32.mrf.mxu0
        %1752 = vmatprep.mubr.bf16.mxu0 %v1455
        %1753 = vmatmul.mubr.bf16.gmra.mxu0 %v1209
        %v1754 = vpop.f32.mrf.mxu0
        %v1755 = vadd.f32 %v1017, %v1754
        %v1756 = vpop.f32.mrf.mxu0
        %v1757 = vpop.f32.mrf.mxu0
        %v1758 = vadd.f32 %v1020, %v1757
        %v1759 = vpop.f32.mrf.mxu0
        %1760 = vmatprep.mubr.bf16.mxu0 %v1458
        %1761 = vmatmul.mubr.bf16.gmra.mxu0 %v1211
        %v1762 = vpop.f32.mrf.mxu0
        %v1763 = vadd.f32 %v1025, %v1762
        %v1764 = vpop.f32.mrf.mxu0
        %v1765 = vpop.f32.mrf.mxu0
        %v1766 = vadd.f32 %v1028, %v1765
        %v1767 = vpop.f32.mrf.mxu0
        %1768 = vmatprep.mubr.bf16.mxu0 %v1461
        %1769 = vmatmul.mubr.bf16.gmra.mxu0 %v1213
        %v1770 = vpop.f32.mrf.mxu0
        %v1771 = vadd.f32 %v1033, %v1770
        %v1772 = vpop.f32.mrf.mxu0
        %v1773 = vpop.f32.mrf.mxu0
        %v1774 = vadd.f32 %v1036, %v1773
        %v1775 = vpop.f32.mrf.mxu0
        %1776 = vmatprep.mubr.bf16.mxu0 %v1464
        %1777 = vmatmul.mubr.bf16.gmra.mxu0 %v1215
        %v1778 = vpop.f32.mrf.mxu0
        %v1779 = vadd.f32 %v1041, %v1778
        %v1780 = vpop.f32.mrf.mxu0
        %v1781 = vpop.f32.mrf.mxu0
        %v1782 = vadd.f32 %v1044, %v1781
        %v1783 = vpop.f32.mrf.mxu0
        %1784 = vmatprep.mubr.bf16.mxu0 %v1467
        %1785 = vmatmul.mubr.bf16.gmra.mxu0 %v1217
        %v1786 = vpop.f32.mrf.mxu0
        %v1787 = vadd.f32 %v1049, %v1786
        %v1788 = vpop.f32.mrf.mxu0
        %v1789 = vpop.f32.mrf.mxu0
        %v1790 = vadd.f32 %v1052, %v1789
        %v1791 = vpop.f32.mrf.mxu0
        %1792 = vmatprep.mubr.bf16.mxu0 %v1470
        %1793 = vmatmul.mubr.bf16.gmra.mxu0 %v1219
        %v1794 = vpop.f32.mrf.mxu0
        %v1795 = vadd.f32 %v1057, %v1794
        %v1796 = vpop.f32.mrf.mxu0
        %v1797 = vpop.f32.mrf.mxu0
        %v1798 = vadd.f32 %v1060, %v1797
        %v1799 = vpop.f32.mrf.mxu0
        %1800 = vmatprep.mubr.bf16.mxu0 %v1473
        %1801 = vmatmul.mubr.bf16.gmra.mxu0 %v1221
        %v1802 = vpop.f32.mrf.mxu0
        %v1803 = vadd.f32 %v1065, %v1802
        %v1804 = vpop.f32.mrf.mxu0
        %v1805 = vpop.f32.mrf.mxu0
        %v1806 = vadd.f32 %v1068, %v1805
        %v1807 = vpop.f32.mrf.mxu0
        %1808 = vmatprep.mubr.bf16.mxu0 %v1476
        %1809 = vmatmul.mubr.bf16.gmra.mxu0 %v1223
        %v1810 = vpop.f32.mrf.mxu0
        %v1811 = vadd.f32 %v1073, %v1810
        %v1812 = vpop.f32.mrf.mxu0
        %v1813 = vpop.f32.mrf.mxu0
        %v1814 = vadd.f32 %v1076, %v1813
        %v1815 = vpop.f32.mrf.mxu0
        %1816 = vmatprep.mubr.bf16.mxu0 %v1479
        %1817 = vmatmul.mubr.bf16.gmra.mxu0 %v1225
        %v1818 = vpop.f32.mrf.mxu0
        %v1819 = vadd.f32 %v1081, %v1818
        %v1820 = vpop.f32.mrf.mxu0
        %v1821 = vpop.f32.mrf.mxu0
        %v1822 = vadd.f32 %v1084, %v1821
        %v1823 = vpop.f32.mrf.mxu0
        %1824 = vmatprep.mubr.bf16.mxu0 %v1482
        %1825 = vmatmul.mubr.bf16.gmra.mxu0 %v1227
        %v1826 = vpop.f32.mrf.mxu0
        %v1827 = vadd.f32 %v1089, %v1826
        %v1828 = vpop.f32.mrf.mxu0
        %v1829 = vpop.f32.mrf.mxu0
        %v1830 = vadd.f32 %v1092, %v1829
        %v1831 = vpop.f32.mrf.mxu0
        %1832 = vmatprep.mubr.bf16.mxu0 %v1485
        %1833 = vmatmul.mubr.bf16.gmra.mxu0 %v1229
        %v1834 = vpop.f32.mrf.mxu0
        %v1835 = vadd.f32 %v1097, %v1834
        %v1836 = vpop.f32.mrf.mxu0
        %v1837 = vpop.f32.mrf.mxu0
        %v1838 = vadd.f32 %v1100, %v1837
        %v1839 = vpop.f32.mrf.mxu0
        %1840 = vdwg.mxu0
        %s1841 = scalar_lea.vmem %s199, 16
        %v1842 = vld [vmem:[%s1841] sm:$0xff]
        %v1843 = vld [vmem:[%s1841 + $0x8] sm:$0xff]
        %v1844 = vld [vmem:[%s1841 + $0x10] sm:$0xff]
        %v1845 = vld [vmem:[%s1841 + $0x18] sm:$0xff]
        %v1846 = vld [vmem:[%s1841 + $0x20] sm:$0xff]
        %v1847 = vld [vmem:[%s1841 + $0x28] sm:$0xff]
        %v1848 = vld [vmem:[%s1841 + $0x30] sm:$0xff]
        %v1849 = vld [vmem:[%s1841 + $0x38] sm:$0xff]
        %v1850 = vld [vmem:[%s1841 + $0x50] sm:$0xff]
        %v1851 = vld [vmem:[%s1841 + $0x58] sm:$0xff]
        %v1852 = vld [vmem:[%s1841 + $0x60] sm:$0xff]
        %v1853 = vld [vmem:[%s1841 + $0x68] sm:$0xff]
        %v1854 = vld [vmem:[%s1841 + $0x70] sm:$0xff]
        %v1855 = vld [vmem:[%s1841 + $0x78] sm:$0xff]
        %v1856 = vld [vmem:[%s1841 + $0x80] sm:$0xff]
        %v1857 = vld [vmem:[%s1841 + $0x88] sm:$0xff]
        %v1858 = vld [vmem:[%s1841 + $0xa0] sm:$0xff]
        %v1859 = vld [vmem:[%s1841 + $0xa8] sm:$0xff]
        %v1860 = vld [vmem:[%s1841 + $0xb0] sm:$0xff]
        %v1861 = vld [vmem:[%s1841 + $0xb8] sm:$0xff]
        %v1862 = vld [vmem:[%s1841 + $0xc0] sm:$0xff]
        %v1863 = vld [vmem:[%s1841 + $0xc8] sm:$0xff]
        %v1864 = vld [vmem:[%s1841 + $0xd0] sm:$0xff]
        %v1865 = vld [vmem:[%s1841 + $0xd8] sm:$0xff]
        %v1866 = vld [vmem:[%s1841 + $0xf0] sm:$0xff]
        %v1867 = vld [vmem:[%s1841 + $0xf8] sm:$0xff]
        %v1868 = vld [vmem:[%s1841 + $0x100] sm:$0xff]
        %v1869 = vld [vmem:[%s1841 + $0x108] sm:$0xff]
        %v1870 = vld [vmem:[%s1841 + $0x110] sm:$0xff]
        %v1871 = vld [vmem:[%s1841 + $0x118] sm:$0xff]
        %v1872 = vld [vmem:[%s1841 + $0x120] sm:$0xff]
        %v1873 = vld [vmem:[%s1841 + $0x128] sm:$0xff]
        %v1874 = vld [vmem:[%s1 + $0x240] sm:$0xff]
        %v1875 = vld [vmem:[%s1 + $0x248] sm:$0xf]
        %v1876 = vld [vmem:[%s1 + $0x24c] sm:$0xff]
        %v1877 = vld [vmem:[%s1 + $0x254] sm:$0xf]
        %v1878 = vld [vmem:[%s1 + $0x258] sm:$0xff]
        %v1879 = vld [vmem:[%s1 + $0x260] sm:$0xf]
        %v1880 = vld [vmem:[%s1 + $0x264] sm:$0xff]
        %v1881 = vld [vmem:[%s1 + $0x26c] sm:$0xf]
        %v1882 = vld [vmem:[%s1 + $0x270] sm:$0xff]
        %v1883 = vld [vmem:[%s1 + $0x278] sm:$0xf]
        %v1884 = vld [vmem:[%s1 + $0x27c] sm:$0xff]
        %v1885 = vld [vmem:[%s1 + $0x284] sm:$0xf]
        %v1886 = vld [vmem:[%s1 + $0x288] sm:$0xff]
        %v1887 = vld [vmem:[%s1 + $0x290] sm:$0xf]
        %v1888 = vld [vmem:[%s1 + $0x294] sm:$0xff]
        %v1889 = vld [vmem:[%s1 + $0x29c] sm:$0xf]
        %v1890 = vld [vmem:[%s1 + $0x2a0] sm:$0xff]
        %v1891 = vld [vmem:[%s1 + $0x2a8] sm:$0xf]
        %v1892 = vld [vmem:[%s1 + $0x2ac] sm:$0xff]
        %v1893 = vld [vmem:[%s1 + $0x2b4] sm:$0xf]
        %v1894 = vld [vmem:[%s1 + $0x2b8] sm:$0xff]
        %v1895 = vld [vmem:[%s1 + $0x2c0] sm:$0xf]
        %v1896 = vld [vmem:[%s1 + $0x2c4] sm:$0xff]
        %v1897 = vld [vmem:[%s1 + $0x2cc] sm:$0xf]
        %v1898 = vld [vmem:[%s1 + $0x2d0] sm:$0xff]
        %v1899 = vld [vmem:[%s1 + $0x2d8] sm:$0xf]
        %v1900 = vld [vmem:[%s1 + $0x2dc] sm:$0xff]
        %v1901 = vld [vmem:[%s1 + $0x2e4] sm:$0xf]
        %v1902 = vld [vmem:[%s1 + $0x2e8] sm:$0xff]
        %v1903 = vld [vmem:[%s1 + $0x2f0] sm:$0xf]
        %v1904 = vld [vmem:[%s1 + $0x2f4] sm:$0xff]
        %v1905 = vld [vmem:[%s1 + $0x2fc] sm:$0xf]
        %v1906 = vld [vmem:[%s1 + $0x300] sm:$0xff]
        %v1907 = vld [vmem:[%s1 + $0x308] sm:$0xf]
        %v1908 = vld [vmem:[%s1 + $0x30c] sm:$0xff]
        %v1909 = vld [vmem:[%s1 + $0x314] sm:$0xf]
        %v1910 = vld [vmem:[%s1 + $0x318] sm:$0xff]
        %v1911 = vld [vmem:[%s1 + $0x320] sm:$0xf]
        %v1912 = vld [vmem:[%s1 + $0x324] sm:$0xff]
        %v1913 = vld [vmem:[%s1 + $0x32c] sm:$0xf]
        %v1914 = vld [vmem:[%s1 + $0x330] sm:$0xff]
        %v1915 = vld [vmem:[%s1 + $0x338] sm:$0xf]
        %v1916 = vld [vmem:[%s1 + $0x33c] sm:$0xff]
        %v1917 = vld [vmem:[%s1 + $0x344] sm:$0xf]
        %v1918 = vld [vmem:[%s1 + $0x348] sm:$0xff]
        %v1919 = vld [vmem:[%s1 + $0x350] sm:$0xf]
        %v1920 = vld [vmem:[%s1 + $0x354] sm:$0xff]
        %v1921 = vld [vmem:[%s1 + $0x35c] sm:$0xf]
        %v1954 = vunpack.c.l.b16 %v1842
        %v1955 = vunpack.c.h.b16 %v1842
        %v1956 = vunpack.c.l.b16 %v1843
        %v1957 = vunpack.c.h.b16 %v1843
        %v1958 = vunpack.c.l.b16 %v1844
        %v1959 = vunpack.c.h.b16 %v1844
        %v1960 = vunpack.c.l.b16 %v1845
        %v1961 = vunpack.c.h.b16 %v1845
        %v1962 = vunpack.c.l.b16 %v1846
        %v1963 = vunpack.c.h.b16 %v1846
        %v1964 = vunpack.c.l.b16 %v1847
        %v1965 = vunpack.c.h.b16 %v1847
        %v1966 = vunpack.c.l.b16 %v1848
        %v1967 = vunpack.c.h.b16 %v1848
        %v1968 = vunpack.c.l.b16 %v1849
        %v1969 = vunpack.c.h.b16 %v1849
        %v1970 = vunpack.c.l.b16 %v1850
        %v1971 = vunpack.c.h.b16 %v1850
        %v1972 = vunpack.c.l.b16 %v1851
        %v1973 = vunpack.c.h.b16 %v1851
        %v1974 = vunpack.c.l.b16 %v1852
        %v1975 = vunpack.c.h.b16 %v1852
        %v1976 = vunpack.c.l.b16 %v1853
        %v1977 = vunpack.c.h.b16 %v1853
        %v1978 = vunpack.c.l.b16 %v1854
        %v1979 = vunpack.c.h.b16 %v1854
        %v1980 = vunpack.c.l.b16 %v1855
        %v1981 = vunpack.c.h.b16 %v1855
        %v1982 = vunpack.c.l.b16 %v1856
        %v1983 = vunpack.c.h.b16 %v1856
        %v1984 = vunpack.c.l.b16 %v1857
        %v1985 = vunpack.c.h.b16 %v1857
        %v1986 = vunpack.c.l.b16 %v1858
        %v1987 = vunpack.c.h.b16 %v1858
        %v1988 = vunpack.c.l.b16 %v1859
        %v1989 = vunpack.c.h.b16 %v1859
        %v1990 = vunpack.c.l.b16 %v1860
        %v1991 = vunpack.c.h.b16 %v1860
        %v1992 = vunpack.c.l.b16 %v1861
        %v1993 = vunpack.c.h.b16 %v1861
        %v1994 = vunpack.c.l.b16 %v1862
        %v1995 = vunpack.c.h.b16 %v1862
        %v1996 = vunpack.c.l.b16 %v1863
        %v1997 = vunpack.c.h.b16 %v1863
        %v1998 = vunpack.c.l.b16 %v1864
        %v1999 = vunpack.c.h.b16 %v1864
        %v2000 = vunpack.c.l.b16 %v1865
        %v2001 = vunpack.c.h.b16 %v1865
        %v2002 = vunpack.c.l.b16 %v1866
        %v2003 = vunpack.c.h.b16 %v1866
        %v2004 = vunpack.c.l.b16 %v1867
        %v2005 = vunpack.c.h.b16 %v1867
        %v2006 = vunpack.c.l.b16 %v1868
        %v2007 = vunpack.c.h.b16 %v1868
        %v2008 = vunpack.c.l.b16 %v1869
        %v2009 = vunpack.c.h.b16 %v1869
        %v2010 = vunpack.c.l.b16 %v1870
        %v2011 = vunpack.c.h.b16 %v1870
        %v2012 = vunpack.c.l.b16 %v1871
        %v2013 = vunpack.c.h.b16 %v1871
        %v2014 = vunpack.c.l.b16 %v1872
        %v2015 = vunpack.c.h.b16 %v1872
        %v2016 = vunpack.c.l.b16 %v1873
        %v2017 = vunpack.c.h.b16 %v1873
        %v2018 = vpack.c.b16 %v1956, %v1954
        %v2019 = vpack.c.b16 %v1957, %v1955
        %v2020 = vpack.c.b16 %v1960, %v1958
        %v2021 = vpack.c.b16 %v1961, %v1959
        %v2022 = vpack.c.b16 %v1964, %v1962
        %v2023 = vpack.c.b16 %v1965, %v1963
        %v2024 = vpack.c.b16 %v1968, %v1966
        %v2025 = vpack.c.b16 %v1969, %v1967
        %v2026 = vpack.c.b16 %v1972, %v1970
        %v2027 = vpack.c.b16 %v1973, %v1971
        %v2028 = vpack.c.b16 %v1976, %v1974
        %v2029 = vpack.c.b16 %v1977, %v1975
        %v2030 = vpack.c.b16 %v1980, %v1978
        %v2031 = vpack.c.b16 %v1981, %v1979
        %v2032 = vpack.c.b16 %v1984, %v1982
        %v2033 = vpack.c.b16 %v1985, %v1983
        %v2034 = vpack.c.b16 %v1988, %v1986
        %v2035 = vpack.c.b16 %v1989, %v1987
        %v2036 = vpack.c.b16 %v1992, %v1990
        %v2037 = vpack.c.b16 %v1993, %v1991
        %v2038 = vpack.c.b16 %v1996, %v1994
        %v2039 = vpack.c.b16 %v1997, %v1995
        %v2040 = vpack.c.b16 %v2000, %v1998
        %v2041 = vpack.c.b16 %v2001, %v1999
        %v2042 = vpack.c.b16 %v2004, %v2002
        %v2043 = vpack.c.b16 %v2005, %v2003
        %v2044 = vpack.c.b16 %v2008, %v2006
        %v2045 = vpack.c.b16 %v2009, %v2007
        %v2046 = vpack.c.b16 %v2012, %v2010
        %v2047 = vpack.c.b16 %v2013, %v2011
        %v2048 = vpack.c.b16 %v2016, %v2014
        %v2049 = vpack.c.b16 %v2017, %v2015
        %v2114 = vunpack.c.l.b16 %v1874
        %v2115 = vunpack.c.h.b16 %v1874
        %v2116 = vunpack.c.l.b16 %v1875
        %v2117 = vunpack.c.l.b16 %v1876
        %v2118 = vunpack.c.h.b16 %v1876
        %v2119 = vunpack.c.l.b16 %v1877
        %v2120 = vunpack.c.l.b16 %v1878
        %v2121 = vunpack.c.h.b16 %v1878
        %v2122 = vunpack.c.l.b16 %v1879
        %v2123 = vunpack.c.l.b16 %v1880
        %v2124 = vunpack.c.h.b16 %v1880
        %v2125 = vunpack.c.l.b16 %v1881
        %v2126 = vunpack.c.l.b16 %v1882
        %v2127 = vunpack.c.h.b16 %v1882
        %v2128 = vunpack.c.l.b16 %v1883
        %v2129 = vunpack.c.l.b16 %v1884
        %v2130 = vunpack.c.h.b16 %v1884
        %v2131 = vunpack.c.l.b16 %v1885
        %v2132 = vunpack.c.l.b16 %v1886
        %v2133 = vunpack.c.h.b16 %v1886
        %v2134 = vunpack.c.l.b16 %v1887
        %v2135 = vunpack.c.l.b16 %v1888
        %v2136 = vunpack.c.h.b16 %v1888
        %v2137 = vunpack.c.l.b16 %v1889
        %v2138 = vunpack.c.l.b16 %v1890
        %v2139 = vunpack.c.h.b16 %v1890
        %v2140 = vunpack.c.l.b16 %v1891
        %v2141 = vunpack.c.l.b16 %v1892
        %v2142 = vunpack.c.h.b16 %v1892
        %v2143 = vunpack.c.l.b16 %v1893
        %v2144 = vunpack.c.l.b16 %v1894
        %v2145 = vunpack.c.h.b16 %v1894
        %v2146 = vunpack.c.l.b16 %v1895
        %v2147 = vunpack.c.l.b16 %v1896
        %v2148 = vunpack.c.h.b16 %v1896
        %v2149 = vunpack.c.l.b16 %v1897
        %v2150 = vunpack.c.l.b16 %v1898
        %v2151 = vunpack.c.h.b16 %v1898
        %v2152 = vunpack.c.l.b16 %v1899
        %v2153 = vunpack.c.l.b16 %v1900
        %v2154 = vunpack.c.h.b16 %v1900
        %v2155 = vunpack.c.l.b16 %v1901
        %v2156 = vunpack.c.l.b16 %v1902
        %v2157 = vunpack.c.h.b16 %v1902
        %v2158 = vunpack.c.l.b16 %v1903
        %v2159 = vunpack.c.l.b16 %v1904
        %v2160 = vunpack.c.h.b16 %v1904
        %v2161 = vunpack.c.l.b16 %v1905
        %v2162 = vunpack.c.l.b16 %v1906
        %v2163 = vunpack.c.h.b16 %v1906
        %v2164 = vunpack.c.l.b16 %v1907
        %v2165 = vunpack.c.l.b16 %v1908
        %v2166 = vunpack.c.h.b16 %v1908
        %v2167 = vunpack.c.l.b16 %v1909
        %v2168 = vunpack.c.l.b16 %v1910
        %v2169 = vunpack.c.h.b16 %v1910
        %v2170 = vunpack.c.l.b16 %v1911
        %v2171 = vunpack.c.l.b16 %v1912
        %v2172 = vunpack.c.h.b16 %v1912
        %v2173 = vunpack.c.l.b16 %v1913
        %v2174 = vunpack.c.l.b16 %v1914
        %v2175 = vunpack.c.h.b16 %v1914
        %v2176 = vunpack.c.l.b16 %v1915
        %v2177 = vunpack.c.l.b16 %v1916
        %v2178 = vunpack.c.h.b16 %v1916
        %v2179 = vunpack.c.l.b16 %v1917
        %v2180 = vunpack.c.l.b16 %v1918
        %v2181 = vunpack.c.h.b16 %v1918
        %v2182 = vunpack.c.l.b16 %v1919
        %v2183 = vunpack.c.l.b16 %v1920
        %v2184 = vunpack.c.h.b16 %v1920
        %v2185 = vunpack.c.l.b16 %v1921
        %v2186 = vpack.c.b16 %v2117, %v2114
        %v2187 = vpack.c.b16 %v2118, %v2115
        %v2188 = vpack.c.b16 %v2119, %v2116
        %v2189 = vpack.c.b16 %v2123, %v2120
        %v2190 = vpack.c.b16 %v2124, %v2121
        %v2191 = vpack.c.b16 %v2125, %v2122
        %v2192 = vpack.c.b16 %v2129, %v2126
        %v2193 = vpack.c.b16 %v2130, %v2127
        %v2194 = vpack.c.b16 %v2131, %v2128
        %v2195 = vpack.c.b16 %v2135, %v2132
        %v2196 = vpack.c.b16 %v2136, %v2133
        %v2197 = vpack.c.b16 %v2137, %v2134
        %v2198 = vpack.c.b16 %v2141, %v2138
        %v2199 = vpack.c.b16 %v2142, %v2139
        %v2200 = vpack.c.b16 %v2143, %v2140
        %v2201 = vpack.c.b16 %v2147, %v2144
        %v2202 = vpack.c.b16 %v2148, %v2145
        %v2203 = vpack.c.b16 %v2149, %v2146
        %v2204 = vpack.c.b16 %v2153, %v2150
        %v2205 = vpack.c.b16 %v2154, %v2151
        %v2206 = vpack.c.b16 %v2155, %v2152
        %v2207 = vpack.c.b16 %v2159, %v2156
        %v2208 = vpack.c.b16 %v2160, %v2157
        %v2209 = vpack.c.b16 %v2161, %v2158
        %v2210 = vpack.c.b16 %v2165, %v2162
        %v2211 = vpack.c.b16 %v2166, %v2163
        %v2212 = vpack.c.b16 %v2167, %v2164
        %v2213 = vpack.c.b16 %v2171, %v2168
        %v2214 = vpack.c.b16 %v2172, %v2169
        %v2215 = vpack.c.b16 %v2173, %v2170
        %v2216 = vpack.c.b16 %v2177, %v2174
        %v2217 = vpack.c.b16 %v2178, %v2175
        %v2218 = vpack.c.b16 %v2179, %v2176
        %v2219 = vpack.c.b16 %v2183, %v2180
        %v2220 = vpack.c.b16 %v2184, %v2181
        %v2221 = vpack.c.b16 %v2185, %v2182
        %v2259 = vsel %vm700, %v2019, 0
        %v2262 = vsel %vm700, %v2021, 0
        %v2265 = vsel %vm700, %v2023, 0
        %v2268 = vsel %vm700, %v2025, 0
        %v2271 = vsel %vm700, %v2027, 0
        %v2274 = vsel %vm700, %v2029, 0
        %v2277 = vsel %vm700, %v2031, 0
        %v2280 = vsel %vm700, %v2033, 0
        %v2283 = vsel %vm700, %v2035, 0
        %v2286 = vsel %vm700, %v2037, 0
        %v2289 = vsel %vm700, %v2039, 0
        %v2292 = vsel %vm700, %v2041, 0
        %v2295 = vsel %vm700, %v2043, 0
        %v2298 = vsel %vm700, %v2045, 0
        %v2301 = vsel %vm700, %v2047, 0
        %v2304 = vsel %vm700, %v2049, 0
        %2306 = vmatprep.subr.bf16.mxu0 %v2208
        %2307 = vmatpush1.bf16.msra.mxu0 %v2207
        %2308 = vmatprep.subr.bf16.mxu0 %v2205
        %2309 = vmatpush1.bf16.msra.mxu0 %v2204
        %2310 = vmatprep.subr.bf16.mxu0 %v2202
        %2311 = vmatpush1.bf16.msra.mxu0 %v2201
        %2312 = vmatprep.subr.bf16.mxu0 %v2199
        %2313 = vmatpush1.bf16.msra.mxu0 %v2198
        %2314 = vmatprep.subr.bf16.mxu0 %v2196
        %2315 = vmatpush1.bf16.msra.mxu0 %v2195
        %2316 = vmatprep.subr.bf16.mxu0 %v2193
        %2317 = vmatpush1.bf16.msra.mxu0 %v2192
        %2318 = vmatprep.subr.bf16.mxu0 %v2190
        %2319 = vmatpush1.bf16.msra.mxu0 %v2189
        %2320 = vmatprep.subr.bf16.mxu0 %v2187
        %2321 = vmatpush1.bf16.msra.mxu0 %v2186
        %2322 = vmatprep.subr.bf16.mxu0 0
        %2323 = vmatpush2.bf16.msra.mxu0 0
        %2324 = vmatprep.subr.bf16.mxu0 0
        %2325 = vmatpush2.bf16.msra.mxu0 0
        %2326 = vmatprep.subr.bf16.mxu0 0
        %2327 = vmatpush2.bf16.msra.mxu0 0
        %2328 = vmatprep.subr.bf16.mxu0 0
        %2329 = vmatpush2.bf16.msra.mxu0 0
        %2330 = vmatprep.subr.bf16.mxu0 %v2220
        %2331 = vmatpush2.bf16.msra.mxu0 %v2219
        %2332 = vmatprep.subr.bf16.mxu0 %v2217
        %2333 = vmatpush2.bf16.msra.mxu0 %v2216
        %2334 = vmatprep.subr.bf16.mxu0 %v2214
        %2335 = vmatpush2.bf16.msra.mxu0 %v2213
        %2336 = vmatprep.subr.bf16.mxu0 %v2211
        %2337 = vmatpush2.bf16.msra.mxu0 %v2210
        %2338 = vmatprep.mubr.bf16.mxu0 %v2259
        %2339 = vmatmul.mubr.bf16.gmra.mxu0 %v2018
        %v2340 = vpop.f32.mrf.mxu0
        %v2341 = vadd.f32 0.0, %v2340
        %v2342 = vpop.f32.mrf.mxu0
        %v2343 = vadd.f32 0.0, %v2342
        %v2344 = vpop.f32.mrf.mxu0
        %v2345 = vadd.f32 0.0, %v2344
        %v2346 = vpop.f32.mrf.mxu0
        %v2347 = vadd.f32 0.0, %v2346
        %2348 = vmatprep.mubr.bf16.mxu0 %v2262
        %2349 = vmatmul.mubr.bf16.gmra.mxu0 %v2020
        %v2350 = vpop.f32.mrf.mxu0
        %v2351 = vadd.f32 0.0, %v2350
        %v2352 = vpop.f32.mrf.mxu0
        %v2353 = vadd.f32 0.0, %v2352
        %v2354 = vpop.f32.mrf.mxu0
        %v2355 = vadd.f32 0.0, %v2354
        %v2356 = vpop.f32.mrf.mxu0
        %v2357 = vadd.f32 0.0, %v2356
        %2358 = vmatprep.mubr.bf16.mxu0 %v2265
        %2359 = vmatmul.mubr.bf16.gmra.mxu0 %v2022
        %v2360 = vpop.f32.mrf.mxu0
        %v2361 = vadd.f32 0.0, %v2360
        %v2362 = vpop.f32.mrf.mxu0
        %v2363 = vadd.f32 0.0, %v2362
        %v2364 = vpop.f32.mrf.mxu0
        %v2365 = vadd.f32 0.0, %v2364
        %v2366 = vpop.f32.mrf.mxu0
        %v2367 = vadd.f32 0.0, %v2366
        %2368 = vmatprep.mubr.bf16.mxu0 %v2268
        %2369 = vmatmul.mubr.bf16.gmra.mxu0 %v2024
        %v2370 = vpop.f32.mrf.mxu0
        %v2371 = vadd.f32 0.0, %v2370
        %v2372 = vpop.f32.mrf.mxu0
        %v2373 = vadd.f32 0.0, %v2372
        %v2374 = vpop.f32.mrf.mxu0
        %v2375 = vadd.f32 0.0, %v2374
        %v2376 = vpop.f32.mrf.mxu0
        %v2377 = vadd.f32 0.0, %v2376
        %2378 = vmatprep.mubr.bf16.mxu0 %v2271
        %2379 = vmatmul.mubr.bf16.gmra.mxu0 %v2026
        %v2380 = vpop.f32.mrf.mxu0
        %v2381 = vadd.f32 0.0, %v2380
        %v2382 = vpop.f32.mrf.mxu0
        %v2383 = vadd.f32 0.0, %v2382
        %v2384 = vpop.f32.mrf.mxu0
        %v2385 = vadd.f32 0.0, %v2384
        %v2386 = vpop.f32.mrf.mxu0
        %v2387 = vadd.f32 0.0, %v2386
        %2388 = vmatprep.mubr.bf16.mxu0 %v2274
        %2389 = vmatmul.mubr.bf16.gmra.mxu0 %v2028
        %v2390 = vpop.f32.mrf.mxu0
        %v2391 = vadd.f32 0.0, %v2390
        %v2392 = vpop.f32.mrf.mxu0
        %v2393 = vadd.f32 0.0, %v2392
        %v2394 = vpop.f32.mrf.mxu0
        %v2395 = vadd.f32 0.0, %v2394
        %v2396 = vpop.f32.mrf.mxu0
        %v2397 = vadd.f32 0.0, %v2396
        %2398 = vmatprep.mubr.bf16.mxu0 %v2277
        %2399 = vmatmul.mubr.bf16.gmra.mxu0 %v2030
        %v2400 = vpop.f32.mrf.mxu0
        %v2401 = vadd.f32 0.0, %v2400
        %v2402 = vpop.f32.mrf.mxu0
        %v2403 = vadd.f32 0.0, %v2402
        %v2404 = vpop.f32.mrf.mxu0
        %v2405 = vadd.f32 0.0, %v2404
        %v2406 = vpop.f32.mrf.mxu0
        %v2407 = vadd.f32 0.0, %v2406
        %2408 = vmatprep.mubr.bf16.mxu0 %v2280
        %2409 = vmatmul.mubr.bf16.gmra.mxu0 %v2032
        %v2410 = vpop.f32.mrf.mxu0
        %v2411 = vadd.f32 0.0, %v2410
        %v2412 = vpop.f32.mrf.mxu0
        %v2413 = vadd.f32 0.0, %v2412
        %v2414 = vpop.f32.mrf.mxu0
        %v2415 = vadd.f32 0.0, %v2414
        %v2416 = vpop.f32.mrf.mxu0
        %v2417 = vadd.f32 0.0, %v2416
        %2418 = vmatprep.mubr.bf16.mxu0 %v2283
        %2419 = vmatmul.mubr.bf16.gmra.mxu0 %v2034
        %v2420 = vpop.f32.mrf.mxu0
        %v2421 = vadd.f32 0.0, %v2420
        %v2422 = vpop.f32.mrf.mxu0
        %v2423 = vadd.f32 0.0, %v2422
        %v2424 = vpop.f32.mrf.mxu0
        %v2425 = vadd.f32 0.0, %v2424
        %v2426 = vpop.f32.mrf.mxu0
        %v2427 = vadd.f32 0.0, %v2426
        %2428 = vmatprep.mubr.bf16.mxu0 %v2286
        %2429 = vmatmul.mubr.bf16.gmra.mxu0 %v2036
        %v2430 = vpop.f32.mrf.mxu0
        %v2431 = vadd.f32 0.0, %v2430
        %v2432 = vpop.f32.mrf.mxu0
        %v2433 = vadd.f32 0.0, %v2432
        %v2434 = vpop.f32.mrf.mxu0
        %v2435 = vadd.f32 0.0, %v2434
        %v2436 = vpop.f32.mrf.mxu0
        %v2437 = vadd.f32 0.0, %v2436
        %2438 = vmatprep.mubr.bf16.mxu0 %v2289
        %2439 = vmatmul.mubr.bf16.gmra.mxu0 %v2038
        %v2440 = vpop.f32.mrf.mxu0
        %v2441 = vadd.f32 0.0, %v2440
        %v2442 = vpop.f32.mrf.mxu0
        %v2443 = vadd.f32 0.0, %v2442
        %v2444 = vpop.f32.mrf.mxu0
        %v2445 = vadd.f32 0.0, %v2444
        %v2446 = vpop.f32.mrf.mxu0
        %v2447 = vadd.f32 0.0, %v2446
        %2448 = vmatprep.mubr.bf16.mxu0 %v2292
        %2449 = vmatmul.mubr.bf16.gmra.mxu0 %v2040
        %v2450 = vpop.f32.mrf.mxu0
        %v2451 = vadd.f32 0.0, %v2450
        %v2452 = vpop.f32.mrf.mxu0
        %v2453 = vadd.f32 0.0, %v2452
        %v2454 = vpop.f32.mrf.mxu0
        %v2455 = vadd.f32 0.0, %v2454
        %v2456 = vpop.f32.mrf.mxu0
        %v2457 = vadd.f32 0.0, %v2456
        %2458 = vmatprep.mubr.bf16.mxu0 %v2295
        %2459 = vmatmul.mubr.bf16.gmra.mxu0 %v2042
        %v2460 = vpop.f32.mrf.mxu0
        %v2461 = vadd.f32 0.0, %v2460
        %v2462 = vpop.f32.mrf.mxu0
        %v2463 = vadd.f32 0.0, %v2462
        %v2464 = vpop.f32.mrf.mxu0
        %v2465 = vadd.f32 0.0, %v2464
        %v2466 = vpop.f32.mrf.mxu0
        %v2467 = vadd.f32 0.0, %v2466
        %2468 = vmatprep.mubr.bf16.mxu0 %v2298
        %2469 = vmatmul.mubr.bf16.gmra.mxu0 %v2044
        %v2470 = vpop.f32.mrf.mxu0
        %v2471 = vadd.f32 0.0, %v2470
        %v2472 = vpop.f32.mrf.mxu0
        %v2473 = vadd.f32 0.0, %v2472
        %v2474 = vpop.f32.mrf.mxu0
        %v2475 = vadd.f32 0.0, %v2474
        %v2476 = vpop.f32.mrf.mxu0
        %v2477 = vadd.f32 0.0, %v2476
        %2478 = vmatprep.mubr.bf16.mxu0 %v2301
        %2479 = vmatmul.mubr.bf16.gmra.mxu0 %v2046
        %v2480 = vpop.f32.mrf.mxu0
        %v2481 = vadd.f32 0.0, %v2480
        %v2482 = vpop.f32.mrf.mxu0
        %v2483 = vadd.f32 0.0, %v2482
        %v2484 = vpop.f32.mrf.mxu0
        %v2485 = vadd.f32 0.0, %v2484
        %v2486 = vpop.f32.mrf.mxu0
        %v2487 = vadd.f32 0.0, %v2486
        %2488 = vmatprep.mubr.bf16.mxu0 %v2304
        %2489 = vmatmul.mubr.bf16.gmra.mxu0 %v2048
        %v2490 = vpop.f32.mrf.mxu0
        %v2491 = vadd.f32 0.0, %v2490
        %v2492 = vpop.f32.mrf.mxu0
        %v2493 = vadd.f32 0.0, %v2492
        %v2494 = vpop.f32.mrf.mxu0
        %v2495 = vadd.f32 0.0, %v2494
        %v2496 = vpop.f32.mrf.mxu0
        %v2497 = vadd.f32 0.0, %v2496
        %2498 = vdwg.mxu0
        %2499 = vmatprep.subr.bf16.mxu0 0
        %2500 = vmatpush1.bf16.msra.mxu0 %v2209
        %2501 = vmatprep.subr.bf16.mxu0 0
        %2502 = vmatpush1.bf16.msra.mxu0 %v2206
        %2503 = vmatprep.subr.bf16.mxu0 0
        %2504 = vmatpush1.bf16.msra.mxu0 %v2203
        %2505 = vmatprep.subr.bf16.mxu0 0
        %2506 = vmatpush1.bf16.msra.mxu0 %v2200
        %2507 = vmatprep.subr.bf16.mxu0 0
        %2508 = vmatpush1.bf16.msra.mxu0 %v2197
        %2509 = vmatprep.subr.bf16.mxu0 0
        %2510 = vmatpush1.bf16.msra.mxu0 %v2194
        %2511 = vmatprep.subr.bf16.mxu0 0
        %2512 = vmatpush1.bf16.msra.mxu0 %v2191
        %2513 = vmatprep.subr.bf16.mxu0 0
        %2514 = vmatpush1.bf16.msra.mxu0 %v2188
        %2515 = vmatprep.subr.bf16.mxu0 0
        %2516 = vmatpush2.bf16.msra.mxu0 0
        %2517 = vmatprep.subr.bf16.mxu0 0
        %2518 = vmatpush2.bf16.msra.mxu0 0
        %2519 = vmatprep.subr.bf16.mxu0 0
        %2520 = vmatpush2.bf16.msra.mxu0 0
        %2521 = vmatprep.subr.bf16.mxu0 0
        %2522 = vmatpush2.bf16.msra.mxu0 0
        %2523 = vmatprep.subr.bf16.mxu0 0
        %2524 = vmatpush2.bf16.msra.mxu0 %v2221
        %2525 = vmatprep.subr.bf16.mxu0 0
        %2526 = vmatpush2.bf16.msra.mxu0 %v2218
        %2527 = vmatprep.subr.bf16.mxu0 0
        %2528 = vmatpush2.bf16.msra.mxu0 %v2215
        %2529 = vmatprep.subr.bf16.mxu0 0
        %2530 = vmatpush2.bf16.msra.mxu0 %v2212
        %2531 = vmatprep.mubr.bf16.mxu0 %v2259
        %2532 = vmatmul.mubr.bf16.gmra.mxu0 %v2018
        %v2533 = vpop.f32.mrf.mxu0
        %v2534 = vadd.f32 0.0, %v2533
        %v2535 = vpop.f32.mrf.mxu0
        %v2536 = vpop.f32.mrf.mxu0
        %v2537 = vadd.f32 0.0, %v2536
        %v2538 = vpop.f32.mrf.mxu0
        %2539 = vmatprep.mubr.bf16.mxu0 %v2262
        %2540 = vmatmul.mubr.bf16.gmra.mxu0 %v2020
        %v2541 = vpop.f32.mrf.mxu0
        %v2542 = vadd.f32 0.0, %v2541
        %v2543 = vpop.f32.mrf.mxu0
        %v2544 = vpop.f32.mrf.mxu0
        %v2545 = vadd.f32 0.0, %v2544
        %v2546 = vpop.f32.mrf.mxu0
        %2547 = vmatprep.mubr.bf16.mxu0 %v2265
        %2548 = vmatmul.mubr.bf16.gmra.mxu0 %v2022
        %v2549 = vpop.f32.mrf.mxu0
        %v2550 = vadd.f32 0.0, %v2549
        %v2551 = vpop.f32.mrf.mxu0
        %v2552 = vpop.f32.mrf.mxu0
        %v2553 = vadd.f32 0.0, %v2552
        %v2554 = vpop.f32.mrf.mxu0
        %2555 = vmatprep.mubr.bf16.mxu0 %v2268
        %2556 = vmatmul.mubr.bf16.gmra.mxu0 %v2024
        %v2557 = vpop.f32.mrf.mxu0
        %v2558 = vadd.f32 0.0, %v2557
        %v2559 = vpop.f32.mrf.mxu0
        %v2560 = vpop.f32.mrf.mxu0
        %v2561 = vadd.f32 0.0, %v2560
        %v2562 = vpop.f32.mrf.mxu0
        %2563 = vmatprep.mubr.bf16.mxu0 %v2271
        %2564 = vmatmul.mubr.bf16.gmra.mxu0 %v2026
        %v2565 = vpop.f32.mrf.mxu0
        %v2566 = vadd.f32 0.0, %v2565
        %v2567 = vpop.f32.mrf.mxu0
        %v2568 = vpop.f32.mrf.mxu0
        %v2569 = vadd.f32 0.0, %v2568
        %v2570 = vpop.f32.mrf.mxu0
        %2571 = vmatprep.mubr.bf16.mxu0 %v2274
        %2572 = vmatmul.mubr.bf16.gmra.mxu0 %v2028
        %v2573 = vpop.f32.mrf.mxu0
        %v2574 = vadd.f32 0.0, %v2573
        %v2575 = vpop.f32.mrf.mxu0
        %v2576 = vpop.f32.mrf.mxu0
        %v2577 = vadd.f32 0.0, %v2576
        %v2578 = vpop.f32.mrf.mxu0
        %2579 = vmatprep.mubr.bf16.mxu0 %v2277
        %2580 = vmatmul.mubr.bf16.gmra.mxu0 %v2030
        %v2581 = vpop.f32.mrf.mxu0
        %v2582 = vadd.f32 0.0, %v2581
        %v2583 = vpop.f32.mrf.mxu0
        %v2584 = vpop.f32.mrf.mxu0
        %v2585 = vadd.f32 0.0, %v2584
        %v2586 = vpop.f32.mrf.mxu0
        %2587 = vmatprep.mubr.bf16.mxu0 %v2280
        %2588 = vmatmul.mubr.bf16.gmra.mxu0 %v2032
        %v2589 = vpop.f32.mrf.mxu0
        %v2590 = vadd.f32 0.0, %v2589
        %v2591 = vpop.f32.mrf.mxu0
        %v2592 = vpop.f32.mrf.mxu0
        %v2593 = vadd.f32 0.0, %v2592
        %v2594 = vpop.f32.mrf.mxu0
        %2595 = vmatprep.mubr.bf16.mxu0 %v2283
        %2596 = vmatmul.mubr.bf16.gmra.mxu0 %v2034
        %v2597 = vpop.f32.mrf.mxu0
        %v2598 = vadd.f32 0.0, %v2597
        %v2599 = vpop.f32.mrf.mxu0
        %v2600 = vpop.f32.mrf.mxu0
        %v2601 = vadd.f32 0.0, %v2600
        %v2602 = vpop.f32.mrf.mxu0
        %2603 = vmatprep.mubr.bf16.mxu0 %v2286
        %2604 = vmatmul.mubr.bf16.gmra.mxu0 %v2036
        %v2605 = vpop.f32.mrf.mxu0
        %v2606 = vadd.f32 0.0, %v2605
        %v2607 = vpop.f32.mrf.mxu0
        %v2608 = vpop.f32.mrf.mxu0
        %v2609 = vadd.f32 0.0, %v2608
        %v2610 = vpop.f32.mrf.mxu0
        %2611 = vmatprep.mubr.bf16.mxu0 %v2289
        %2612 = vmatmul.mubr.bf16.gmra.mxu0 %v2038
        %v2613 = vpop.f32.mrf.mxu0
        %v2614 = vadd.f32 0.0, %v2613
        %v2615 = vpop.f32.mrf.mxu0
        %v2616 = vpop.f32.mrf.mxu0
        %v2617 = vadd.f32 0.0, %v2616
        %v2618 = vpop.f32.mrf.mxu0
        %2619 = vmatprep.mubr.bf16.mxu0 %v2292
        %2620 = vmatmul.mubr.bf16.gmra.mxu0 %v2040
        %v2621 = vpop.f32.mrf.mxu0
        %v2622 = vadd.f32 0.0, %v2621
        %v2623 = vpop.f32.mrf.mxu0
        %v2624 = vpop.f32.mrf.mxu0
        %v2625 = vadd.f32 0.0, %v2624
        %v2626 = vpop.f32.mrf.mxu0
        %2627 = vmatprep.mubr.bf16.mxu0 %v2295
        %2628 = vmatmul.mubr.bf16.gmra.mxu0 %v2042
        %v2629 = vpop.f32.mrf.mxu0
        %v2630 = vadd.f32 0.0, %v2629
        %v2631 = vpop.f32.mrf.mxu0
        %v2632 = vpop.f32.mrf.mxu0
        %v2633 = vadd.f32 0.0, %v2632
        %v2634 = vpop.f32.mrf.mxu0
        %2635 = vmatprep.mubr.bf16.mxu0 %v2298
        %2636 = vmatmul.mubr.bf16.gmra.mxu0 %v2044
        %v2637 = vpop.f32.mrf.mxu0
        %v2638 = vadd.f32 0.0, %v2637
        %v2639 = vpop.f32.mrf.mxu0
        %v2640 = vpop.f32.mrf.mxu0
        %v2641 = vadd.f32 0.0, %v2640
        %v2642 = vpop.f32.mrf.mxu0
        %2643 = vmatprep.mubr.bf16.mxu0 %v2301
        %2644 = vmatmul.mubr.bf16.gmra.mxu0 %v2046
        %v2645 = vpop.f32.mrf.mxu0
        %v2646 = vadd.f32 0.0, %v2645
        %v2647 = vpop.f32.mrf.mxu0
        %v2648 = vpop.f32.mrf.mxu0
        %v2649 = vadd.f32 0.0, %v2648
        %v2650 = vpop.f32.mrf.mxu0
        %2651 = vmatprep.mubr.bf16.mxu0 %v2304
        %2652 = vmatmul.mubr.bf16.gmra.mxu0 %v2048
        %v2653 = vpop.f32.mrf.mxu0
        %v2654 = vadd.f32 0.0, %v2653
        %v2655 = vpop.f32.mrf.mxu0
        %v2656 = vpop.f32.mrf.mxu0
        %v2657 = vadd.f32 0.0, %v2656
        %v2658 = vpop.f32.mrf.mxu0
        %2659 = vdwg.mxu0
        %v2660 = vadd.f32 %v1522, %v2341
        %v2661 = vadd.f32 %v1524, %v2343
        %v2662 = vadd.f32 %v1715, %v2534
        %v2663 = vadd.f32 %v1526, %v2345
        %v2664 = vadd.f32 %v1528, %v2347
        %v2665 = vadd.f32 %v1718, %v2537
        %v2666 = vadd.f32 %v1532, %v2351
        %v2667 = vadd.f32 %v1534, %v2353
        %v2668 = vadd.f32 %v1723, %v2542
        %v2669 = vadd.f32 %v1536, %v2355
        %v2670 = vadd.f32 %v1538, %v2357
        %v2671 = vadd.f32 %v1726, %v2545
        %v2672 = vadd.f32 %v1542, %v2361
        %v2673 = vadd.f32 %v1544, %v2363
        %v2674 = vadd.f32 %v1731, %v2550
        %v2675 = vadd.f32 %v1546, %v2365
        %v2676 = vadd.f32 %v1548, %v2367
        %v2677 = vadd.f32 %v1734, %v2553
        %v2678 = vadd.f32 %v1552, %v2371
        %v2679 = vadd.f32 %v1554, %v2373
        %v2680 = vadd.f32 %v1739, %v2558
        %v2681 = vadd.f32 %v1556, %v2375
        %v2682 = vadd.f32 %v1558, %v2377
        %v2683 = vadd.f32 %v1742, %v2561
        %v2684 = vadd.f32 %v1562, %v2381
        %v2685 = vadd.f32 %v1564, %v2383
        %v2686 = vadd.f32 %v1747, %v2566
        %v2687 = vadd.f32 %v1566, %v2385
        %v2688 = vadd.f32 %v1568, %v2387
        %v2689 = vadd.f32 %v1750, %v2569
        %v2690 = vadd.f32 %v1572, %v2391
        %v2691 = vadd.f32 %v1574, %v2393
        %v2692 = vadd.f32 %v1755, %v2574
        %v2693 = vadd.f32 %v1576, %v2395
        %v2694 = vadd.f32 %v1578, %v2397
        %v2695 = vadd.f32 %v1758, %v2577
        %v2696 = vadd.f32 %v1582, %v2401
        %v2697 = vadd.f32 %v1584, %v2403
        %v2698 = vadd.f32 %v1763, %v2582
        %v2699 = vadd.f32 %v1586, %v2405
        %v2700 = vadd.f32 %v1588, %v2407
        %v2701 = vadd.f32 %v1766, %v2585
        %v2702 = vadd.f32 %v1592, %v2411
        %v2703 = vadd.f32 %v1594, %v2413
        %v2704 = vadd.f32 %v1771, %v2590
        %v2705 = vadd.f32 %v1596, %v2415
        %v2706 = vadd.f32 %v1598, %v2417
        %v2707 = vadd.f32 %v1774, %v2593
        %v2708 = vadd.f32 %v1602, %v2421
        %v2709 = vadd.f32 %v1604, %v2423
        %v2710 = vadd.f32 %v1779, %v2598
        %v2711 = vadd.f32 %v1606, %v2425
        %v2712 = vadd.f32 %v1608, %v2427
        %v2713 = vadd.f32 %v1782, %v2601
        %v2714 = vadd.f32 %v1612, %v2431
        %v2715 = vadd.f32 %v1614, %v2433
        %v2716 = vadd.f32 %v1787, %v2606
        %v2717 = vadd.f32 %v1616, %v2435
        %v2718 = vadd.f32 %v1618, %v2437
        %v2719 = vadd.f32 %v1790, %v2609
        %v2720 = vadd.f32 %v1622, %v2441
        %v2721 = vadd.f32 %v1624, %v2443
        %v2722 = vadd.f32 %v1795, %v2614
        %v2723 = vadd.f32 %v1626, %v2445
        %v2724 = vadd.f32 %v1628, %v2447
        %v2725 = vadd.f32 %v1798, %v2617
        %v2726 = vadd.f32 %v1632, %v2451
        %v2727 = vadd.f32 %v1634, %v2453
        %v2728 = vadd.f32 %v1803, %v2622
        %v2729 = vadd.f32 %v1636, %v2455
        %v2730 = vadd.f32 %v1638, %v2457
        %v2731 = vadd.f32 %v1806, %v2625
        %v2732 = vadd.f32 %v1642, %v2461
        %v2733 = vadd.f32 %v1644, %v2463
        %v2734 = vadd.f32 %v1811, %v2630
        %v2735 = vadd.f32 %v1646, %v2465
        %v2736 = vadd.f32 %v1648, %v2467
        %v2737 = vadd.f32 %v1814, %v2633
        %v2738 = vadd.f32 %v1652, %v2471
        %v2739 = vadd.f32 %v1654, %v2473
        %v2740 = vadd.f32 %v1819, %v2638
        %v2741 = vadd.f32 %v1656, %v2475
        %v2742 = vadd.f32 %v1658, %v2477
        %v2743 = vadd.f32 %v1822, %v2641
        %v2744 = vadd.f32 %v1662, %v2481
        %v2745 = vadd.f32 %v1664, %v2483
        %v2746 = vadd.f32 %v1827, %v2646
        %v2747 = vadd.f32 %v1666, %v2485
        %v2748 = vadd.f32 %v1668, %v2487
        %v2749 = vadd.f32 %v1830, %v2649
        %v2750 = vadd.f32 %v1672, %v2491
        %v2751 = vadd.f32 %v1674, %v2493
        %v2752 = vadd.f32 %v1835, %v2654
        %v2753 = vadd.f32 %v1676, %v2495
        %v2754 = vadd.f32 %v1678, %v2497
        %v2755 = vadd.f32 %v1838, %v2657
        %v2756 = vld [vmem:[%s2] sm:$0x7]
        %v2758 = vlaneseq
        %v2759 = vshrl.u32 %v2758, 7
        %v2760 = vsub.s32 0, %v2759
        %v2761 = vrot.slane %v2756, %v2760
        %v2762 = vlaneseq
        %v2763 = vshrl.u32 %v2762, 7
        %v2764 = vsub.s32 1, %v2763
        %v2765 = vrot.slane %v2756, %v2764
        %v2766 = vlaneseq
        %v2767 = vshrl.u32 %v2766, 7
        %v2768 = vsub.s32 2, %v2767
        %v2769 = vrot.slane %v2756, %v2768
        %v2773 = vmul.f32 %v2660, %v2761
        %v2774 = vmul.f32 %v2661, %v2765
        %v2775 = vmul.f32 %v2662, %v2769
        %v2776 = vmul.f32 %v2663, %v2761
        %v2777 = vmul.f32 %v2664, %v2765
        %v2778 = vmul.f32 %v2665, %v2769
        %v2779 = vmul.f32 %v2666, %v2761
        %v2780 = vmul.f32 %v2667, %v2765
        %v2781 = vmul.f32 %v2668, %v2769
        %v2782 = vmul.f32 %v2669, %v2761
        %v2783 = vmul.f32 %v2670, %v2765
        %v2784 = vmul.f32 %v2671, %v2769
        %v2785 = vmul.f32 %v2672, %v2761
        %v2786 = vmul.f32 %v2673, %v2765
        %v2787 = vmul.f32 %v2674, %v2769
        %v2788 = vmul.f32 %v2675, %v2761
        %v2789 = vmul.f32 %v2676, %v2765
        %v2790 = vmul.f32 %v2677, %v2769
        %v2791 = vmul.f32 %v2678, %v2761
        %v2792 = vmul.f32 %v2679, %v2765
        %v2793 = vmul.f32 %v2680, %v2769
        %v2794 = vmul.f32 %v2681, %v2761
        %v2795 = vmul.f32 %v2682, %v2765
        %v2796 = vmul.f32 %v2683, %v2769
        %v2797 = vmul.f32 %v2684, %v2761
        %v2798 = vmul.f32 %v2685, %v2765
        %v2799 = vmul.f32 %v2686, %v2769
        %v2800 = vmul.f32 %v2687, %v2761
        %v2801 = vmul.f32 %v2688, %v2765
        %v2802 = vmul.f32 %v2689, %v2769
        %v2803 = vmul.f32 %v2690, %v2761
        %v2804 = vmul.f32 %v2691, %v2765
        %v2805 = vmul.f32 %v2692, %v2769
        %v2806 = vmul.f32 %v2693, %v2761
        %v2807 = vmul.f32 %v2694, %v2765
        %v2808 = vmul.f32 %v2695, %v2769
        %v2809 = vmul.f32 %v2696, %v2761
        %v2810 = vmul.f32 %v2697, %v2765
        %v2811 = vmul.f32 %v2698, %v2769
        %v2812 = vmul.f32 %v2699, %v2761
        %v2813 = vmul.f32 %v2700, %v2765
        %v2814 = vmul.f32 %v2701, %v2769
        %v2815 = vmul.f32 %v2702, %v2761
        %v2816 = vmul.f32 %v2703, %v2765
        %v2817 = vmul.f32 %v2704, %v2769
        %v2818 = vmul.f32 %v2705, %v2761
        %v2819 = vmul.f32 %v2706, %v2765
        %v2820 = vmul.f32 %v2707, %v2769
        %v2821 = vmul.f32 %v2708, %v2761
        %v2822 = vmul.f32 %v2709, %v2765
        %v2823 = vmul.f32 %v2710, %v2769
        %v2824 = vmul.f32 %v2711, %v2761
        %v2825 = vmul.f32 %v2712, %v2765
        %v2826 = vmul.f32 %v2713, %v2769
        %v2827 = vmul.f32 %v2714, %v2761
        %v2828 = vmul.f32 %v2715, %v2765
        %v2829 = vmul.f32 %v2716, %v2769
        %v2830 = vmul.f32 %v2717, %v2761
        %v2831 = vmul.f32 %v2718, %v2765
        %v2832 = vmul.f32 %v2719, %v2769
        %v2833 = vmul.f32 %v2720, %v2761
        %v2834 = vmul.f32 %v2721, %v2765
        %v2835 = vmul.f32 %v2722, %v2769
        %v2836 = vmul.f32 %v2723, %v2761
        %v2837 = vmul.f32 %v2724, %v2765
        %v2838 = vmul.f32 %v2725, %v2769
        %v2839 = vmul.f32 %v2726, %v2761
        %v2840 = vmul.f32 %v2727, %v2765
        %v2841 = vmul.f32 %v2728, %v2769
        %v2842 = vmul.f32 %v2729, %v2761
        %v2843 = vmul.f32 %v2730, %v2765
        %v2844 = vmul.f32 %v2731, %v2769
        %v2845 = vmul.f32 %v2732, %v2761
        %v2846 = vmul.f32 %v2733, %v2765
        %v2847 = vmul.f32 %v2734, %v2769
        %v2848 = vmul.f32 %v2735, %v2761
        %v2849 = vmul.f32 %v2736, %v2765
        %v2850 = vmul.f32 %v2737, %v2769
        %v2851 = vmul.f32 %v2738, %v2761
        %v2852 = vmul.f32 %v2739, %v2765
        %v2853 = vmul.f32 %v2740, %v2769
        %v2854 = vmul.f32 %v2741, %v2761
        %v2855 = vmul.f32 %v2742, %v2765
        %v2856 = vmul.f32 %v2743, %v2769
        %v2857 = vmul.f32 %v2744, %v2761
        %v2858 = vmul.f32 %v2745, %v2765
        %v2859 = vmul.f32 %v2746, %v2769
        %v2860 = vmul.f32 %v2747, %v2761
        %v2861 = vmul.f32 %v2748, %v2765
        %v2862 = vmul.f32 %v2749, %v2769
        %v2863 = vmul.f32 %v2750, %v2761
        %v2864 = vmul.f32 %v2751, %v2765
        %v2865 = vmul.f32 %v2752, %v2769
        %v2866 = vmul.f32 %v2753, %v2761
        %v2867 = vmul.f32 %v2754, %v2765
        %v2868 = vmul.f32 %v2755, %v2769
        %v2869 = vld [vmem:[%s3] sm:$0x1]
        %v2871 = vlaneseq
        %v2872 = vshrl.u32 %v2871, 7
        %v2873 = vsub.s32 0, %v2872
        %v2874 = vrot.slane %v2869, %v2873
        %v2876 = vadd.f32 %v2874, %v2773
        %v2877 = vadd.f32 %v2874, %v2776
        %v2878 = vadd.f32 %v2874, %v2779
        %v2879 = vadd.f32 %v2874, %v2782
        %v2880 = vadd.f32 %v2874, %v2785
        %v2881 = vadd.f32 %v2874, %v2788
        %v2882 = vadd.f32 %v2874, %v2791
        %v2883 = vadd.f32 %v2874, %v2794
        %v2884 = vadd.f32 %v2874, %v2797
        %v2885 = vadd.f32 %v2874, %v2800
        %v2886 = vadd.f32 %v2874, %v2803
        %v2887 = vadd.f32 %v2874, %v2806
        %v2888 = vadd.f32 %v2874, %v2809
        %v2889 = vadd.f32 %v2874, %v2812
        %v2890 = vadd.f32 %v2874, %v2815
        %v2891 = vadd.f32 %v2874, %v2818
        %v2892 = vadd.f32 %v2874, %v2821
        %v2893 = vadd.f32 %v2874, %v2824
        %v2894 = vadd.f32 %v2874, %v2827
        %v2895 = vadd.f32 %v2874, %v2830
        %v2896 = vadd.f32 %v2874, %v2833
        %v2897 = vadd.f32 %v2874, %v2836
        %v2898 = vadd.f32 %v2874, %v2839
        %v2899 = vadd.f32 %v2874, %v2842
        %v2900 = vadd.f32 %v2874, %v2845
        %v2901 = vadd.f32 %v2874, %v2848
        %v2902 = vadd.f32 %v2874, %v2851
        %v2903 = vadd.f32 %v2874, %v2854
        %v2904 = vadd.f32 %v2874, %v2857
        %v2905 = vadd.f32 %v2874, %v2860
        %v2906 = vadd.f32 %v2874, %v2863
        %v2907 = vadd.f32 %v2874, %v2866
        %2940 = vrot.lane.b32.xlu0 %v2773, 64
        %v2941 = vpop.permute.xlu0 %2940
        %2942 = vrot.lane.b32.xlu0 %v2776, 64
        %v2943 = vpop.permute.xlu0 %2942
        %2944 = vrot.lane.b32.xlu0 %v2779, 64
        %v2945 = vpop.permute.xlu0 %2944
        %2946 = vrot.lane.b32.xlu0 %v2782, 64
        %v2947 = vpop.permute.xlu0 %2946
        %2948 = vrot.lane.b32.xlu0 %v2785, 64
        %v2949 = vpop.permute.xlu0 %2948
        %2950 = vrot.lane.b32.xlu0 %v2788, 64
        %v2951 = vpop.permute.xlu0 %2950
        %2952 = vrot.lane.b32.xlu0 %v2791, 64
        %v2953 = vpop.permute.xlu0 %2952
        %2954 = vrot.lane.b32.xlu0 %v2794, 64
        %v2955 = vpop.permute.xlu0 %2954
        %2956 = vrot.lane.b32.xlu0 %v2797, 64
        %v2957 = vpop.permute.xlu0 %2956
        %2958 = vrot.lane.b32.xlu0 %v2800, 64
        %v2959 = vpop.permute.xlu0 %2958
        %2960 = vrot.lane.b32.xlu0 %v2803, 64
        %v2961 = vpop.permute.xlu0 %2960
        %2962 = vrot.lane.b32.xlu0 %v2806, 64
        %v2963 = vpop.permute.xlu0 %2962
        %2964 = vrot.lane.b32.xlu0 %v2809, 64
        %v2965 = vpop.permute.xlu0 %2964
        %2966 = vrot.lane.b32.xlu0 %v2812, 64
        %v2967 = vpop.permute.xlu0 %2966
        %2968 = vrot.lane.b32.xlu0 %v2815, 64
        %v2969 = vpop.permute.xlu0 %2968
        %2970 = vrot.lane.b32.xlu0 %v2818, 64
        %v2971 = vpop.permute.xlu0 %2970
        %2972 = vrot.lane.b32.xlu0 %v2821, 64
        %v2973 = vpop.permute.xlu0 %2972
        %2974 = vrot.lane.b32.xlu0 %v2824, 64
        %v2975 = vpop.permute.xlu0 %2974
        %2976 = vrot.lane.b32.xlu0 %v2827, 64
        %v2977 = vpop.permute.xlu0 %2976
        %2978 = vrot.lane.b32.xlu0 %v2830, 64
        %v2979 = vpop.permute.xlu0 %2978
        %2980 = vrot.lane.b32.xlu0 %v2833, 64
        %v2981 = vpop.permute.xlu0 %2980
        %2982 = vrot.lane.b32.xlu0 %v2836, 64
        %v2983 = vpop.permute.xlu0 %2982
        %2984 = vrot.lane.b32.xlu0 %v2839, 64
        %v2985 = vpop.permute.xlu0 %2984
        %2986 = vrot.lane.b32.xlu0 %v2842, 64
        %v2987 = vpop.permute.xlu0 %2986
        %2988 = vrot.lane.b32.xlu0 %v2845, 64
        %v2989 = vpop.permute.xlu0 %2988
        %2990 = vrot.lane.b32.xlu0 %v2848, 64
        %v2991 = vpop.permute.xlu0 %2990
        %2992 = vrot.lane.b32.xlu0 %v2851, 64
        %v2993 = vpop.permute.xlu0 %2992
        %2994 = vrot.lane.b32.xlu0 %v2854, 64
        %v2995 = vpop.permute.xlu0 %2994
        %2996 = vrot.lane.b32.xlu0 %v2857, 64
        %v2997 = vpop.permute.xlu0 %2996
        %2998 = vrot.lane.b32.xlu0 %v2860, 64
        %v2999 = vpop.permute.xlu0 %2998
        %3000 = vrot.lane.b32.xlu0 %v2863, 64
        %v3001 = vpop.permute.xlu0 %3000
        %3002 = vrot.lane.b32.xlu0 %v2866, 64
        %v3003 = vpop.permute.xlu0 %3002
        %v3036 = vadd.f32 %v2876, %v2941
        %v3037 = vadd.f32 %v2877, %v2943
        %v3038 = vadd.f32 %v2878, %v2945
        %v3039 = vadd.f32 %v2879, %v2947
        %v3040 = vadd.f32 %v2880, %v2949
        %v3041 = vadd.f32 %v2881, %v2951
        %v3042 = vadd.f32 %v2882, %v2953
        %v3043 = vadd.f32 %v2883, %v2955
        %v3044 = vadd.f32 %v2884, %v2957
        %v3045 = vadd.f32 %v2885, %v2959
        %v3046 = vadd.f32 %v2886, %v2961
        %v3047 = vadd.f32 %v2887, %v2963
        %v3048 = vadd.f32 %v2888, %v2965
        %v3049 = vadd.f32 %v2889, %v2967
        %v3050 = vadd.f32 %v2890, %v2969
        %v3051 = vadd.f32 %v2891, %v2971
        %v3052 = vadd.f32 %v2892, %v2973
        %v3053 = vadd.f32 %v2893, %v2975
        %v3054 = vadd.f32 %v2894, %v2977
        %v3055 = vadd.f32 %v2895, %v2979
        %v3056 = vadd.f32 %v2896, %v2981
        %v3057 = vadd.f32 %v2897, %v2983
        %v3058 = vadd.f32 %v2898, %v2985
        %v3059 = vadd.f32 %v2899, %v2987
        %v3060 = vadd.f32 %v2900, %v2989
        %v3061 = vadd.f32 %v2901, %v2991
        %v3062 = vadd.f32 %v2902, %v2993
        %v3063 = vadd.f32 %v2903, %v2995
        %v3064 = vadd.f32 %v2904, %v2997
        %v3065 = vadd.f32 %v2905, %v2999
        %v3066 = vadd.f32 %v2906, %v3001
        %v3067 = vadd.f32 %v2907, %v3003
        %v3068 = vadd.f32 %v3036, %v2774
        %v3069 = vadd.f32 %v3037, %v2777
        %v3070 = vadd.f32 %v3038, %v2780
        %v3071 = vadd.f32 %v3039, %v2783
        %v3072 = vadd.f32 %v3040, %v2786
        %v3073 = vadd.f32 %v3041, %v2789
        %v3074 = vadd.f32 %v3042, %v2792
        %v3075 = vadd.f32 %v3043, %v2795
        %v3076 = vadd.f32 %v3044, %v2798
        %v3077 = vadd.f32 %v3045, %v2801
        %v3078 = vadd.f32 %v3046, %v2804
        %v3079 = vadd.f32 %v3047, %v2807
        %v3080 = vadd.f32 %v3048, %v2810
        %v3081 = vadd.f32 %v3049, %v2813
        %v3082 = vadd.f32 %v3050, %v2816
        %v3083 = vadd.f32 %v3051, %v2819
        %v3084 = vadd.f32 %v3052, %v2822
        %v3085 = vadd.f32 %v3053, %v2825
        %v3086 = vadd.f32 %v3054, %v2828
        %v3087 = vadd.f32 %v3055, %v2831
        %v3088 = vadd.f32 %v3056, %v2834
        %v3089 = vadd.f32 %v3057, %v2837
        %v3090 = vadd.f32 %v3058, %v2840
        %v3091 = vadd.f32 %v3059, %v2843
        %v3092 = vadd.f32 %v3060, %v2846
        %v3093 = vadd.f32 %v3061, %v2849
        %v3094 = vadd.f32 %v3062, %v2852
        %v3095 = vadd.f32 %v3063, %v2855
        %v3096 = vadd.f32 %v3064, %v2858
        %v3097 = vadd.f32 %v3065, %v2861
        %v3098 = vadd.f32 %v3066, %v2864
        %v3099 = vadd.f32 %v3067, %v2867
        %3132 = vrot.lane.b32.xlu0 %v2774, 64
        %v3133 = vpop.permute.xlu0 %3132
        %3134 = vrot.lane.b32.xlu0 %v2777, 64
        %v3135 = vpop.permute.xlu0 %3134
        %3136 = vrot.lane.b32.xlu0 %v2780, 64
        %v3137 = vpop.permute.xlu0 %3136
        %3138 = vrot.lane.b32.xlu0 %v2783, 64
        %v3139 = vpop.permute.xlu0 %3138
        %3140 = vrot.lane.b32.xlu0 %v2786, 64
        %v3141 = vpop.permute.xlu0 %3140
        %3142 = vrot.lane.b32.xlu0 %v2789, 64
        %v3143 = vpop.permute.xlu0 %3142
        %3144 = vrot.lane.b32.xlu0 %v2792, 64
        %v3145 = vpop.permute.xlu0 %3144
        %3146 = vrot.lane.b32.xlu0 %v2795, 64
        %v3147 = vpop.permute.xlu0 %3146
        %3148 = vrot.lane.b32.xlu0 %v2798, 64
        %v3149 = vpop.permute.xlu0 %3148
        %3150 = vrot.lane.b32.xlu0 %v2801, 64
        %v3151 = vpop.permute.xlu0 %3150
        %3152 = vrot.lane.b32.xlu0 %v2804, 64
        %v3153 = vpop.permute.xlu0 %3152
        %3154 = vrot.lane.b32.xlu0 %v2807, 64
        %v3155 = vpop.permute.xlu0 %3154
        %3156 = vrot.lane.b32.xlu0 %v2810, 64
        %v3157 = vpop.permute.xlu0 %3156
        %3158 = vrot.lane.b32.xlu0 %v2813, 64
        %v3159 = vpop.permute.xlu0 %3158
        %3160 = vrot.lane.b32.xlu0 %v2816, 64
        %v3161 = vpop.permute.xlu0 %3160
        %3162 = vrot.lane.b32.xlu0 %v2819, 64
        %v3163 = vpop.permute.xlu0 %3162
        %3164 = vrot.lane.b32.xlu0 %v2822, 64
        %v3165 = vpop.permute.xlu0 %3164
        %3166 = vrot.lane.b32.xlu0 %v2825, 64
        %v3167 = vpop.permute.xlu0 %3166
        %3168 = vrot.lane.b32.xlu0 %v2828, 64
        %v3169 = vpop.permute.xlu0 %3168
        %3170 = vrot.lane.b32.xlu0 %v2831, 64
        %v3171 = vpop.permute.xlu0 %3170
        %3172 = vrot.lane.b32.xlu0 %v2834, 64
        %v3173 = vpop.permute.xlu0 %3172
        %3174 = vrot.lane.b32.xlu0 %v2837, 64
        %v3175 = vpop.permute.xlu0 %3174
        %3176 = vrot.lane.b32.xlu0 %v2840, 64
        %v3177 = vpop.permute.xlu0 %3176
        %3178 = vrot.lane.b32.xlu0 %v2843, 64
        %v3179 = vpop.permute.xlu0 %3178
        %3180 = vrot.lane.b32.xlu0 %v2846, 64
        %v3181 = vpop.permute.xlu0 %3180
        %3182 = vrot.lane.b32.xlu0 %v2849, 64
        %v3183 = vpop.permute.xlu0 %3182
        %3184 = vrot.lane.b32.xlu0 %v2852, 64
        %v3185 = vpop.permute.xlu0 %3184
        %3186 = vrot.lane.b32.xlu0 %v2855, 64
        %v3187 = vpop.permute.xlu0 %3186
        %3188 = vrot.lane.b32.xlu0 %v2858, 64
        %v3189 = vpop.permute.xlu0 %3188
        %3190 = vrot.lane.b32.xlu0 %v2861, 64
        %v3191 = vpop.permute.xlu0 %3190
        %3192 = vrot.lane.b32.xlu0 %v2864, 64
        %v3193 = vpop.permute.xlu0 %3192
        %3194 = vrot.lane.b32.xlu0 %v2867, 64
        %v3195 = vpop.permute.xlu0 %3194
        %v3228 = vadd.f32 %v3068, %v3133
        %v3229 = vadd.f32 %v3069, %v3135
        %v3230 = vadd.f32 %v3070, %v3137
        %v3231 = vadd.f32 %v3071, %v3139
        %v3232 = vadd.f32 %v3072, %v3141
        %v3233 = vadd.f32 %v3073, %v3143
        %v3234 = vadd.f32 %v3074, %v3145
        %v3235 = vadd.f32 %v3075, %v3147
        %v3236 = vadd.f32 %v3076, %v3149
        %v3237 = vadd.f32 %v3077, %v3151
        %v3238 = vadd.f32 %v3078, %v3153
        %v3239 = vadd.f32 %v3079, %v3155
        %v3240 = vadd.f32 %v3080, %v3157
        %v3241 = vadd.f32 %v3081, %v3159
        %v3242 = vadd.f32 %v3082, %v3161
        %v3243 = vadd.f32 %v3083, %v3163
        %v3244 = vadd.f32 %v3084, %v3165
        %v3245 = vadd.f32 %v3085, %v3167
        %v3246 = vadd.f32 %v3086, %v3169
        %v3247 = vadd.f32 %v3087, %v3171
        %v3248 = vadd.f32 %v3088, %v3173
        %v3249 = vadd.f32 %v3089, %v3175
        %v3250 = vadd.f32 %v3090, %v3177
        %v3251 = vadd.f32 %v3091, %v3179
        %v3252 = vadd.f32 %v3092, %v3181
        %v3253 = vadd.f32 %v3093, %v3183
        %v3254 = vadd.f32 %v3094, %v3185
        %v3255 = vadd.f32 %v3095, %v3187
        %v3256 = vadd.f32 %v3096, %v3189
        %v3257 = vadd.f32 %v3097, %v3191
        %v3258 = vadd.f32 %v3098, %v3193
        %v3259 = vadd.f32 %v3099, %v3195
        %v3260 = vadd.f32 %v3228, %v2775
        %v3261 = vadd.f32 %v3229, %v2778
        %v3262 = vadd.f32 %v3230, %v2781
        %v3263 = vadd.f32 %v3231, %v2784
        %v3264 = vadd.f32 %v3232, %v2787
        %v3265 = vadd.f32 %v3233, %v2790
        %v3266 = vadd.f32 %v3234, %v2793
        %v3267 = vadd.f32 %v3235, %v2796
        %v3268 = vadd.f32 %v3236, %v2799
        %v3269 = vadd.f32 %v3237, %v2802
        %v3270 = vadd.f32 %v3238, %v2805
        %v3271 = vadd.f32 %v3239, %v2808
        %v3272 = vadd.f32 %v3240, %v2811
        %v3273 = vadd.f32 %v3241, %v2814
        %v3274 = vadd.f32 %v3242, %v2817
        %v3275 = vadd.f32 %v3243, %v2820
        %v3276 = vadd.f32 %v3244, %v2823
        %v3277 = vadd.f32 %v3245, %v2826
        %v3278 = vadd.f32 %v3246, %v2829
        %v3279 = vadd.f32 %v3247, %v2832
        %v3280 = vadd.f32 %v3248, %v2835
        %v3281 = vadd.f32 %v3249, %v2838
        %v3282 = vadd.f32 %v3250, %v2841
        %v3283 = vadd.f32 %v3251, %v2844
        %v3284 = vadd.f32 %v3252, %v2847
        %v3285 = vadd.f32 %v3253, %v2850
        %v3286 = vadd.f32 %v3254, %v2853
        %v3287 = vadd.f32 %v3255, %v2856
        %v3288 = vadd.f32 %v3256, %v2859
        %v3289 = vadd.f32 %v3257, %v2862
        %v3290 = vadd.f32 %v3258, %v2865
        %v3291 = vadd.f32 %v3259, %v2868
        %3292 = vst.msk [vmem:[%s193] sm:$0xff] %vm700, %v3260
        %3293 = vst.msk [vmem:[%s193 + $0x8] sm:$0xff] %vm700, %v3261
        %3294 = vst.msk [vmem:[%s193 + $0x10] sm:$0xff] %vm700, %v3262
        %3295 = vst.msk [vmem:[%s193 + $0x18] sm:$0xff] %vm700, %v3263
        %3296 = vst.msk [vmem:[%s193 + $0x20] sm:$0xff] %vm700, %v3264
        %3297 = vst.msk [vmem:[%s193 + $0x28] sm:$0xff] %vm700, %v3265
        %3298 = vst.msk [vmem:[%s193 + $0x30] sm:$0xff] %vm700, %v3266
        %3299 = vst.msk [vmem:[%s193 + $0x38] sm:$0xff] %vm700, %v3267
        %3300 = vst.msk [vmem:[%s193 + $0x40] sm:$0xff] %vm700, %v3268
        %3301 = vst.msk [vmem:[%s193 + $0x48] sm:$0xff] %vm700, %v3269
        %3302 = vst.msk [vmem:[%s193 + $0x50] sm:$0xff] %vm700, %v3270
        %3303 = vst.msk [vmem:[%s193 + $0x58] sm:$0xff] %vm700, %v3271
        %3304 = vst.msk [vmem:[%s193 + $0x60] sm:$0xff] %vm700, %v3272
        %3305 = vst.msk [vmem:[%s193 + $0x68] sm:$0xff] %vm700, %v3273
        %3306 = vst.msk [vmem:[%s193 + $0x70] sm:$0xff] %vm700, %v3274
        %3307 = vst.msk [vmem:[%s193 + $0x78] sm:$0xff] %vm700, %v3275
        %3308 = vst.msk [vmem:[%s193 + $0x80] sm:$0xff] %vm700, %v3276
        %3309 = vst.msk [vmem:[%s193 + $0x88] sm:$0xff] %vm700, %v3277
        %3310 = vst.msk [vmem:[%s193 + $0x90] sm:$0xff] %vm700, %v3278
        %3311 = vst.msk [vmem:[%s193 + $0x98] sm:$0xff] %vm700, %v3279
        %3312 = vst.msk [vmem:[%s193 + $0xa0] sm:$0xff] %vm700, %v3280
        %3313 = vst.msk [vmem:[%s193 + $0xa8] sm:$0xff] %vm700, %v3281
        %3314 = vst.msk [vmem:[%s193 + $0xb0] sm:$0xff] %vm700, %v3282
        %3315 = vst.msk [vmem:[%s193 + $0xb8] sm:$0xff] %vm700, %v3283
        %3316 = vst.msk [vmem:[%s193 + $0xc0] sm:$0xff] %vm700, %v3284
        %3317 = vst.msk [vmem:[%s193 + $0xc8] sm:$0xff] %vm700, %v3285
        %3318 = vst.msk [vmem:[%s193 + $0xd0] sm:$0xff] %vm700, %v3286
        %3319 = vst.msk [vmem:[%s193 + $0xd8] sm:$0xff] %vm700, %v3287
        %3320 = vst.msk [vmem:[%s193 + $0xe0] sm:$0xff] %vm700, %v3288
        %3321 = vst.msk [vmem:[%s193 + $0xe8] sm:$0xff] %vm700, %v3289
        %3322 = vst.msk [vmem:[%s193 + $0xf0] sm:$0xff] %vm700, %v3290
        %3323 = vst.msk [vmem:[%s193 + $0xf8] sm:$0xff] %vm700, %v3291
        %s3324 = sand.u32 %s115, 1
        %s3325 = scalar_lea.sflag [#allocation3], %s3324
        %s3326 = sand.u32 %s115, 1
        %s3327 = smul.addr %s3326, 256
        %s3328 = scalar_lea.vmem [#allocation2], %s3327
        // Predicated region
        $region37: #{assconv_forward.3} parent=35 // pred_check
          %p3329 = pneg %p125
        $region38: #{assconv_forward.3} parent=35 // pred_check_branch
          %3331 = sbr.rel (%p3329) target = $region40
        $region39: #{assconv_forward.3} parent=35 // pred_region
          %s3332 = smul.u32 32, %s18
          %s3334 = ssub.s32 4096, 4096
          %3335 = vsyncadd %s3325, %s3334
          %s3336 = smul.addr %s3332, 128
          %s3337 = scalar_lea.hbm %s4, %s3336
          %s3338 = sshll.u32 %s3328, 4
          %s3339 = int_to_ptr.vmem [resolvable:$true] %s3338
          %3344 = dma.vmem_to_hbm [thread:$0]  %s3339, 4096, %s3337, %s3325, 128, 128, 8
        $region40: #{assconv_forward.3} parent=35 // pred_fallthru
          _
      $region36: #{assconv_forward.3} parent=5 // pred_fallthru
        _
      %p3345 = scmp.le.s32.totalorder 2, %s13
      // Predicated region
      $region41: #{assconv_forward.3} parent=5 // pred_check
        %p3346 = pneg %p3345
      $region42: #{assconv_forward.3} parent=5 // pred_check_branch
        %3348 = sbr.rel (%p3346) target = $region44
      $region43: #{assconv_forward.3} parent=5 // pred_region
        %s3349 = ssub.s32 %s13, 2
        // Predicated region
        $region45: #{assconv_forward.3} parent=43 // pred_check
          %p3350 = pneg %p131
        $region46: #{assconv_forward.3} parent=43 // pred_check_branch
          %3352 = sbr.rel (%p3350) target = $region48
        $region47: #{assconv_forward.3} parent=43 // pred_region
          %s3353 = sand.u32 %s116, 1
          %s3354 = scalar_lea.sflag [#allocation3], %s3353
          %s3355 = sand.u32 %s116, 1
          %s3356 = smul.addr %s3355, 256
          %s3357 = scalar_lea.vmem [#allocation2], %s3356
          %3358 = dma.done %s3354, 4096
        $region48: #{assconv_forward.3} parent=43 // pred_fallthru
          _
      $region44: #{assconv_forward.3} parent=5 // pred_fallthru
        _
    $region6: #{assconv_forward.3} parent=1 // loop_footer
      %s17 = sadd.s32 1, %s13
    $region7: #{assconv_forward.3} parent=1 // loop_footer_branch
      %12 = sbr.rel target = $region3
    $region8: #{assconv_forward.3} parent=1 // loop_exit
      _
    %3359 = vsyncpa [#allocation3], 1
    %s3360 = scalar_lea.sflag [#allocation3], 1
    %3361 = vsyncpa %s3360, 1

</llo_original>
